<compile_context>
chip_gen: v6e
topology: v6e:2x2x1
jax: 0.10.0
libtpu: 0.0.40
codegen_flags: <defaults>
</compile_context>

<pallas_src>
import jax
import jax.numpy as jnp
from jax.experimental import pallas as pl
from jax.experimental.pallas import tpu as pltpu


# ----------------------------------------------------------------------------
# Fused kernel (built per static (num_layers, GP, B, T))
# ----------------------------------------------------------------------------
def make_fused_lstm_kernel(num_layers, gp, batch, seq_len):
    GP = gp
    B = batch
    T = seq_len

    def kernel(*args):
        # args: x_ref, (w_ih, w_hh, b) * L, fc(w1, b1, w2, b2), out_ref
        x_ref = args[0]
        layer_refs = args[1:1 + 3 * num_layers]
        fw1_ref, fb1_ref, fw2_ref, fb2_ref = args[1 + 3 * num_layers:
                                                  5 + 3 * num_layers]
        out_ref = args[5 + 3 * num_layers]

        def mm(a, w):
            # MXU matmul; operands cast to the weight dtype (f32 or bf16),
            # accumulation always in float32.
            return jnp.dot(a.astype(w.dtype), w,
                           preferred_element_type=jnp.float32)

        def cell(gates, c):
            # Gate order (i, f, o, g); each gate is a full GP-lane block at
            # lane offset 0 of its own vreg (no cross-lane rotates).
            sig = jax.nn.sigmoid(gates[:, 0:3 * GP])
            i_g = sig[:, 0:GP]
            f_g = sig[:, GP:2 * GP]
            o_g = sig[:, 2 * GP:3 * GP]
            g_g = jnp.tanh(gates[:, 3 * GP:4 * GP])
            c_new = f_g * c + i_g * g_g
            h_new = o_g * jnp.tanh(c_new)
            return h_new, c_new

        # Layer-0 input projection hoisted out of the recurrence: one
        # (T*B, D_in) @ (D_in, 4*GP) matmul, bias folded in once.  Time-major:
        # row t*B + b, so each step is a contiguous-sublane slice.
        xp0 = mm(x_ref[...], layer_refs[0][...]) + layer_refs[2][...]

        # Load time-invariant weights once (they live in vregs / VMEM).
        w_hh = [layer_refs[3 * l + 1][...] for l in range(num_layers)]
        w_ih = [None] + [layer_refs[3 * l][...] for l in range(1, num_layers)]
        bias = [None] + [layer_refs[3 * l + 2][...]
                         for l in range(1, num_layers)]

        h = [jnp.zeros((B, GP), jnp.float32) for _ in range(num_layers)]
        c = [jnp.zeros((B, GP), jnp.float32) for _ in range(num_layers)]

        # Wavefront over (time x layers), statically unrolled:
        # in iteration w, layer l runs its step t = w - l.
        for w in range(T + num_layers - 1):
            h_in = list(h)  # snapshot: layer l-1's output at step (w - l)
            for l in range(num_layers):
                t = w - l
                if 0 <= t < T:
                    if l == 0:
                        pre = xp0[t * B:(t + 1) * B, :]
                    else:
                        # Per-step input projection (keeps layer l's step t
                        # dependent only on layer l-1's step t).
                        pre = mm(h_in[l - 1], w_ih[l]) + bias[l]
                    gates = pre + mm(h_in[l], w_hh[l])
                    h[l], c[l] = cell(gates, c[l])

        # FC head on the last time step of the last layer.
        z = jnp.maximum(mm(h[num_layers - 1], fw1_ref[...]) + fb1_ref[...], 0.0)
        out_ref[...] = mm(z, fw2_ref[...]) + fb2_ref[...]

    return kernel


# ----------------------------------------------------------------------------
# Wrapper
# ----------------------------------------------------------------------------
def lstm_forward(x_btd, kernel_params):
    """x_btd: (B, T, input_dim) batch-first -> (B, output_dim)."""
    B, T, D = x_btd.shape
    lstm_ps = kernel_params["lstm"]
    L = len(lstm_ps)
    GP = lstm_ps[0][1].shape[0]                 # w_hh is (GP, 4*GP)
    w1, b1, w2, b2 = kernel_params["fc"]
    FP = w1.shape[1]
    out_dim = w2.shape[1]

    # Time-major, flattened: row = t*B + b (tiny one-time transpose).
    x_tb = jnp.transpose(x_btd.astype(jnp.float32), (1, 0, 2)).reshape(T * B, D)

    flat_inputs = [x_tb]
    for (w_ih_k, w_hh_k, b_k) in lstm_ps:
        flat_inputs += [w_ih_k, w_hh_k, b_k]
    flat_inputs += [w1, b1, w2, b2]

    flops = (2 * T * B * D * 4 * GP                       # layer-0 projection
             + L * T * 2 * B * GP * 4 * GP                # recurrence matmuls
             + (L - 1) * T * 2 * B * GP * 4 * GP          # per-step projections
             + 2 * B * GP * FP + 2 * B * FP * out_dim)    # FC head
    transcendentals = L * T * B * 5 * GP                  # 3 sigmoid + 2 tanh
    bytes_accessed = (sum(int(a.size) * a.dtype.itemsize for a in flat_inputs)
                      + B * out_dim * 4)

    vmem = pl.BlockSpec(memory_space=pltpu.MemorySpace.VMEM)
    return pl.pallas_call(
        make_fused_lstm_kernel(L, GP, B, T),
        out_shape=jax.ShapeDtypeStruct((B, out_dim), jnp.float32),
        in_specs=[vmem] * len(flat_inputs),
        out_specs=vmem,
        cost_estimate=pl.CostEstimate(flops=flops,
                                      transcendentals=transcendentals,
                                      bytes_accessed=bytes_accessed),
    )(*flat_inputs)


lstm_model_forward = jax.jit(lstm_forward)


# ----------------------------------------------------------------------------
# Parameter init (PyTorch layout) and kernel-layout preparation
# ----------------------------------------------------------------------------
def init_params(key, input_dim, hidden_dim, output_dim, layers):
    """PyTorch-layout params: w_ih (4H, D_in), w_hh (4H, H), gate order (i,f,g,o)."""
    k = hidden_dim ** -0.5
    params = {"lstm": [], "fc": None}
    for l in range(layers):
        d_in = input_dim if l == 0 else hidden_dim
        key, k1, k2, k3, k4 = jax.random.split(key, 5)
        w_ih = jax.random.uniform(k1, (4 * hidden_dim, d_in), jnp.float32, -k, k)
        w_hh = jax.random.uniform(k2, (4 * hidden_dim, hidden_dim), jnp.float32, -k, k)
        b_ih = jax.random.uniform(k3, (4 * hidden_dim,), jnp.float32, -k, k)
        b_hh = jax.random.uniform(k4, (4 * hidden_dim,), jnp.float32, -k, k)
        params["lstm"].append((w_ih, w_hh, b_ih, b_hh))
    half = hidden_dim // 2
    key, k1, k2, k3, k4 = jax.random.split(key, 5)
    kf1 = hidden_dim ** -0.5
    kf2 = half ** -0.5
    w1 = jax.random.uniform(k1, (half, hidden_dim), jnp.float32, -kf1, kf1)
    b1 = jax.random.uniform(k2, (half,), jnp.float32, -kf1, kf1)
    w2 = jax.random.uniform(k3, (output_dim, half), jnp.float32, -kf2, kf2)
    b2 = jax.random.uniform(k4, (output_dim,), jnp.float32, -kf2, kf2)
    params["fc"] = (w1, b1, w2, b2)
    return params


def _reorder_gate_rows(w, H):
    """Permute row-groups from PyTorch (i, f, g, o) to kernel (i, f, o, g)."""
    i, f, g, o = w[0:H], w[H:2 * H], w[2 * H:3 * H], w[3 * H:4 * H]
    return jnp.concatenate([i, f, o, g], axis=0)


def _pad_axis(a, axis, total):
    pad = total - a.shape[axis]
    if pad <= 0:
        return a
    widths = [(0, 0)] * a.ndim
    widths[axis] = (0, pad)
    return jnp.pad(a, widths)


def _pad_gate_cols(w, H, GP):
    """Pad each of the 4 gate blocks along the last axis from H to GP lanes."""
    parts = [_pad_axis(w[..., g * H:(g + 1) * H], -1, GP) for g in range(4)]
    return jnp.concatenate(parts, axis=-1)


def prepare_params(torch_params, compute_dtype=jnp.bfloat16):
    """Transpose weights, fuse biases, reorder gates (i,f,g,o)->(i,f,o,g) and
    pad each gate block to 128 lanes (GP) so gates/c/h are lane-aligned.

    compute_dtype=jnp.bfloat16 (default) halves weight footprint/DMA on
    v5e/v6e/v7x (the MXU takes bf16 natively on all three); gate math, biases
    and the cell state stay float32.  Use compute_dtype=jnp.float32 for
    bit-tight numerics.
    """
    H = torch_params["lstm"][0][1].shape[1]
    GP = -(-H // 128) * 128
    out = {"lstm": [], "fc": None}
    for l, (w_ih, w_hh, b_ih, b_hh) in enumerate(torch_params["lstm"]):
        w_ih_k = _pad_gate_cols(_reorder_gate_rows(w_ih, H).T, H, GP)  # (D_in, 4GP)
        w_hh_k = _pad_gate_cols(_reorder_gate_rows(w_hh, H).T, H, GP)  # (H, 4GP)
        if l > 0:
            w_ih_k = _pad_axis(w_ih_k, 0, GP)                          # (GP, 4GP)
        w_hh_k = _pad_axis(w_hh_k, 0, GP)                              # (GP, 4GP)
        b_k = _pad_gate_cols(_reorder_gate_rows(b_ih + b_hh, H)[None, :], H, GP)
        out["lstm"].append((w_ih_k.astype(compute_dtype),
                            w_hh_k.astype(compute_dtype),
                            b_k.astype(jnp.float32)))
    w1, b1, w2, b2 = torch_params["fc"]
    half = w1.shape[0]
    FP = -(-half // 128) * 128
    w1_k = _pad_axis(_pad_axis(w1.T, 0, GP), 1, FP)   # (GP, FP)
    b1_k = _pad_axis(b1[None, :], 1, FP)              # (1, FP)
    w2_k = _pad_axis(w2.T, 0, FP)                     # (FP, out_dim)
    b2_k = b2[None, :]
    out["fc"] = (w1_k.astype(compute_dtype), b1_k.astype(jnp.float32),
                 w2_k.astype(compute_dtype), b2_k.astype(jnp.float32))
    return out


# ----------------------------------------------------------------------------
# Pure-JAX reference (PyTorch semantics, PyTorch-layout params)
# ----------------------------------------------------------------------------
def reference_forward(x_btd, torch_params):
    x = x_btd.astype(jnp.float32)                 # (B, T, D) batch-first
    B, T, _ = x.shape
    for (w_ih, w_hh, b_ih, b_hh) in torch_params["lstm"]:
        H = w_hh.shape[1]
        h = jnp.zeros((B, H), jnp.float32)
        c = jnp.zeros((B, H), jnp.float32)
        outs = []
        for t in range(T):
            gates = x[:, t, :] @ w_ih.T + h @ w_hh.T + b_ih + b_hh
            i_g = jax.nn.sigmoid(gates[:, 0 * H:1 * H])
            f_g = jax.nn.sigmoid(gates[:, 1 * H:2 * H])
            g_g = jnp.tanh(gates[:, 2 * H:3 * H])
            o_g = jax.nn.sigmoid(gates[:, 3 * H:4 * H])
            c = f_g * c + i_g * g_g
            h = o_g * jnp.tanh(c)
            outs.append(h)
        x = jnp.stack(outs, axis=1)               # (B, T, H)
    w1, b1, w2, b2 = torch_params["fc"]
    z = jnp.maximum(x[:, -1] @ w1.T + b1, 0.0)
    return z @ w2.T + b2


if __name__ == "__main__":
    # Small shapes consistent with the module's forward:
    # x: (batch=2, seq_len=8, input_dim=4); hidden_dim=32; output_dim=1; layers=2
    batch, seq_len, input_dim = 2, 8, 4
    hidden_dim, output_dim, layers = 32, 1, 2

    key = jax.random.PRNGKey(0)
    key, xk = jax.random.split(key)
    x = jax.random.normal(xk, (batch, seq_len, input_dim), jnp.float32)

    torch_params = init_params(key, input_dim, hidden_dim, output_dim, layers)
    ref = reference_forward(x, torch_params)

    # Float32 weights: bit-tight check against the PyTorch-semantics reference.
    params_f32 = prepare_params(torch_params, compute_dtype=jnp.float32)
    out_f32 = jax.block_until_ready(lstm_model_forward(x, params_f32))
    assert out_f32.shape == (batch, output_dim)
    assert jnp.allclose(out_f32, ref, atol=1e-5, rtol=1e-5), (out_f32, ref)

    # Default bf16 weights: halved weight DMA on v5e/v6e/v7x; loose tolerance
    # (hidden state is re-quantized each step, error compounds over T).
    params_bf16 = prepare_params(torch_params)
    out_bf16 = jax.block_until_ready(lstm_model_forward(x, params_bf16))
    assert out_bf16.shape == (batch, output_dim)
    assert jnp.allclose(out_bf16, ref, atol=1e-1, rtol=1e-1), (out_bf16, ref)

    print("KERNEL_OK")
</pallas_src>

<mosaic_0001>
module attributes {stable_mosaic.version = 11 : i64} {
  func.func @kernel(%arg0: memref<16x4xf32, #tpu.memory_space<vmem>>, %arg1: memref<4x512xf32, #tpu.memory_space<vmem>>, %arg2: memref<128x512xf32, #tpu.memory_space<vmem>>, %arg3: memref<1x512xf32, #tpu.memory_space<vmem>>, %arg4: memref<128x512xf32, #tpu.memory_space<vmem>>, %arg5: memref<128x512xf32, #tpu.memory_space<vmem>>, %arg6: memref<1x512xf32, #tpu.memory_space<vmem>>, %arg7: memref<128x128xf32, #tpu.memory_space<vmem>>, %arg8: memref<1x128xf32, #tpu.memory_space<vmem>>, %arg9: memref<128x1xf32, #tpu.memory_space<vmem>>, %arg10: memref<1x1xf32, #tpu.memory_space<vmem>>, %arg11: memref<2x1xf32, #tpu.memory_space<vmem>>) attributes {dimension_semantics = [], scalar_prefetch = 0 : i64, scratch_operands = 0 : i64, tpu.core_type = #tpu.core_type<tc>} {
    %c0 = arith.constant 0 : index
    %c0_0 = arith.constant 0 : index
    %0 = vector.load %arg0[%c0, %c0_0] : memref<16x4xf32, #tpu.memory_space<vmem>>, vector<16x4xf32>
    %c0_1 = arith.constant 0 : index
    %c0_2 = arith.constant 0 : index
    %1 = vector.load %arg1[%c0_1, %c0_2] : memref<4x512xf32, #tpu.memory_space<vmem>>, vector<4x512xf32>
    %cst = arith.constant dense<0.000000e+00> : vector<16x512xf32>
    %2 = tpu.matmul %0, %1, %cst {dimension_numbers = #tpu.dot_dimension_numbers<[1], [0], [0], [1], [0, 0, 1, 1], [], []>} : vector<16x4xf32>, vector<4x512xf32>, vector<16x512xf32> -> vector<16x512xf32>
    %c0_3 = arith.constant 0 : index
    %c0_4 = arith.constant 0 : index
    %3 = vector.load %arg3[%c0_3, %c0_4] : memref<1x512xf32, #tpu.memory_space<vmem>>, vector<1x512xf32>
    %4 = vector.broadcast %3 : vector<1x512xf32> to vector<16x512xf32>
    %5 = arith.addf %2, %4 : vector<16x512xf32>
    %c0_5 = arith.constant 0 : index
    %c0_6 = arith.constant 0 : index
    %6 = vector.load %arg2[%c0_5, %c0_6] : memref<128x512xf32, #tpu.memory_space<vmem>>, vector<128x512xf32>
    %c0_7 = arith.constant 0 : index
    %c0_8 = arith.constant 0 : index
    %7 = vector.load %arg5[%c0_7, %c0_8] : memref<128x512xf32, #tpu.memory_space<vmem>>, vector<128x512xf32>
    %c0_9 = arith.constant 0 : index
    %c0_10 = arith.constant 0 : index
    %8 = vector.load %arg4[%c0_9, %c0_10] : memref<128x512xf32, #tpu.memory_space<vmem>>, vector<128x512xf32>
    %c0_11 = arith.constant 0 : index
    %c0_12 = arith.constant 0 : index
    %9 = vector.load %arg6[%c0_11, %c0_12] : memref<1x512xf32, #tpu.memory_space<vmem>>, vector<1x512xf32>
    %cst_13 = arith.constant 0.000000e+00 : f32
    %10 = vector.broadcast %cst_13 : f32 to vector<2x128xf32>
    %cst_14 = arith.constant 0.000000e+00 : f32
    %11 = vector.broadcast %cst_14 : f32 to vector<2x128xf32>
    %cst_15 = arith.constant 0.000000e+00 : f32
    %12 = vector.broadcast %cst_15 : f32 to vector<2x128xf32>
    %cst_16 = arith.constant 0.000000e+00 : f32
    %13 = vector.broadcast %cst_16 : f32 to vector<2x128xf32>
    %14 = vector.extract_strided_slice %5 {offsets = [0, 0], sizes = [2, 512], strides = [1, 1]} : vector<16x512xf32> to vector<2x512xf32>
    %cst_17 = arith.constant dense<0.000000e+00> : vector<2x512xf32>
    %15 = tpu.matmul %10, %6, %cst_17 {dimension_numbers = #tpu.dot_dimension_numbers<[1], [0], [0], [1], [0, 0, 1, 1], [], []>} : vector<2x128xf32>, vector<128x512xf32>, vector<2x512xf32> -> vector<2x512xf32>
    %16 = arith.addf %14, %15 : vector<2x512xf32>
    %17 = vector.extract_strided_slice %16 {offsets = [0, 0], sizes = [2, 384], strides = [1, 1]} : vector<2x512xf32> to vector<2x384xf32>
    %18 = arith.negf %17 : vector<2x384xf32>
    %19 = math.exp %18 : vector<2x384xf32>
    %cst_18 = arith.constant 1.000000e+00 : f32
    %20 = vector.broadcast %cst_18 : f32 to vector<2x384xf32>
    %21 = arith.addf %20, %19 : vector<2x384xf32>
    %22 = arith.divf %20, %21 : vector<2x384xf32>
    %23 = vector.extract_strided_slice %22 {offsets = [0, 0], sizes = [2, 128], strides = [1, 1]} : vector<2x384xf32> to vector<2x128xf32>
    %24 = vector.extract_strided_slice %22 {offsets = [0, 128], sizes = [2, 128], strides = [1, 1]} : vector<2x384xf32> to vector<2x128xf32>
    %25 = vector.extract_strided_slice %22 {offsets = [0, 256], sizes = [2, 128], strides = [1, 1]} : vector<2x384xf32> to vector<2x128xf32>
    %26 = vector.extract_strided_slice %16 {offsets = [0, 384], sizes = [2, 128], strides = [1, 1]} : vector<2x512xf32> to vector<2x128xf32>
    %27 = math.tanh %26 : vector<2x128xf32>
    %28 = arith.mulf %24, %12 : vector<2x128xf32>
    %29 = arith.mulf %23, %27 : vector<2x128xf32>
    %30 = arith.addf %28, %29 : vector<2x128xf32>
    %31 = math.tanh %30 : vector<2x128xf32>
    %32 = arith.mulf %25, %31 : vector<2x128xf32>
    %33 = vector.extract_strided_slice %5 {offsets = [2, 0], sizes = [2, 512], strides = [1, 1]} : vector<16x512xf32> to vector<2x512xf32>
    %cst_19 = arith.constant dense<0.000000e+00> : vector<2x512xf32>
    %34 = tpu.matmul %32, %6, %cst_19 {dimension_numbers = #tpu.dot_dimension_numbers<[1], [0], [0], [1], [0, 0, 1, 1], [], []>} : vector<2x128xf32>, vector<128x512xf32>, vector<2x512xf32> -> vector<2x512xf32>
    %35 = arith.addf %33, %34 : vector<2x512xf32>
    %36 = vector.extract_strided_slice %35 {offsets = [0, 0], sizes = [2, 384], strides = [1, 1]} : vector<2x512xf32> to vector<2x384xf32>
    %37 = arith.negf %36 : vector<2x384xf32>
    %38 = math.exp %37 : vector<2x384xf32>
    %cst_20 = arith.constant 1.000000e+00 : f32
    %39 = vector.broadcast %cst_20 : f32 to vector<2x384xf32>
    %40 = arith.addf %39, %38 : vector<2x384xf32>
    %41 = arith.divf %39, %40 : vector<2x384xf32>
    %42 = vector.extract_strided_slice %41 {offsets = [0, 0], sizes = [2, 128], strides = [1, 1]} : vector<2x384xf32> to vector<2x128xf32>
    %43 = vector.extract_strided_slice %41 {offsets = [0, 128], sizes = [2, 128], strides = [1, 1]} : vector<2x384xf32> to vector<2x128xf32>
    %44 = vector.extract_strided_slice %41 {offsets = [0, 256], sizes = [2, 128], strides = [1, 1]} : vector<2x384xf32> to vector<2x128xf32>
    %45 = vector.extract_strided_slice %35 {offsets = [0, 384], sizes = [2, 128], strides = [1, 1]} : vector<2x512xf32> to vector<2x128xf32>
    %46 = math.tanh %45 : vector<2x128xf32>
    %47 = arith.mulf %43, %30 : vector<2x128xf32>
    %48 = arith.mulf %42, %46 : vector<2x128xf32>
    %49 = arith.addf %47, %48 : vector<2x128xf32>
    %50 = math.tanh %49 : vector<2x128xf32>
    %51 = arith.mulf %44, %50 : vector<2x128xf32>
    %cst_21 = arith.constant dense<0.000000e+00> : vector<2x512xf32>
    %52 = tpu.matmul %32, %8, %cst_21 {dimension_numbers = #tpu.dot_dimension_numbers<[1], [0], [0], [1], [0, 0, 1, 1], [], []>} : vector<2x128xf32>, vector<128x512xf32>, vector<2x512xf32> -> vector<2x512xf32>
    %53 = vector.broadcast %9 : vector<1x512xf32> to vector<2x512xf32>
    %54 = arith.addf %52, %53 : vector<2x512xf32>
    %cst_22 = arith.constant dense<0.000000e+00> : vector<2x512xf32>
    %55 = tpu.matmul %11, %7, %cst_22 {dimension_numbers = #tpu.dot_dimension_numbers<[1], [0], [0], [1], [0, 0, 1, 1], [], []>} : vector<2x128xf32>, vector<128x512xf32>, vector<2x512xf32> -> vector<2x512xf32>
    %56 = arith.addf %54, %55 : vector<2x512xf32>
    %57 = vector.extract_strided_slice %56 {offsets = [0, 0], sizes = [2, 384], strides = [1, 1]} : vector<2x512xf32> to vector<2x384xf32>
    %58 = arith.negf %57 : vector<2x384xf32>
    %59 = math.exp %58 : vector<2x384xf32>
    %cst_23 = arith.constant 1.000000e+00 : f32
    %60 = vector.broadcast %cst_23 : f32 to vector<2x384xf32>
    %61 = arith.addf %60, %59 : vector<2x384xf32>
    %62 = arith.divf %60, %61 : vector<2x384xf32>
    %63 = vector.extract_strided_slice %62 {offsets = [0, 0], sizes = [2, 128], strides = [1, 1]} : vector<2x384xf32> to vector<2x128xf32>
    %64 = vector.extract_strided_slice %62 {offsets = [0, 128], sizes = [2, 128], strides = [1, 1]} : vector<2x384xf32> to vector<2x128xf32>
    %65 = vector.extract_strided_slice %62 {offsets = [0, 256], sizes = [2, 128], strides = [1, 1]} : vector<2x384xf32> to vector<2x128xf32>
    %66 = vector.extract_strided_slice %56 {offsets = [0, 384], sizes = [2, 128], strides = [1, 1]} : vector<2x512xf32> to vector<2x128xf32>
    %67 = math.tanh %66 : vector<2x128xf32>
    %68 = arith.mulf %64, %13 : vector<2x128xf32>
    %69 = arith.mulf %63, %67 : vector<2x128xf32>
    %70 = arith.addf %68, %69 : vector<2x128xf32>
    %71 = math.tanh %70 : vector<2x128xf32>
    %72 = arith.mulf %65, %71 : vector<2x128xf32>
    %73 = vector.extract_strided_slice %5 {offsets = [4, 0], sizes = [2, 512], strides = [1, 1]} : vector<16x512xf32> to vector<2x512xf32>
    %cst_24 = arith.constant dense<0.000000e+00> : vector<2x512xf32>
    %74 = tpu.matmul %51, %6, %cst_24 {dimension_numbers = #tpu.dot_dimension_numbers<[1], [0], [0], [1], [0, 0, 1, 1], [], []>} : vector<2x128xf32>, vector<128x512xf32>, vector<2x512xf32> -> vector<2x512xf32>
    %75 = arith.addf %73, %74 : vector<2x512xf32>
    %76 = vector.extract_strided_slice %75 {offsets = [0, 0], sizes = [2, 384], strides = [1, 1]} : vector<2x512xf32> to vector<2x384xf32>
    %77 = arith.negf %76 : vector<2x384xf32>
    %78 = math.exp %77 : vector<2x384xf32>
    %cst_25 = arith.constant 1.000000e+00 : f32
    %79 = vector.broadcast %cst_25 : f32 to vector<2x384xf32>
    %80 = arith.addf %79, %78 : vector<2x384xf32>
    %81 = arith.divf %79, %80 : vector<2x384xf32>
    %82 = vector.extract_strided_slice %81 {offsets = [0, 0], sizes = [2, 128], strides = [1, 1]} : vector<2x384xf32> to vector<2x128xf32>
    %83 = vector.extract_strided_slice %81 {offsets = [0, 128], sizes = [2, 128], strides = [1, 1]} : vector<2x384xf32> to vector<2x128xf32>
    %84 = vector.extract_strided_slice %81 {offsets = [0, 256], sizes = [2, 128], strides = [1, 1]} : vector<2x384xf32> to vector<2x128xf32>
    %85 = vector.extract_strided_slice %75 {offsets = [0, 384], sizes = [2, 128], strides = [1, 1]} : vector<2x512xf32> to vector<2x128xf32>
    %86 = math.tanh %85 : vector<2x128xf32>
    %87 = arith.mulf %83, %49 : vector<2x128xf32>
    %88 = arith.mulf %82, %86 : vector<2x128xf32>
    %89 = arith.addf %87, %88 : vector<2x128xf32>
    %90 = math.tanh %89 : vector<2x128xf32>
    %91 = arith.mulf %84, %90 : vector<2x128xf32>
    %cst_26 = arith.constant dense<0.000000e+00> : vector<2x512xf32>
    %92 = tpu.matmul %51, %8, %cst_26 {dimension_numbers = #tpu.dot_dimension_numbers<[1], [0], [0], [1], [0, 0, 1, 1], [], []>} : vector<2x128xf32>, vector<128x512xf32>, vector<2x512xf32> -> vector<2x512xf32>
    %93 = vector.broadcast %9 : vector<1x512xf32> to vector<2x512xf32>
    %94 = arith.addf %92, %93 : vector<2x512xf32>
    %cst_27 = arith.constant dense<0.000000e+00> : vector<2x512xf32>
    %95 = tpu.matmul %72, %7, %cst_27 {dimension_numbers = #tpu.dot_dimension_numbers<[1], [0], [0], [1], [0, 0, 1, 1], [], []>} : vector<2x128xf32>, vector<128x512xf32>, vector<2x512xf32> -> vector<2x512xf32>
    %96 = arith.addf %94, %95 : vector<2x512xf32>
    %97 = vector.extract_strided_slice %96 {offsets = [0, 0], sizes = [2, 384], strides = [1, 1]} : vector<2x512xf32> to vector<2x384xf32>
    %98 = arith.negf %97 : vector<2x384xf32>
    %99 = math.exp %98 : vector<2x384xf32>
    %cst_28 = arith.constant 1.000000e+00 : f32
    %100 = vector.broadcast %cst_28 : f32 to vector<2x384xf32>
    %101 = arith.addf %100, %99 : vector<2x384xf32>
    %102 = arith.divf %100, %101 : vector<2x384xf32>
    %103 = vector.extract_strided_slice %102 {offsets = [0, 0], sizes = [2, 128], strides = [1, 1]} : vector<2x384xf32> to vector<2x128xf32>
    %104 = vector.extract_strided_slice %102 {offsets = [0, 128], sizes = [2, 128], strides = [1, 1]} : vector<2x384xf32> to vector<2x128xf32>
    %105 = vector.extract_strided_slice %102 {offsets = [0, 256], sizes = [2, 128], strides = [1, 1]} : vector<2x384xf32> to vector<2x128xf32>
    %106 = vector.extract_strided_slice %96 {offsets = [0, 384], sizes = [2, 128], strides = [1, 1]} : vector<2x512xf32> to vector<2x128xf32>
    %107 = math.tanh %106 : vector<2x128xf32>
    %108 = arith.mulf %104, %70 : vector<2x128xf32>
    %109 = arith.mulf %103, %107 : vector<2x128xf32>
    %110 = arith.addf %108, %109 : vector<2x128xf32>
    %111 = math.tanh %110 : vector<2x128xf32>
    %112 = arith.mulf %105, %111 : vector<2x128xf32>
    %113 = vector.extract_strided_slice %5 {offsets = [6, 0], sizes = [2, 512], strides = [1, 1]} : vector<16x512xf32> to vector<2x512xf32>
    %cst_29 = arith.constant dense<0.000000e+00> : vector<2x512xf32>
    %114 = tpu.matmul %91, %6, %cst_29 {dimension_numbers = #tpu.dot_dimension_numbers<[1], [0], [0], [1], [0, 0, 1, 1], [], []>} : vector<2x128xf32>, vector<128x512xf32>, vector<2x512xf32> -> vector<2x512xf32>
    %115 = arith.addf %113, %114 : vector<2x512xf32>
    %116 = vector.extract_strided_slice %115 {offsets = [0, 0], sizes = [2, 384], strides = [1, 1]} : vector<2x512xf32> to vector<2x384xf32>
    %117 = arith.negf %116 : vector<2x384xf32>
    %118 = math.exp %117 : vector<2x384xf32>
    %cst_30 = arith.constant 1.000000e+00 : f32
    %119 = vector.broadcast %cst_30 : f32 to vector<2x384xf32>
    %120 = arith.addf %119, %118 : vector<2x384xf32>
    %121 = arith.divf %119, %120 : vector<2x384xf32>
    %122 = vector.extract_strided_slice %121 {offsets = [0, 0], sizes = [2, 128], strides = [1, 1]} : vector<2x384xf32> to vector<2x128xf32>
    %123 = vector.extract_strided_slice %121 {offsets = [0, 128], sizes = [2, 128], strides = [1, 1]} : vector<2x384xf32> to vector<2x128xf32>
    %124 = vector.extract_strided_slice %121 {offsets = [0, 256], sizes = [2, 128], strides = [1, 1]} : vector<2x384xf32> to vector<2x128xf32>
    %125 = vector.extract_strided_slice %115 {offsets = [0, 384], sizes = [2, 128], strides = [1, 1]} : vector<2x512xf32> to vector<2x128xf32>
    %126 = math.tanh %125 : vector<2x128xf32>
    %127 = arith.mulf %123, %89 : vector<2x128xf32>
    %128 = arith.mulf %122, %126 : vector<2x128xf32>
    %129 = arith.addf %127, %128 : vector<2x128xf32>
    %130 = math.tanh %129 : vector<2x128xf32>
    %131 = arith.mulf %124, %130 : vector<2x128xf32>
    %cst_31 = arith.constant dense<0.000000e+00> : vector<2x512xf32>
    %132 = tpu.matmul %91, %8, %cst_31 {dimension_numbers = #tpu.dot_dimension_numbers<[1], [0], [0], [1], [0, 0, 1, 1], [], []>} : vector<2x128xf32>, vector<128x512xf32>, vector<2x512xf32> -> vector<2x512xf32>
    %133 = vector.broadcast %9 : vector<1x512xf32> to vector<2x512xf32>
    %134 = arith.addf %132, %133 : vector<2x512xf32>
    %cst_32 = arith.constant dense<0.000000e+00> : vector<2x512xf32>
    %135 = tpu.matmul %112, %7, %cst_32 {dimension_numbers = #tpu.dot_dimension_numbers<[1], [0], [0], [1], [0, 0, 1, 1], [], []>} : vector<2x128xf32>, vector<128x512xf32>, vector<2x512xf32> -> vector<2x512xf32>
    %136 = arith.addf %134, %135 : vector<2x512xf32>
    %137 = vector.extract_strided_slice %136 {offsets = [0, 0], sizes = [2, 384], strides = [1, 1]} : vector<2x512xf32> to vector<2x384xf32>
    %138 = arith.negf %137 : vector<2x384xf32>
    %139 = math.exp %138 : vector<2x384xf32>
    %cst_33 = arith.constant 1.000000e+00 : f32
    %140 = vector.broadcast %cst_33 : f32 to vector<2x384xf32>
    %141 = arith.addf %140, %139 : vector<2x384xf32>
    %142 = arith.divf %140, %141 : vector<2x384xf32>
    %143 = vector.extract_strided_slice %142 {offsets = [0, 0], sizes = [2, 128], strides = [1, 1]} : vector<2x384xf32> to vector<2x128xf32>
    %144 = vector.extract_strided_slice %142 {offsets = [0, 128], sizes = [2, 128], strides = [1, 1]} : vector<2x384xf32> to vector<2x128xf32>
    %145 = vector.extract_strided_slice %142 {offsets = [0, 256], sizes = [2, 128], strides = [1, 1]} : vector<2x384xf32> to vector<2x128xf32>
    %146 = vector.extract_strided_slice %136 {offsets = [0, 384], sizes = [2, 128], strides = [1, 1]} : vector<2x512xf32> to vector<2x128xf32>
    %147 = math.tanh %146 : vector<2x128xf32>
    %148 = arith.mulf %144, %110 : vector<2x128xf32>
    %149 = arith.mulf %143, %147 : vector<2x128xf32>
    %150 = arith.addf %148, %149 : vector<2x128xf32>
    %151 = math.tanh %150 : vector<2x128xf32>
    %152 = arith.mulf %145, %151 : vector<2x128xf32>
    %153 = vector.extract_strided_slice %5 {offsets = [8, 0], sizes = [2, 512], strides = [1, 1]} : vector<16x512xf32> to vector<2x512xf32>
    %cst_34 = arith.constant dense<0.000000e+00> : vector<2x512xf32>
    %154 = tpu.matmul %131, %6, %cst_34 {dimension_numbers = #tpu.dot_dimension_numbers<[1], [0], [0], [1], [0, 0, 1, 1], [], []>} : vector<2x128xf32>, vector<128x512xf32>, vector<2x512xf32> -> vector<2x512xf32>
    %155 = arith.addf %153, %154 : vector<2x512xf32>
    %156 = vector.extract_strided_slice %155 {offsets = [0, 0], sizes = [2, 384], strides = [1, 1]} : vector<2x512xf32> to vector<2x384xf32>
    %157 = arith.negf %156 : vector<2x384xf32>
    %158 = math.exp %157 : vector<2x384xf32>
    %cst_35 = arith.constant 1.000000e+00 : f32
    %159 = vector.broadcast %cst_35 : f32 to vector<2x384xf32>
    %160 = arith.addf %159, %158 : vector<2x384xf32>
    %161 = arith.divf %159, %160 : vector<2x384xf32>
    %162 = vector.extract_strided_slice %161 {offsets = [0, 0], sizes = [2, 128], strides = [1, 1]} : vector<2x384xf32> to vector<2x128xf32>
    %163 = vector.extract_strided_slice %161 {offsets = [0, 128], sizes = [2, 128], strides = [1, 1]} : vector<2x384xf32> to vector<2x128xf32>
    %164 = vector.extract_strided_slice %161 {offsets = [0, 256], sizes = [2, 128], strides = [1, 1]} : vector<2x384xf32> to vector<2x128xf32>
    %165 = vector.extract_strided_slice %155 {offsets = [0, 384], sizes = [2, 128], strides = [1, 1]} : vector<2x512xf32> to vector<2x128xf32>
    %166 = math.tanh %165 : vector<2x128xf32>
    %167 = arith.mulf %163, %129 : vector<2x128xf32>
    %168 = arith.mulf %162, %166 : vector<2x128xf32>
    %169 = arith.addf %167, %168 : vector<2x128xf32>
    %170 = math.tanh %169 : vector<2x128xf32>
    %171 = arith.mulf %164, %170 : vector<2x128xf32>
    %cst_36 = arith.constant dense<0.000000e+00> : vector<2x512xf32>
    %172 = tpu.matmul %131, %8, %cst_36 {dimension_numbers = #tpu.dot_dimension_numbers<[1], [0], [0], [1], [0, 0, 1, 1], [], []>} : vector<2x128xf32>, vector<128x512xf32>, vector<2x512xf32> -> vector<2x512xf32>
    %173 = vector.broadcast %9 : vector<1x512xf32> to vector<2x512xf32>
    %174 = arith.addf %172, %173 : vector<2x512xf32>
    %cst_37 = arith.constant dense<0.000000e+00> : vector<2x512xf32>
    %175 = tpu.matmul %152, %7, %cst_37 {dimension_numbers = #tpu.dot_dimension_numbers<[1], [0], [0], [1], [0, 0, 1, 1], [], []>} : vector<2x128xf32>, vector<128x512xf32>, vector<2x512xf32> -> vector<2x512xf32>
    %176 = arith.addf %174, %175 : vector<2x512xf32>
    %177 = vector.extract_strided_slice %176 {offsets = [0, 0], sizes = [2, 384], strides = [1, 1]} : vector<2x512xf32> to vector<2x384xf32>
    %178 = arith.negf %177 : vector<2x384xf32>
    %179 = math.exp %178 : vector<2x384xf32>
    %cst_38 = arith.constant 1.000000e+00 : f32
    %180 = vector.broadcast %cst_38 : f32 to vector<2x384xf32>
    %181 = arith.addf %180, %179 : vector<2x384xf32>
    %182 = arith.divf %180, %181 : vector<2x384xf32>
    %183 = vector.extract_strided_slice %182 {offsets = [0, 0], sizes = [2, 128], strides = [1, 1]} : vector<2x384xf32> to vector<2x128xf32>
    %184 = vector.extract_strided_slice %182 {offsets = [0, 128], sizes = [2, 128], strides = [1, 1]} : vector<2x384xf32> to vector<2x128xf32>
    %185 = vector.extract_strided_slice %182 {offsets = [0, 256], sizes = [2, 128], strides = [1, 1]} : vector<2x384xf32> to vector<2x128xf32>
    %186 = vector.extract_strided_slice %176 {offsets = [0, 384], sizes = [2, 128], strides = [1, 1]} : vector<2x512xf32> to vector<2x128xf32>
    %187 = math.tanh %186 : vector<2x128xf32>
    %188 = arith.mulf %184, %150 : vector<2x128xf32>
    %189 = arith.mulf %183, %187 : vector<2x128xf32>
    %190 = arith.addf %188, %189 : vector<2x128xf32>
    %191 = math.tanh %190 : vector<2x128xf32>
    %192 = arith.mulf %185, %191 : vector<2x128xf32>
    %193 = vector.extract_strided_slice %5 {offsets = [10, 0], sizes = [2, 512], strides = [1, 1]} : vector<16x512xf32> to vector<2x512xf32>
    %cst_39 = arith.constant dense<0.000000e+00> : vector<2x512xf32>
    %194 = tpu.matmul %171, %6, %cst_39 {dimension_numbers = #tpu.dot_dimension_numbers<[1], [0], [0], [1], [0, 0, 1, 1], [], []>} : vector<2x128xf32>, vector<128x512xf32>, vector<2x512xf32> -> vector<2x512xf32>
    %195 = arith.addf %193, %194 : vector<2x512xf32>
    %196 = vector.extract_strided_slice %195 {offsets = [0, 0], sizes = [2, 384], strides = [1, 1]} : vector<2x512xf32> to vector<2x384xf32>
    %197 = arith.negf %196 : vector<2x384xf32>
    %198 = math.exp %197 : vector<2x384xf32>
    %cst_40 = arith.constant 1.000000e+00 : f32
    %199 = vector.broadcast %cst_40 : f32 to vector<2x384xf32>
    %200 = arith.addf %199, %198 : vector<2x384xf32>
    %201 = arith.divf %199, %200 : vector<2x384xf32>
    %202 = vector.extract_strided_slice %201 {offsets = [0, 0], sizes = [2, 128], strides = [1, 1]} : vector<2x384xf32> to vector<2x128xf32>
    %203 = vector.extract_strided_slice %201 {offsets = [0, 128], sizes = [2, 128], strides = [1, 1]} : vector<2x384xf32> to vector<2x128xf32>
    %204 = vector.extract_strided_slice %201 {offsets = [0, 256], sizes = [2, 128], strides = [1, 1]} : vector<2x384xf32> to vector<2x128xf32>
    %205 = vector.extract_strided_slice %195 {offsets = [0, 384], sizes = [2, 128], strides = [1, 1]} : vector<2x512xf32> to vector<2x128xf32>
    %206 = math.tanh %205 : vector<2x128xf32>
    %207 = arith.mulf %203, %169 : vector<2x128xf32>
    %208 = arith.mulf %202, %206 : vector<2x128xf32>
    %209 = arith.addf %207, %208 : vector<2x128xf32>
    %210 = math.tanh %209 : vector<2x128xf32>
    %211 = arith.mulf %204, %210 : vector<2x128xf32>
    %cst_41 = arith.constant dense<0.000000e+00> : vector<2x512xf32>
    %212 = tpu.matmul %171, %8, %cst_41 {dimension_numbers = #tpu.dot_dimension_numbers<[1], [0], [0], [1], [0, 0, 1, 1], [], []>} : vector<2x128xf32>, vector<128x512xf32>, vector<2x512xf32> -> vector<2x512xf32>
    %213 = vector.broadcast %9 : vector<1x512xf32> to vector<2x512xf32>
    %214 = arith.addf %212, %213 : vector<2x512xf32>
    %cst_42 = arith.constant dense<0.000000e+00> : vector<2x512xf32>
    %215 = tpu.matmul %192, %7, %cst_42 {dimension_numbers = #tpu.dot_dimension_numbers<[1], [0], [0], [1], [0, 0, 1, 1], [], []>} : vector<2x128xf32>, vector<128x512xf32>, vector<2x512xf32> -> vector<2x512xf32>
    %216 = arith.addf %214, %215 : vector<2x512xf32>
    %217 = vector.extract_strided_slice %216 {offsets = [0, 0], sizes = [2, 384], strides = [1, 1]} : vector<2x512xf32> to vector<2x384xf32>
    %218 = arith.negf %217 : vector<2x384xf32>
    %219 = math.exp %218 : vector<2x384xf32>
    %cst_43 = arith.constant 1.000000e+00 : f32
    %220 = vector.broadcast %cst_43 : f32 to vector<2x384xf32>
    %221 = arith.addf %220, %219 : vector<2x384xf32>
    %222 = arith.divf %220, %221 : vector<2x384xf32>
    %223 = vector.extract_strided_slice %222 {offsets = [0, 0], sizes = [2, 128], strides = [1, 1]} : vector<2x384xf32> to vector<2x128xf32>
    %224 = vector.extract_strided_slice %222 {offsets = [0, 128], sizes = [2, 128], strides = [1, 1]} : vector<2x384xf32> to vector<2x128xf32>
    %225 = vector.extract_strided_slice %222 {offsets = [0, 256], sizes = [2, 128], strides = [1, 1]} : vector<2x384xf32> to vector<2x128xf32>
    %226 = vector.extract_strided_slice %216 {offsets = [0, 384], sizes = [2, 128], strides = [1, 1]} : vector<2x512xf32> to vector<2x128xf32>
    %227 = math.tanh %226 : vector<2x128xf32>
    %228 = arith.mulf %224, %190 : vector<2x128xf32>
    %229 = arith.mulf %223, %227 : vector<2x128xf32>
    %230 = arith.addf %228, %229 : vector<2x128xf32>
    %231 = math.tanh %230 : vector<2x128xf32>
    %232 = arith.mulf %225, %231 : vector<2x128xf32>
    %233 = vector.extract_strided_slice %5 {offsets = [12, 0], sizes = [2, 512], strides = [1, 1]} : vector<16x512xf32> to vector<2x512xf32>
    %cst_44 = arith.constant dense<0.000000e+00> : vector<2x512xf32>
    %234 = tpu.matmul %211, %6, %cst_44 {dimension_numbers = #tpu.dot_dimension_numbers<[1], [0], [0], [1], [0, 0, 1, 1], [], []>} : vector<2x128xf32>, vector<128x512xf32>, vector<2x512xf32> -> vector<2x512xf32>
    %235 = arith.addf %233, %234 : vector<2x512xf32>
    %236 = vector.extract_strided_slice %235 {offsets = [0, 0], sizes = [2, 384], strides = [1, 1]} : vector<2x512xf32> to vector<2x384xf32>
    %237 = arith.negf %236 : vector<2x384xf32>
    %238 = math.exp %237 : vector<2x384xf32>
    %cst_45 = arith.constant 1.000000e+00 : f32
    %239 = vector.broadcast %cst_45 : f32 to vector<2x384xf32>
    %240 = arith.addf %239, %238 : vector<2x384xf32>
    %241 = arith.divf %239, %240 : vector<2x384xf32>
    %242 = vector.extract_strided_slice %241 {offsets = [0, 0], sizes = [2, 128], strides = [1, 1]} : vector<2x384xf32> to vector<2x128xf32>
    %243 = vector.extract_strided_slice %241 {offsets = [0, 128], sizes = [2, 128], strides = [1, 1]} : vector<2x384xf32> to vector<2x128xf32>
    %244 = vector.extract_strided_slice %241 {offsets = [0, 256], sizes = [2, 128], strides = [1, 1]} : vector<2x384xf32> to vector<2x128xf32>
    %245 = vector.extract_strided_slice %235 {offsets = [0, 384], sizes = [2, 128], strides = [1, 1]} : vector<2x512xf32> to vector<2x128xf32>
    %246 = math.tanh %245 : vector<2x128xf32>
    %247 = arith.mulf %243, %209 : vector<2x128xf32>
    %248 = arith.mulf %242, %246 : vector<2x128xf32>
    %249 = arith.addf %247, %248 : vector<2x128xf32>
    %250 = math.tanh %249 : vector<2x128xf32>
    %251 = arith.mulf %244, %250 : vector<2x128xf32>
    %cst_46 = arith.constant dense<0.000000e+00> : vector<2x512xf32>
    %252 = tpu.matmul %211, %8, %cst_46 {dimension_numbers = #tpu.dot_dimension_numbers<[1], [0], [0], [1], [0, 0, 1, 1], [], []>} : vector<2x128xf32>, vector<128x512xf32>, vector<2x512xf32> -> vector<2x512xf32>
    %253 = vector.broadcast %9 : vector<1x512xf32> to vector<2x512xf32>
    %254 = arith.addf %252, %253 : vector<2x512xf32>
    %cst_47 = arith.constant dense<0.000000e+00> : vector<2x512xf32>
    %255 = tpu.matmul %232, %7, %cst_47 {dimension_numbers = #tpu.dot_dimension_numbers<[1], [0], [0], [1], [0, 0, 1, 1], [], []>} : vector<2x128xf32>, vector<128x512xf32>, vector<2x512xf32> -> vector<2x512xf32>
    %256 = arith.addf %254, %255 : vector<2x512xf32>
    %257 = vector.extract_strided_slice %256 {offsets = [0, 0], sizes = [2, 384], strides = [1, 1]} : vector<2x512xf32> to vector<2x384xf32>
    %258 = arith.negf %257 : vector<2x384xf32>
    %259 = math.exp %258 : vector<2x384xf32>
    %cst_48 = arith.constant 1.000000e+00 : f32
    %260 = vector.broadcast %cst_48 : f32 to vector<2x384xf32>
    %261 = arith.addf %260, %259 : vector<2x384xf32>
    %262 = arith.divf %260, %261 : vector<2x384xf32>
    %263 = vector.extract_strided_slice %262 {offsets = [0, 0], sizes = [2, 128], strides = [1, 1]} : vector<2x384xf32> to vector<2x128xf32>
    %264 = vector.extract_strided_slice %262 {offsets = [0, 128], sizes = [2, 128], strides = [1, 1]} : vector<2x384xf32> to vector<2x128xf32>
    %265 = vector.extract_strided_slice %262 {offsets = [0, 256], sizes = [2, 128], strides = [1, 1]} : vector<2x384xf32> to vector<2x128xf32>
    %266 = vector.extract_strided_slice %256 {offsets = [0, 384], sizes = [2, 128], strides = [1, 1]} : vector<2x512xf32> to vector<2x128xf32>
    %267 = math.tanh %266 : vector<2x128xf32>
    %268 = arith.mulf %264, %230 : vector<2x128xf32>
    %269 = arith.mulf %263, %267 : vector<2x128xf32>
    %270 = arith.addf %268, %269 : vector<2x128xf32>
    %271 = math.tanh %270 : vector<2x128xf32>
    %272 = arith.mulf %265, %271 : vector<2x128xf32>
    %273 = vector.extract_strided_slice %5 {offsets = [14, 0], sizes = [2, 512], strides = [1, 1]} : vector<16x512xf32> to vector<2x512xf32>
    %cst_49 = arith.constant dense<0.000000e+00> : vector<2x512xf32>
    %274 = tpu.matmul %251, %6, %cst_49 {dimension_numbers = #tpu.dot_dimension_numbers<[1], [0], [0], [1], [0, 0, 1, 1], [], []>} : vector<2x128xf32>, vector<128x512xf32>, vector<2x512xf32> -> vector<2x512xf32>
    %275 = arith.addf %273, %274 : vector<2x512xf32>
    %276 = vector.extract_strided_slice %275 {offsets = [0, 0], sizes = [2, 384], strides = [1, 1]} : vector<2x512xf32> to vector<2x384xf32>
    %277 = arith.negf %276 : vector<2x384xf32>
    %278 = math.exp %277 : vector<2x384xf32>
    %cst_50 = arith.constant 1.000000e+00 : f32
    %279 = vector.broadcast %cst_50 : f32 to vector<2x384xf32>
    %280 = arith.addf %279, %278 : vector<2x384xf32>
    %281 = arith.divf %279, %280 : vector<2x384xf32>
    %282 = vector.extract_strided_slice %281 {offsets = [0, 0], sizes = [2, 128], strides = [1, 1]} : vector<2x384xf32> to vector<2x128xf32>
    %283 = vector.extract_strided_slice %281 {offsets = [0, 128], sizes = [2, 128], strides = [1, 1]} : vector<2x384xf32> to vector<2x128xf32>
    %284 = vector.extract_strided_slice %281 {offsets = [0, 256], sizes = [2, 128], strides = [1, 1]} : vector<2x384xf32> to vector<2x128xf32>
    %285 = vector.extract_strided_slice %275 {offsets = [0, 384], sizes = [2, 128], strides = [1, 1]} : vector<2x512xf32> to vector<2x128xf32>
    %286 = math.tanh %285 : vector<2x128xf32>
    %287 = arith.mulf %283, %249 : vector<2x128xf32>
    %288 = arith.mulf %282, %286 : vector<2x128xf32>
    %289 = arith.addf %287, %288 : vector<2x128xf32>
    %290 = math.tanh %289 : vector<2x128xf32>
    %291 = arith.mulf %284, %290 : vector<2x128xf32>
    %cst_51 = arith.constant dense<0.000000e+00> : vector<2x512xf32>
    %292 = tpu.matmul %251, %8, %cst_51 {dimension_numbers = #tpu.dot_dimension_numbers<[1], [0], [0], [1], [0, 0, 1, 1], [], []>} : vector<2x128xf32>, vector<128x512xf32>, vector<2x512xf32> -> vector<2x512xf32>
    %293 = vector.broadcast %9 : vector<1x512xf32> to vector<2x512xf32>
    %294 = arith.addf %292, %293 : vector<2x512xf32>
    %cst_52 = arith.constant dense<0.000000e+00> : vector<2x512xf32>
    %295 = tpu.matmul %272, %7, %cst_52 {dimension_numbers = #tpu.dot_dimension_numbers<[1], [0], [0], [1], [0, 0, 1, 1], [], []>} : vector<2x128xf32>, vector<128x512xf32>, vector<2x512xf32> -> vector<2x512xf32>
    %296 = arith.addf %294, %295 : vector<2x512xf32>
    %297 = vector.extract_strided_slice %296 {offsets = [0, 0], sizes = [2, 384], strides = [1, 1]} : vector<2x512xf32> to vector<2x384xf32>
    %298 = arith.negf %297 : vector<2x384xf32>
    %299 = math.exp %298 : vector<2x384xf32>
    %cst_53 = arith.constant 1.000000e+00 : f32
    %300 = vector.broadcast %cst_53 : f32 to vector<2x384xf32>
    %301 = arith.addf %300, %299 : vector<2x384xf32>
    %302 = arith.divf %300, %301 : vector<2x384xf32>
    %303 = vector.extract_strided_slice %302 {offsets = [0, 0], sizes = [2, 128], strides = [1, 1]} : vector<2x384xf32> to vector<2x128xf32>
    %304 = vector.extract_strided_slice %302 {offsets = [0, 128], sizes = [2, 128], strides = [1, 1]} : vector<2x384xf32> to vector<2x128xf32>
    %305 = vector.extract_strided_slice %302 {offsets = [0, 256], sizes = [2, 128], strides = [1, 1]} : vector<2x384xf32> to vector<2x128xf32>
    %306 = vector.extract_strided_slice %296 {offsets = [0, 384], sizes = [2, 128], strides = [1, 1]} : vector<2x512xf32> to vector<2x128xf32>
    %307 = math.tanh %306 : vector<2x128xf32>
    %308 = arith.mulf %304, %270 : vector<2x128xf32>
    %309 = arith.mulf %303, %307 : vector<2x128xf32>
    %310 = arith.addf %308, %309 : vector<2x128xf32>
    %311 = math.tanh %310 : vector<2x128xf32>
    %312 = arith.mulf %305, %311 : vector<2x128xf32>
    %cst_54 = arith.constant dense<0.000000e+00> : vector<2x512xf32>
    %313 = tpu.matmul %291, %8, %cst_54 {dimension_numbers = #tpu.dot_dimension_numbers<[1], [0], [0], [1], [0, 0, 1, 1], [], []>} : vector<2x128xf32>, vector<128x512xf32>, vector<2x512xf32> -> vector<2x512xf32>
    %314 = vector.broadcast %9 : vector<1x512xf32> to vector<2x512xf32>
    %315 = arith.addf %313, %314 : vector<2x512xf32>
    %cst_55 = arith.constant dense<0.000000e+00> : vector<2x512xf32>
    %316 = tpu.matmul %312, %7, %cst_55 {dimension_numbers = #tpu.dot_dimension_numbers<[1], [0], [0], [1], [0, 0, 1, 1], [], []>} : vector<2x128xf32>, vector<128x512xf32>, vector<2x512xf32> -> vector<2x512xf32>
    %317 = arith.addf %315, %316 : vector<2x512xf32>
    %318 = vector.extract_strided_slice %317 {offsets = [0, 0], sizes = [2, 384], strides = [1, 1]} : vector<2x512xf32> to vector<2x384xf32>
    %319 = arith.negf %318 : vector<2x384xf32>
    %320 = math.exp %319 : vector<2x384xf32>
    %cst_56 = arith.constant 1.000000e+00 : f32
    %321 = vector.broadcast %cst_56 : f32 to vector<2x384xf32>
    %322 = arith.addf %321, %320 : vector<2x384xf32>
    %323 = arith.divf %321, %322 : vector<2x384xf32>
    %324 = vector.extract_strided_slice %323 {offsets = [0, 0], sizes = [2, 128], strides = [1, 1]} : vector<2x384xf32> to vector<2x128xf32>
    %325 = vector.extract_strided_slice %323 {offsets = [0, 128], sizes = [2, 128], strides = [1, 1]} : vector<2x384xf32> to vector<2x128xf32>
    %326 = vector.extract_strided_slice %323 {offsets = [0, 256], sizes = [2, 128], strides = [1, 1]} : vector<2x384xf32> to vector<2x128xf32>
    %327 = vector.extract_strided_slice %317 {offsets = [0, 384], sizes = [2, 128], strides = [1, 1]} : vector<2x512xf32> to vector<2x128xf32>
    %328 = math.tanh %327 : vector<2x128xf32>
    %329 = arith.mulf %325, %310 : vector<2x128xf32>
    %330 = arith.mulf %324, %328 : vector<2x128xf32>
    %331 = arith.addf %329, %330 : vector<2x128xf32>
    %332 = math.tanh %331 : vector<2x128xf32>
    %333 = arith.mulf %326, %332 : vector<2x128xf32>
    %c0_57 = arith.constant 0 : index
    %c0_58 = arith.constant 0 : index
    %334 = vector.load %arg7[%c0_57, %c0_58] : memref<128x128xf32, #tpu.memory_space<vmem>>, vector<128x128xf32>
    %cst_59 = arith.constant dense<0.000000e+00> : vector<2x128xf32>
    %335 = tpu.matmul %333, %334, %cst_59 {dimension_numbers = #tpu.dot_dimension_numbers<[1], [0], [0], [1], [0, 0, 1, 1], [], []>} : vector<2x128xf32>, vector<128x128xf32>, vector<2x128xf32> -> vector<2x128xf32>
    %c0_60 = arith.constant 0 : index
    %c0_61 = arith.constant 0 : index
    %336 = vector.load %arg8[%c0_60, %c0_61] : memref<1x128xf32, #tpu.memory_space<vmem>>, vector<1x128xf32>
    %337 = vector.broadcast %336 : vector<1x128xf32> to vector<2x128xf32>
    %338 = arith.addf %335, %337 : vector<2x128xf32>
    %cst_62 = arith.constant 0.000000e+00 : f32
    %339 = vector.broadcast %cst_62 : f32 to vector<2x128xf32>
    %340 = arith.maximumf %338, %339 : vector<2x128xf32>
    %c0_63 = arith.constant 0 : index
    %c0_64 = arith.constant 0 : index
    %341 = vector.load %arg9[%c0_63, %c0_64] : memref<128x1xf32, #tpu.memory_space<vmem>>, vector<128x1xf32>
    %cst_65 = arith.constant dense<0.000000e+00> : vector<2x1xf32>
    %342 = tpu.matmul %340, %341, %cst_65 {dimension_numbers = #tpu.dot_dimension_numbers<[1], [0], [0], [1], [0, 0, 1, 1], [], []>} : vector<2x128xf32>, vector<128x1xf32>, vector<2x1xf32> -> vector<2x1xf32>
    %c0_66 = arith.constant 0 : index
    %c0_67 = arith.constant 0 : index
    %343 = vector.load %arg10[%c0_66, %c0_67] : memref<1x1xf32, #tpu.memory_space<vmem>>, vector<1x1xf32>
    %344 = vector.broadcast %343 : vector<1x1xf32> to vector<2x1xf32>
    %345 = arith.addf %342, %344 : vector<2x1xf32>
    %c0_68 = arith.constant 0 : index
    %c0_69 = arith.constant 0 : index
    %346 = vector.load %arg11[%c0_68, %c0_69] : memref<2x1xf32, #tpu.memory_space<vmem>>, vector<2x1xf32>
    tpu.vector_store %arg11[%c0_68, %c0_69], %345 {strides = array<i32>} : memref<2x1xf32, #tpu.memory_space<vmem>>, vector<2x1xf32>,
    return
  }
}

</mosaic_0001>

<llo_original>
// kernel: lstm_forward.1
$region0: #{lstm_forward.1}
  #allocation0 [shape = 'u32[]', space=smem, size = 0x4, offset = 0x4, fixed_abs, tag = 'smem constant byte address 0x4 - core index']
  #allocation1 [shape = 'u32[144,128]{1,0:T(1,128)}', space=vmem, size = 0x12000, scoped, tag = 'internal scratch']
  #allocation2 [shape = 'f32[1,1]{1,0:T(1,128)S(1)}', space=vmem, size = 0x200, scoped, tag = 'scoped memory for lstm_forward.1']
  %s0 = inlined_call_operand.vmem [shape: f32[16,4], index: 0, kind: input, shape index: {}]
  %s1 = inlined_call_operand.vmem [shape: f32[4,512], index: 1, kind: input, shape index: {}]
  %s2 = inlined_call_operand.hbm [shape: f32[128,512], index: 2, kind: input, shape index: {}]
  %s3 = inlined_call_operand.vmem [shape: f32[1,512], index: 3, kind: input, shape index: {}]
  %s4 = inlined_call_operand.hbm [shape: f32[128,512], index: 4, kind: input, shape index: {}]
  %s5 = inlined_call_operand.hbm [shape: f32[128,512], index: 5, kind: input, shape index: {}]
  %s6 = inlined_call_operand.vmem [shape: f32[1,512], index: 6, kind: input, shape index: {}]
  %s7 = inlined_call_operand.vmem [shape: f32[128,128], index: 7, kind: input, shape index: {}]
  %s8 = inlined_call_operand.vmem [shape: f32[1,128], index: 8, kind: input, shape index: {}]
  %s9 = inlined_call_operand.vmem [shape: f32[128,1], index: 9, kind: input, shape index: {}]
  %s10 = inlined_call_operand.<no memory space> [shape: f32[1,1], index: 10, kind: input, shape index: {}]
  %s11 = inlined_call_operand.vmem [shape: f32[2,1], index: 11, kind: output, shape index: {}]
  %s12 = sld [smem:[#allocation0]]
  $region66: #{lstm_forward.1} parent=0
    _
  %s14 = ssub.s32 1, %s12
  %s15 = scalar_select 0, %s14, %s12
  %v16 = vstv %s10
  %17 = vst [vmem:[#allocation2] sm:$0x1] %v16
  $region1: #{lstm_forward.1} parent=0
    #allocation3 [shape = 'u8[262144]{0}', space=vmem, size = 0x40000, scoped, tag = 'input window, operand 2, single buffered']
    #allocation4 [shape = 's32[1]{0}', space=sflag, size = 0x4, scoped, tag = 'scoped memory for lstm_forward.1']
    #allocation5 [shape = 'u8[262144]{0}', space=vmem, size = 0x40000, scoped, tag = 'input window, operand 4, single buffered']
    #allocation6 [shape = 's32[1]{0}', space=sflag, size = 0x4, scoped, tag = 'scoped memory for lstm_forward.1']
    #allocation7 [shape = 'u8[262144]{0}', space=vmem, size = 0x40000, scoped, tag = 'input window, operand 5, single buffered']
    %18 = vsyncpa [#allocation4], 0
    %19 = vsyncpa [#allocation6], 0
    // Predicated region
    $region2: #{lstm_forward.1} parent=1 // pred_check
      _
    $region3: #{lstm_forward.1} parent=1 // pred_check_branch
      %21 = sbr.rel (0) target = $region5
    $region4: #{lstm_forward.1} parent=1 // pred_region
      _
    $region5: #{lstm_forward.1} parent=1 // pred_fallthru
      _
    // Predicated region
    $region6: #{lstm_forward.1} parent=1 // pred_check
      _
    $region7: #{lstm_forward.1} parent=1 // pred_check_branch
      %23 = sbr.rel (0) target = $region9
    $region8: #{lstm_forward.1} parent=1 // pred_region
      _
    $region9: #{lstm_forward.1} parent=1 // pred_fallthru
      _
    // Predicated region
    $region10: #{lstm_forward.1} parent=1 // pred_check
      _
    $region11: #{lstm_forward.1} parent=1 // pred_check_branch
      %25 = sbr.rel (0) target = $region13
    $region12: #{lstm_forward.1} parent=1 // pred_region
      %s27 = ssub.s32 8192, 8192
      %28 = vsyncadd [#allocation4], %s27
      %s29 = sshll.u32 [#allocation3], 4
      %s30 = int_to_ptr.vmem [resolvable:$true] %s29
      %35 = dma.hbm_to_vmem [thread:$0]  %s2, 8192, %s30, [#allocation4], 512, 512, 32
    $region13: #{lstm_forward.1} parent=1 // pred_fallthru
      _
    // Predicated region
    $region14: #{lstm_forward.1} parent=1 // pred_check
      _
    $region15: #{lstm_forward.1} parent=1 // pred_check_branch
      %37 = sbr.rel (0) target = $region17
    $region16: #{lstm_forward.1} parent=1 // pred_region
      _
    $region17: #{lstm_forward.1} parent=1 // pred_fallthru
      _
    // Predicated region
    $region18: #{lstm_forward.1} parent=1 // pred_check
      _
    $region19: #{lstm_forward.1} parent=1 // pred_check_branch
      %39 = sbr.rel (0) target = $region21
    $region20: #{lstm_forward.1} parent=1 // pred_region
      %s41 = ssub.s32 8192, 8192
      %42 = vsyncadd [#allocation6], %s41
      %s43 = sshll.u32 [#allocation5], 4
      %s44 = int_to_ptr.vmem [resolvable:$true] %s43
      %49 = dma.hbm_to_vmem [thread:$0]  %s4, 8192, %s44, [#allocation6], 512, 512, 32
    $region21: #{lstm_forward.1} parent=1 // pred_fallthru
      _
    // Predicated region
    $region22: #{lstm_forward.1} parent=1 // pred_check
      _
    $region23: #{lstm_forward.1} parent=1 // pred_check_branch
      %51 = sbr.rel (0) target = $region25
    $region24: #{lstm_forward.1} parent=1 // pred_region
      %s53 = ssub.s32 8192, 8192
      %54 = vsyncadd [#allocation6], %s53
      %s55 = sshll.u32 [#allocation7], 4
      %s56 = int_to_ptr.vmem [resolvable:$true] %s55
      %61 = dma.hbm_to_vmem [thread:$0]  %s5, 8192, %s56, [#allocation6], 512, 512, 32
    $region25: #{lstm_forward.1} parent=1 // pred_fallthru
      _
    // Predicated region
    $region26: #{lstm_forward.1} parent=1 // pred_check
      _
    $region27: #{lstm_forward.1} parent=1 // pred_check_branch
      %63 = sbr.rel (0) target = $region29
    $region28: #{lstm_forward.1} parent=1 // pred_region
      _
    $region29: #{lstm_forward.1} parent=1 // pred_fallthru
      _
    // Predicated region
    $region30: #{lstm_forward.1} parent=1 // pred_check
      _
    $region31: #{lstm_forward.1} parent=1 // pred_check_branch
      %65 = sbr.rel (0) target = $region33
    $region32: #{lstm_forward.1} parent=1 // pred_region
      _
    $region33: #{lstm_forward.1} parent=1 // pred_fallthru
      _
    // Predicated region
    $region34: #{lstm_forward.1} parent=1 // pred_check
      _
    $region35: #{lstm_forward.1} parent=1 // pred_check_branch
      %67 = sbr.rel (0) target = $region37
    $region36: #{lstm_forward.1} parent=1 // pred_region
      _
    $region37: #{lstm_forward.1} parent=1 // pred_fallthru
      _
    // Predicated region
    $region38: #{lstm_forward.1} parent=1 // pred_check
      _
    $region39: #{lstm_forward.1} parent=1 // pred_check_branch
      %69 = sbr.rel (0) target = $region41
    $region40: #{lstm_forward.1} parent=1 // pred_region
      _
    $region41: #{lstm_forward.1} parent=1 // pred_fallthru
      _
    // Predicated region
    $region42: #{lstm_forward.1} parent=1 // pred_check
      _
    $region43: #{lstm_forward.1} parent=1 // pred_check_branch
      %71 = sbr.rel (0) target = $region45
    $region44: #{lstm_forward.1} parent=1 // pred_region
      _
    $region45: #{lstm_forward.1} parent=1 // pred_fallthru
      _
    // Predicated region
    $region46: #{lstm_forward.1} parent=1 // pred_check
      _
    $region47: #{lstm_forward.1} parent=1 // pred_check_branch
      %73 = sbr.rel (0) target = $region49
    $region48: #{lstm_forward.1} parent=1 // pred_region
      %74 = dma.done [#allocation4], 8192
    $region49: #{lstm_forward.1} parent=1 // pred_fallthru
      _
    // Predicated region
    $region50: #{lstm_forward.1} parent=1 // pred_check
      _
    $region51: #{lstm_forward.1} parent=1 // pred_check_branch
      %76 = sbr.rel (0) target = $region53
    $region52: #{lstm_forward.1} parent=1 // pred_region
      %77 = dma.done [#allocation6], 8192
    $region53: #{lstm_forward.1} parent=1 // pred_fallthru
      _
    // Predicated region
    $region54: #{lstm_forward.1} parent=1 // pred_check
      _
    $region55: #{lstm_forward.1} parent=1 // pred_check_branch
      %79 = sbr.rel (0) target = $region57
    $region56: #{lstm_forward.1} parent=1 // pred_region
      %80 = dma.done [#allocation6], 8192
    $region57: #{lstm_forward.1} parent=1 // pred_fallthru
      _
    %v81 = vld [vmem:[%s0] sm:$0xff]
    %v82 = vld [vmem:[%s0 + $0x8] sm:$0xff]
    %v83 = vld [vmem:[%s1] sm:$0xff]
    %v84 = vld [vmem:[%s1 + $0x8] sm:$0xff]
    %v85 = vld [vmem:[%s3] sm:$0xf]
    %v87 = vlaneseq
    %v88 = vshrl.u32 %v87, 7
    %v89 = vsub.s32 0, %v88
    %v90 = vrot.slane %v85, %v89
    %v91 = vlaneseq
    %v92 = vshrl.u32 %v91, 7
    %v93 = vsub.s32 1, %v92
    %v94 = vrot.slane %v85, %v93
    %v95 = vlaneseq
    %v96 = vshrl.u32 %v95, 7
    %v97 = vsub.s32 2, %v96
    %v98 = vrot.slane %v85, %v97
    %v99 = vlaneseq
    %v100 = vshrl.u32 %v99, 7
    %v101 = vsub.s32 3, %v100
    %v102 = vrot.slane %v85, %v101
    %v109 = vcombine.high %v83, %v83
    %v110 = vcombine.high %v84, %v84
    %vm111 = vcmask 31744
    %v113 = vsel %vm111, %v81, 0
    %v116 = vsel %vm111, %v82, 0
    %vm118 = vcmask 1043456
    %v119 = vsel %vm118, %v83, 0
    %v121 = vsel %vm118, %v109, 0
    %v123 = vsel %vm118, %v84, 0
    %v125 = vsel %vm118, %v110, 0
    %127 = vmatprep.subr.mxu0 0.0
    %128 = vmatpush1.msra.mxu0 0.0
    %129 = vmatprep.subr.mxu0 0.0
    %130 = vmatpush1.msra.mxu0 0.0
    %131 = vmatprep.subr.mxu0 0.0
    %132 = vmatpush1.msra.mxu0 0.0
    %133 = vmatprep.subr.mxu0 0.0
    %134 = vmatpush1.msra.mxu0 0.0
    %135 = vmatprep.subr.mxu0 0.0
    %136 = vmatpush1.msra.mxu0 0.0
    %137 = vmatprep.subr.mxu0 0.0
    %138 = vmatpush1.msra.mxu0 0.0
    %139 = vmatprep.subr.mxu0 0.0
    %140 = vmatpush1.msra.mxu0 0.0
    %141 = vmatprep.subr.mxu0 0.0
    %142 = vmatpush1.msra.mxu0 0.0
    %143 = vmatprep.subr.mxu0 0.0
    %144 = vmatpush1.msra.mxu0 0.0
    %145 = vmatprep.subr.mxu0 0.0
    %146 = vmatpush1.msra.mxu0 0.0
    %147 = vmatprep.subr.mxu0 0.0
    %148 = vmatpush1.msra.mxu0 0.0
    %149 = vmatprep.subr.mxu0 0.0
    %150 = vmatpush1.msra.mxu0 0.0
    %151 = vmatprep.subr.mxu0 0.0
    %152 = vmatpush1.msra.mxu0 0.0
    %153 = vmatprep.subr.mxu0 0.0
    %154 = vmatpush1.msra.mxu0 0.0
    %155 = vmatprep.subr.mxu0 0.0
    %156 = vmatpush1.msra.mxu0 0.0
    %157 = vmatprep.subr.mxu0 %v121
    %158 = vmatpush1.msra.mxu0 %v119
    %159 = vmatprep.subr.mxu0 0.0
    %160 = vmatpush2.msra.mxu0 0.0
    %161 = vmatprep.subr.mxu0 0.0
    %162 = vmatpush2.msra.mxu0 0.0
    %163 = vmatprep.subr.mxu0 0.0
    %164 = vmatpush2.msra.mxu0 0.0
    %165 = vmatprep.subr.mxu0 0.0
    %166 = vmatpush2.msra.mxu0 0.0
    %167 = vmatprep.subr.mxu0 0.0
    %168 = vmatpush2.msra.mxu0 0.0
    %169 = vmatprep.subr.mxu0 0.0
    %170 = vmatpush2.msra.mxu0 0.0
    %171 = vmatprep.subr.mxu0 0.0
    %172 = vmatpush2.msra.mxu0 0.0
    %173 = vmatprep.subr.mxu0 0.0
    %174 = vmatpush2.msra.mxu0 0.0
    %175 = vmatprep.subr.mxu0 0.0
    %176 = vmatpush2.msra.mxu0 0.0
    %177 = vmatprep.subr.mxu0 0.0
    %178 = vmatpush2.msra.mxu0 0.0
    %179 = vmatprep.subr.mxu0 0.0
    %180 = vmatpush2.msra.mxu0 0.0
    %181 = vmatprep.subr.mxu0 0.0
    %182 = vmatpush2.msra.mxu0 0.0
    %183 = vmatprep.subr.mxu0 0.0
    %184 = vmatpush2.msra.mxu0 0.0
    %185 = vmatprep.subr.mxu0 0.0
    %186 = vmatpush2.msra.mxu0 0.0
    %187 = vmatprep.subr.mxu0 0.0
    %188 = vmatpush2.msra.mxu0 0.0
    %189 = vmatprep.subr.mxu0 0.0
    %190 = vmatpush2.msra.mxu0 0.0
    %191 = vmatprep.mubr.f32.mxu0 0.0
    %192 = vmatmul.mubr.f32.gmra.mxu0 %v113
    %v193 = vpop.f32.mrf.mxu0
    %v194 = vadd.f32 %v90, %v193
    %v195 = vpop.f32.mrf.mxu0
    %v196 = vadd.f32 %v94, %v195
    %197 = vmatprep.mubr.f32.mxu0 0.0
    %198 = vmatmul.mubr.f32.gmra.mxu0 %v116
    %v199 = vpop.f32.mrf.mxu0
    %v200 = vadd.f32 %v90, %v199
    %v201 = vpop.f32.mrf.mxu0
    %v202 = vadd.f32 %v94, %v201
    %203 = vdwg.mxu0
    %204 = vmatprep.subr.mxu0 0.0
    %205 = vmatpush1.msra.mxu0 0.0
    %206 = vmatprep.subr.mxu0 0.0
    %207 = vmatpush1.msra.mxu0 0.0
    %208 = vmatprep.subr.mxu0 0.0
    %209 = vmatpush1.msra.mxu0 0.0
    %210 = vmatprep.subr.mxu0 0.0
    %211 = vmatpush1.msra.mxu0 0.0
    %212 = vmatprep.subr.mxu0 0.0
    %213 = vmatpush1.msra.mxu0 0.0
    %214 = vmatprep.subr.mxu0 0.0
    %215 = vmatpush1.msra.mxu0 0.0
    %216 = vmatprep.subr.mxu0 0.0
    %217 = vmatpush1.msra.mxu0 0.0
    %218 = vmatprep.subr.mxu0 0.0
    %219 = vmatpush1.msra.mxu0 0.0
    %220 = vmatprep.subr.mxu0 0.0
    %221 = vmatpush1.msra.mxu0 0.0
    %222 = vmatprep.subr.mxu0 0.0
    %223 = vmatpush1.msra.mxu0 0.0
    %224 = vmatprep.subr.mxu0 0.0
    %225 = vmatpush1.msra.mxu0 0.0
    %226 = vmatprep.subr.mxu0 0.0
    %227 = vmatpush1.msra.mxu0 0.0
    %228 = vmatprep.subr.mxu0 0.0
    %229 = vmatpush1.msra.mxu0 0.0
    %230 = vmatprep.subr.mxu0 0.0
    %231 = vmatpush1.msra.mxu0 0.0
    %232 = vmatprep.subr.mxu0 0.0
    %233 = vmatpush1.msra.mxu0 0.0
    %234 = vmatprep.subr.mxu0 %v125
    %235 = vmatpush1.msra.mxu0 %v123
    %236 = vmatprep.subr.mxu0 0.0
    %237 = vmatpush2.msra.mxu0 0.0
    %238 = vmatprep.subr.mxu0 0.0
    %239 = vmatpush2.msra.mxu0 0.0
    %240 = vmatprep.subr.mxu0 0.0
    %241 = vmatpush2.msra.mxu0 0.0
    %242 = vmatprep.subr.mxu0 0.0
    %243 = vmatpush2.msra.mxu0 0.0
    %244 = vmatprep.subr.mxu0 0.0
    %245 = vmatpush2.msra.mxu0 0.0
    %246 = vmatprep.subr.mxu0 0.0
    %247 = vmatpush2.msra.mxu0 0.0
    %248 = vmatprep.subr.mxu0 0.0
    %249 = vmatpush2.msra.mxu0 0.0
    %250 = vmatprep.subr.mxu0 0.0
    %251 = vmatpush2.msra.mxu0 0.0
    %252 = vmatprep.subr.mxu0 0.0
    %253 = vmatpush2.msra.mxu0 0.0
    %254 = vmatprep.subr.mxu0 0.0
    %255 = vmatpush2.msra.mxu0 0.0
    %256 = vmatprep.subr.mxu0 0.0
    %257 = vmatpush2.msra.mxu0 0.0
    %258 = vmatprep.subr.mxu0 0.0
    %259 = vmatpush2.msra.mxu0 0.0
    %260 = vmatprep.subr.mxu0 0.0
    %261 = vmatpush2.msra.mxu0 0.0
    %262 = vmatprep.subr.mxu0 0.0
    %263 = vmatpush2.msra.mxu0 0.0
    %264 = vmatprep.subr.mxu0 0.0
    %265 = vmatpush2.msra.mxu0 0.0
    %266 = vmatprep.subr.mxu0 0.0
    %267 = vmatpush2.msra.mxu0 0.0
    %268 = vmatprep.mubr.f32.mxu0 0.0
    %269 = vmatmul.mubr.f32.gmra.mxu0 %v113
    %v270 = vpop.f32.mrf.mxu0
    %v271 = vadd.f32 %v98, %v270
    %v272 = vpop.f32.mrf.mxu0
    %v273 = vadd.f32 %v102, %v272
    %274 = vmatprep.mubr.f32.mxu0 0.0
    %275 = vmatmul.mubr.f32.gmra.mxu0 %v116
    %v276 = vpop.f32.mrf.mxu0
    %v277 = vadd.f32 %v98, %v276
    %v278 = vpop.f32.mrf.mxu0
    %v279 = vadd.f32 %v102, %v278
    %280 = vdwg.mxu0
    %v281 = vld [vmem:[#allocation3] sm:$0xff]
    %v282 = vld [vmem:[#allocation3 + $0x8] sm:$0xff]
    %v283 = vld [vmem:[#allocation3 + $0x10] sm:$0xff]
    %v284 = vld [vmem:[#allocation3 + $0x18] sm:$0xff]
    %v285 = vld [vmem:[#allocation3 + $0x20] sm:$0xff]
    %v286 = vld [vmem:[#allocation3 + $0x28] sm:$0xff]
    %v287 = vld [vmem:[#allocation3 + $0x30] sm:$0xff]
    %v288 = vld [vmem:[#allocation3 + $0x38] sm:$0xff]
    %v289 = vld [vmem:[#allocation3 + $0x40] sm:$0xff]
    %v290 = vld [vmem:[#allocation3 + $0x48] sm:$0xff]
    %v291 = vld [vmem:[#allocation3 + $0x50] sm:$0xff]
    %v292 = vld [vmem:[#allocation3 + $0x58] sm:$0xff]
    %v293 = vld [vmem:[#allocation3 + $0x60] sm:$0xff]
    %v294 = vld [vmem:[#allocation3 + $0x68] sm:$0xff]
    %v295 = vld [vmem:[#allocation3 + $0x70] sm:$0xff]
    %v296 = vld [vmem:[#allocation3 + $0x78] sm:$0xff]
    %v297 = vld [vmem:[#allocation3 + $0x80] sm:$0xff]
    %v298 = vld [vmem:[#allocation3 + $0x88] sm:$0xff]
    %v299 = vld [vmem:[#allocation3 + $0x90] sm:$0xff]
    %v300 = vld [vmem:[#allocation3 + $0x98] sm:$0xff]
    %v301 = vld [vmem:[#allocation3 + $0xa0] sm:$0xff]
    %v302 = vld [vmem:[#allocation3 + $0xa8] sm:$0xff]
    %v303 = vld [vmem:[#allocation3 + $0xb0] sm:$0xff]
    %v304 = vld [vmem:[#allocation3 + $0xb8] sm:$0xff]
    %v305 = vld [vmem:[#allocation3 + $0xc0] sm:$0xff]
    %v306 = vld [vmem:[#allocation3 + $0xc8] sm:$0xff]
    %v307 = vld [vmem:[#allocation3 + $0xd0] sm:$0xff]
    %v308 = vld [vmem:[#allocation3 + $0xd8] sm:$0xff]
    %v309 = vld [vmem:[#allocation3 + $0xe0] sm:$0xff]
    %v310 = vld [vmem:[#allocation3 + $0xe8] sm:$0xff]
    %v311 = vld [vmem:[#allocation3 + $0xf0] sm:$0xff]
    %v312 = vld [vmem:[#allocation3 + $0xf8] sm:$0xff]
    %v313 = vld [vmem:[#allocation3 + $0x100] sm:$0xff]
    %v314 = vld [vmem:[#allocation3 + $0x108] sm:$0xff]
    %v315 = vld [vmem:[#allocation3 + $0x110] sm:$0xff]
    %v316 = vld [vmem:[#allocation3 + $0x118] sm:$0xff]
    %v317 = vld [vmem:[#allocation3 + $0x120] sm:$0xff]
    %v318 = vld [vmem:[#allocation3 + $0x128] sm:$0xff]
    %v319 = vld [vmem:[#allocation3 + $0x130] sm:$0xff]
    %v320 = vld [vmem:[#allocation3 + $0x138] sm:$0xff]
    %v321 = vld [vmem:[#allocation3 + $0x140] sm:$0xff]
    %v322 = vld [vmem:[#allocation3 + $0x148] sm:$0xff]
    %v323 = vld [vmem:[#allocation3 + $0x150] sm:$0xff]
    %v324 = vld [vmem:[#allocation3 + $0x158] sm:$0xff]
    %v325 = vld [vmem:[#allocation3 + $0x160] sm:$0xff]
    %v326 = vld [vmem:[#allocation3 + $0x168] sm:$0xff]
    %v327 = vld [vmem:[#allocation3 + $0x170] sm:$0xff]
    %v328 = vld [vmem:[#allocation3 + $0x178] sm:$0xff]
    %v329 = vld [vmem:[#allocation3 + $0x180] sm:$0xff]
    %v330 = vld [vmem:[#allocation3 + $0x188] sm:$0xff]
    %v331 = vld [vmem:[#allocation3 + $0x190] sm:$0xff]
    %v332 = vld [vmem:[#allocation3 + $0x198] sm:$0xff]
    %v333 = vld [vmem:[#allocation3 + $0x1a0] sm:$0xff]
    %v334 = vld [vmem:[#allocation3 + $0x1a8] sm:$0xff]
    %v335 = vld [vmem:[#allocation3 + $0x1b0] sm:$0xff]
    %v336 = vld [vmem:[#allocation3 + $0x1b8] sm:$0xff]
    %v337 = vld [vmem:[#allocation3 + $0x1c0] sm:$0xff]
    %v338 = vld [vmem:[#allocation3 + $0x1c8] sm:$0xff]
    %v339 = vld [vmem:[#allocation3 + $0x1d0] sm:$0xff]
    %v340 = vld [vmem:[#allocation3 + $0x1d8] sm:$0xff]
    %v341 = vld [vmem:[#allocation3 + $0x1e0] sm:$0xff]
    %v342 = vld [vmem:[#allocation3 + $0x1e8] sm:$0xff]
    %v343 = vld [vmem:[#allocation3 + $0x1f0] sm:$0xff]
    %v344 = vld [vmem:[#allocation3 + $0x1f8] sm:$0xff]
    %v345 = vld [vmem:[#allocation7] sm:$0xff]
    %v346 = vld [vmem:[#allocation7 + $0x8] sm:$0xff]
    %v347 = vld [vmem:[#allocation7 + $0x10] sm:$0xff]
    %v348 = vld [vmem:[#allocation7 + $0x18] sm:$0xff]
    %v349 = vld [vmem:[#allocation7 + $0x20] sm:$0xff]
    %v350 = vld [vmem:[#allocation7 + $0x28] sm:$0xff]
    %v351 = vld [vmem:[#allocation7 + $0x30] sm:$0xff]
    %v352 = vld [vmem:[#allocation7 + $0x38] sm:$0xff]
    %v353 = vld [vmem:[#allocation7 + $0x40] sm:$0xff]
    %v354 = vld [vmem:[#allocation7 + $0x48] sm:$0xff]
    %v355 = vld [vmem:[#allocation7 + $0x50] sm:$0xff]
    %v356 = vld [vmem:[#allocation7 + $0x58] sm:$0xff]
    %v357 = vld [vmem:[#allocation7 + $0x60] sm:$0xff]
    %v358 = vld [vmem:[#allocation7 + $0x68] sm:$0xff]
    %v359 = vld [vmem:[#allocation7 + $0x70] sm:$0xff]
    %v360 = vld [vmem:[#allocation7 + $0x78] sm:$0xff]
    %v361 = vld [vmem:[#allocation7 + $0x80] sm:$0xff]
    %v362 = vld [vmem:[#allocation7 + $0x88] sm:$0xff]
    %v363 = vld [vmem:[#allocation7 + $0x90] sm:$0xff]
    %v364 = vld [vmem:[#allocation7 + $0x98] sm:$0xff]
    %v365 = vld [vmem:[#allocation7 + $0xa0] sm:$0xff]
    %v366 = vld [vmem:[#allocation7 + $0xa8] sm:$0xff]
    %v367 = vld [vmem:[#allocation7 + $0xb0] sm:$0xff]
    %v368 = vld [vmem:[#allocation7 + $0xb8] sm:$0xff]
    %v369 = vld [vmem:[#allocation7 + $0xc0] sm:$0xff]
    %v370 = vld [vmem:[#allocation7 + $0xc8] sm:$0xff]
    %v371 = vld [vmem:[#allocation7 + $0xd0] sm:$0xff]
    %v372 = vld [vmem:[#allocation7 + $0xd8] sm:$0xff]
    %v373 = vld [vmem:[#allocation7 + $0xe0] sm:$0xff]
    %v374 = vld [vmem:[#allocation7 + $0xe8] sm:$0xff]
    %v375 = vld [vmem:[#allocation7 + $0xf0] sm:$0xff]
    %v376 = vld [vmem:[#allocation7 + $0xf8] sm:$0xff]
    %v377 = vld [vmem:[#allocation7 + $0x100] sm:$0xff]
    %v378 = vld [vmem:[#allocation7 + $0x108] sm:$0xff]
    %v379 = vld [vmem:[#allocation7 + $0x110] sm:$0xff]
    %v380 = vld [vmem:[#allocation7 + $0x118] sm:$0xff]
    %v381 = vld [vmem:[#allocation7 + $0x120] sm:$0xff]
    %v382 = vld [vmem:[#allocation7 + $0x128] sm:$0xff]
    %v383 = vld [vmem:[#allocation7 + $0x130] sm:$0xff]
    %v384 = vld [vmem:[#allocation7 + $0x138] sm:$0xff]
    %v385 = vld [vmem:[#allocation7 + $0x140] sm:$0xff]
    %v386 = vld [vmem:[#allocation7 + $0x148] sm:$0xff]
    %v387 = vld [vmem:[#allocation7 + $0x150] sm:$0xff]
    %v388 = vld [vmem:[#allocation7 + $0x158] sm:$0xff]
    %v389 = vld [vmem:[#allocation7 + $0x160] sm:$0xff]
    %v390 = vld [vmem:[#allocation7 + $0x168] sm:$0xff]
    %v391 = vld [vmem:[#allocation7 + $0x170] sm:$0xff]
    %v392 = vld [vmem:[#allocation7 + $0x178] sm:$0xff]
    %v393 = vld [vmem:[#allocation7 + $0x180] sm:$0xff]
    %v394 = vld [vmem:[#allocation7 + $0x188] sm:$0xff]
    %v395 = vld [vmem:[#allocation7 + $0x190] sm:$0xff]
    %v396 = vld [vmem:[#allocation7 + $0x198] sm:$0xff]
    %v397 = vld [vmem:[#allocation7 + $0x1a0] sm:$0xff]
    %v398 = vld [vmem:[#allocation7 + $0x1a8] sm:$0xff]
    %v399 = vld [vmem:[#allocation7 + $0x1b0] sm:$0xff]
    %v400 = vld [vmem:[#allocation7 + $0x1b8] sm:$0xff]
    %v401 = vld [vmem:[#allocation7 + $0x1c0] sm:$0xff]
    %v402 = vld [vmem:[#allocation7 + $0x1c8] sm:$0xff]
    %v403 = vld [vmem:[#allocation7 + $0x1d0] sm:$0xff]
    %v404 = vld [vmem:[#allocation7 + $0x1d8] sm:$0xff]
    %v405 = vld [vmem:[#allocation7 + $0x1e0] sm:$0xff]
    %v406 = vld [vmem:[#allocation7 + $0x1e8] sm:$0xff]
    %v407 = vld [vmem:[#allocation7 + $0x1f0] sm:$0xff]
    %v408 = vld [vmem:[#allocation7 + $0x1f8] sm:$0xff]
    %v409 = vld [vmem:[#allocation5] sm:$0xff]
    %v410 = vld [vmem:[#allocation5 + $0x8] sm:$0xff]
    %v411 = vld [vmem:[#allocation5 + $0x10] sm:$0xff]
    %v412 = vld [vmem:[#allocation5 + $0x18] sm:$0xff]
    %v413 = vld [vmem:[#allocation5 + $0x20] sm:$0xff]
    %v414 = vld [vmem:[#allocation5 + $0x28] sm:$0xff]
    %v415 = vld [vmem:[#allocation5 + $0x30] sm:$0xff]
    %v416 = vld [vmem:[#allocation5 + $0x38] sm:$0xff]
    %v417 = vld [vmem:[#allocation5 + $0x40] sm:$0xff]
    %v418 = vld [vmem:[#allocation5 + $0x48] sm:$0xff]
    %v419 = vld [vmem:[#allocation5 + $0x50] sm:$0xff]
    %v420 = vld [vmem:[#allocation5 + $0x58] sm:$0xff]
    %v421 = vld [vmem:[#allocation5 + $0x60] sm:$0xff]
    %v422 = vld [vmem:[#allocation5 + $0x68] sm:$0xff]
    %v423 = vld [vmem:[#allocation5 + $0x70] sm:$0xff]
    %v424 = vld [vmem:[#allocation5 + $0x78] sm:$0xff]
    %v425 = vld [vmem:[#allocation5 + $0x80] sm:$0xff]
    %v426 = vld [vmem:[#allocation5 + $0x88] sm:$0xff]
    %v427 = vld [vmem:[#allocation5 + $0x90] sm:$0xff]
    %v428 = vld [vmem:[#allocation5 + $0x98] sm:$0xff]
    %v429 = vld [vmem:[#allocation5 + $0xa0] sm:$0xff]
    %v430 = vld [vmem:[#allocation5 + $0xa8] sm:$0xff]
    %v431 = vld [vmem:[#allocation5 + $0xb0] sm:$0xff]
    %v432 = vld [vmem:[#allocation5 + $0xb8] sm:$0xff]
    %v433 = vld [vmem:[#allocation5 + $0xc0] sm:$0xff]
    %v434 = vld [vmem:[#allocation5 + $0xc8] sm:$0xff]
    %v435 = vld [vmem:[#allocation5 + $0xd0] sm:$0xff]
    %v436 = vld [vmem:[#allocation5 + $0xd8] sm:$0xff]
    %v437 = vld [vmem:[#allocation5 + $0xe0] sm:$0xff]
    %v438 = vld [vmem:[#allocation5 + $0xe8] sm:$0xff]
    %v439 = vld [vmem:[#allocation5 + $0xf0] sm:$0xff]
    %v440 = vld [vmem:[#allocation5 + $0xf8] sm:$0xff]
    %v441 = vld [vmem:[#allocation5 + $0x100] sm:$0xff]
    %v442 = vld [vmem:[#allocation5 + $0x108] sm:$0xff]
    %v443 = vld [vmem:[#allocation5 + $0x110] sm:$0xff]
    %v444 = vld [vmem:[#allocation5 + $0x118] sm:$0xff]
    %v445 = vld [vmem:[#allocation5 + $0x120] sm:$0xff]
    %v446 = vld [vmem:[#allocation5 + $0x128] sm:$0xff]
    %v447 = vld [vmem:[#allocation5 + $0x130] sm:$0xff]
    %v448 = vld [vmem:[#allocation5 + $0x138] sm:$0xff]
    %v449 = vld [vmem:[#allocation5 + $0x140] sm:$0xff]
    %v450 = vld [vmem:[#allocation5 + $0x148] sm:$0xff]
    %v451 = vld [vmem:[#allocation5 + $0x150] sm:$0xff]
    %v452 = vld [vmem:[#allocation5 + $0x158] sm:$0xff]
    %v453 = vld [vmem:[#allocation5 + $0x160] sm:$0xff]
    %v454 = vld [vmem:[#allocation5 + $0x168] sm:$0xff]
    %v455 = vld [vmem:[#allocation5 + $0x170] sm:$0xff]
    %v456 = vld [vmem:[#allocation5 + $0x178] sm:$0xff]
    %v457 = vld [vmem:[#allocation5 + $0x180] sm:$0xff]
    %v458 = vld [vmem:[#allocation5 + $0x188] sm:$0xff]
    %v459 = vld [vmem:[#allocation5 + $0x190] sm:$0xff]
    %v460 = vld [vmem:[#allocation5 + $0x198] sm:$0xff]
    %v461 = vld [vmem:[#allocation5 + $0x1a0] sm:$0xff]
    %v462 = vld [vmem:[#allocation5 + $0x1a8] sm:$0xff]
    %v463 = vld [vmem:[#allocation5 + $0x1b0] sm:$0xff]
    %v464 = vld [vmem:[#allocation5 + $0x1b8] sm:$0xff]
    %v465 = vld [vmem:[#allocation5 + $0x1c0] sm:$0xff]
    %v466 = vld [vmem:[#allocation5 + $0x1c8] sm:$0xff]
    %v467 = vld [vmem:[#allocation5 + $0x1d0] sm:$0xff]
    %v468 = vld [vmem:[#allocation5 + $0x1d8] sm:$0xff]
    %v469 = vld [vmem:[#allocation5 + $0x1e0] sm:$0xff]
    %v470 = vld [vmem:[#allocation5 + $0x1e8] sm:$0xff]
    %v471 = vld [vmem:[#allocation5 + $0x1f0] sm:$0xff]
    %v472 = vld [vmem:[#allocation5 + $0x1f8] sm:$0xff]
    %v473 = vld [vmem:[%s6] sm:$0xf]
    %474 = vmatprep.subr.mxu0 %v342
    %475 = vmatpush1.msra.mxu0 %v341
    %476 = vmatprep.subr.mxu0 %v338
    %477 = vmatpush1.msra.mxu0 %v337
    %478 = vmatprep.subr.mxu0 %v334
    %479 = vmatpush1.msra.mxu0 %v333
    %480 = vmatprep.subr.mxu0 %v330
    %481 = vmatpush1.msra.mxu0 %v329
    %482 = vmatprep.subr.mxu0 %v326
    %483 = vmatpush1.msra.mxu0 %v325
    %484 = vmatprep.subr.mxu0 %v322
    %485 = vmatpush1.msra.mxu0 %v321
    %486 = vmatprep.subr.mxu0 %v318
    %487 = vmatpush1.msra.mxu0 %v317
    %488 = vmatprep.subr.mxu0 %v314
    %489 = vmatpush1.msra.mxu0 %v313
    %490 = vmatprep.subr.mxu0 %v310
    %491 = vmatpush1.msra.mxu0 %v309
    %492 = vmatprep.subr.mxu0 %v306
    %493 = vmatpush1.msra.mxu0 %v305
    %494 = vmatprep.subr.mxu0 %v302
    %495 = vmatpush1.msra.mxu0 %v301
    %496 = vmatprep.subr.mxu0 %v298
    %497 = vmatpush1.msra.mxu0 %v297
    %498 = vmatprep.subr.mxu0 %v294
    %499 = vmatpush1.msra.mxu0 %v293
    %500 = vmatprep.subr.mxu0 %v290
    %501 = vmatpush1.msra.mxu0 %v289
    %502 = vmatprep.subr.mxu0 %v286
    %503 = vmatpush1.msra.mxu0 %v285
    %504 = vmatprep.subr.mxu0 %v282
    %505 = vmatpush1.msra.mxu0 %v281
    %506 = vmatprep.subr.mxu0 0.0
    %507 = vmatpush2.msra.mxu0 0.0
    %508 = vmatprep.subr.mxu0 0.0
    %509 = vmatpush2.msra.mxu0 0.0
    %510 = vmatprep.subr.mxu0 0.0
    %511 = vmatpush2.msra.mxu0 0.0
    %512 = vmatprep.subr.mxu0 0.0
    %513 = vmatpush2.msra.mxu0 0.0
    %514 = vmatprep.subr.mxu0 0.0
    %515 = vmatpush2.msra.mxu0 0.0
    %516 = vmatprep.subr.mxu0 0.0
    %517 = vmatpush2.msra.mxu0 0.0
    %518 = vmatprep.subr.mxu0 0.0
    %519 = vmatpush2.msra.mxu0 0.0
    %520 = vmatprep.subr.mxu0 0.0
    %521 = vmatpush2.msra.mxu0 0.0
    %522 = vmatprep.subr.mxu0 0.0
    %523 = vmatpush2.msra.mxu0 0.0
    %524 = vmatprep.subr.mxu0 0.0
    %525 = vmatpush2.msra.mxu0 0.0
    %526 = vmatprep.subr.mxu0 0.0
    %527 = vmatpush2.msra.mxu0 0.0
    %528 = vmatprep.subr.mxu0 0.0
    %529 = vmatpush2.msra.mxu0 0.0
    %530 = vmatprep.subr.mxu0 0.0
    %531 = vmatpush2.msra.mxu0 0.0
    %532 = vmatprep.subr.mxu0 0.0
    %533 = vmatpush2.msra.mxu0 0.0
    %534 = vmatprep.subr.mxu0 0.0
    %535 = vmatpush2.msra.mxu0 0.0
    %536 = vmatprep.subr.mxu0 0.0
    %537 = vmatpush2.msra.mxu0 0.0
    %538 = vmatprep.mubr.f32.mxu0 0.0
    %539 = vmatmul.mubr.f32.gmra.mxu0 0.0
    %v540 = vpop.f32.mrf.mxu0
    %v541 = vadd.f32 0.0, %v540
    %v542 = vpop.f32.mrf.mxu0
    %v543 = vadd.f32 0.0, %v542
    %544 = vdwg.mxu0
    %545 = vmatprep.subr.mxu0 %v344
    %546 = vmatpush1.msra.mxu0 %v343
    %547 = vmatprep.subr.mxu0 %v340
    %548 = vmatpush1.msra.mxu0 %v339
    %549 = vmatprep.subr.mxu0 %v336
    %550 = vmatpush1.msra.mxu0 %v335
    %551 = vmatprep.subr.mxu0 %v332
    %552 = vmatpush1.msra.mxu0 %v331
    %553 = vmatprep.subr.mxu0 %v328
    %554 = vmatpush1.msra.mxu0 %v327
    %555 = vmatprep.subr.mxu0 %v324
    %556 = vmatpush1.msra.mxu0 %v323
    %557 = vmatprep.subr.mxu0 %v320
    %558 = vmatpush1.msra.mxu0 %v319
    %559 = vmatprep.subr.mxu0 %v316
    %560 = vmatpush1.msra.mxu0 %v315
    %561 = vmatprep.subr.mxu0 %v312
    %562 = vmatpush1.msra.mxu0 %v311
    %563 = vmatprep.subr.mxu0 %v308
    %564 = vmatpush1.msra.mxu0 %v307
    %565 = vmatprep.subr.mxu0 %v304
    %566 = vmatpush1.msra.mxu0 %v303
    %567 = vmatprep.subr.mxu0 %v300
    %568 = vmatpush1.msra.mxu0 %v299
    %569 = vmatprep.subr.mxu0 %v296
    %570 = vmatpush1.msra.mxu0 %v295
    %571 = vmatprep.subr.mxu0 %v292
    %572 = vmatpush1.msra.mxu0 %v291
    %573 = vmatprep.subr.mxu0 %v288
    %574 = vmatpush1.msra.mxu0 %v287
    %575 = vmatprep.subr.mxu0 %v284
    %576 = vmatpush1.msra.mxu0 %v283
    %577 = vmatprep.subr.mxu0 0.0
    %578 = vmatpush2.msra.mxu0 0.0
    %579 = vmatprep.subr.mxu0 0.0
    %580 = vmatpush2.msra.mxu0 0.0
    %581 = vmatprep.subr.mxu0 0.0
    %582 = vmatpush2.msra.mxu0 0.0
    %583 = vmatprep.subr.mxu0 0.0
    %584 = vmatpush2.msra.mxu0 0.0
    %585 = vmatprep.subr.mxu0 0.0
    %586 = vmatpush2.msra.mxu0 0.0
    %587 = vmatprep.subr.mxu0 0.0
    %588 = vmatpush2.msra.mxu0 0.0
    %589 = vmatprep.subr.mxu0 0.0
    %590 = vmatpush2.msra.mxu0 0.0
    %591 = vmatprep.subr.mxu0 0.0
    %592 = vmatpush2.msra.mxu0 0.0
    %593 = vmatprep.subr.mxu0 0.0
    %594 = vmatpush2.msra.mxu0 0.0
    %595 = vmatprep.subr.mxu0 0.0
    %596 = vmatpush2.msra.mxu0 0.0
    %597 = vmatprep.subr.mxu0 0.0
    %598 = vmatpush2.msra.mxu0 0.0
    %599 = vmatprep.subr.mxu0 0.0
    %600 = vmatpush2.msra.mxu0 0.0
    %601 = vmatprep.subr.mxu0 0.0
    %602 = vmatpush2.msra.mxu0 0.0
    %603 = vmatprep.subr.mxu0 0.0
    %604 = vmatpush2.msra.mxu0 0.0
    %605 = vmatprep.subr.mxu0 0.0
    %606 = vmatpush2.msra.mxu0 0.0
    %607 = vmatprep.subr.mxu0 0.0
    %608 = vmatpush2.msra.mxu0 0.0
    %609 = vmatprep.mubr.f32.mxu0 0.0
    %610 = vmatmul.mubr.f32.gmra.mxu0 0.0
    %v611 = vpop.f32.mrf.mxu0
    %v612 = vadd.f32 0.0, %v611
    %v613 = vpop.f32.mrf.mxu0
    %v614 = vadd.f32 0.0, %v613
    %615 = vdwg.mxu0
    %v616 = vadd.f32 %v194, %v541
    %v617 = vadd.f32 %v196, %v543
    %v618 = vadd.f32 %v271, %v612
    %v619 = vadd.f32 %v273, %v614
    %v620 = vxor.u32 %v616, 2147483648
    %v621 = vxor.u32 %v617, 2147483648
    %v622 = vxor.u32 %v618, 2147483648
    %v623 = vmul.f32 %v620, 1.442695
    %v624 = vpow.pop %v623
    %v625 = vmul.f32 %v621, 1.442695
    %v626 = vpow.pop %v625
    %v627 = vmul.f32 %v622, 1.442695
    %v628 = vpow.pop %v627
    %v629 = vadd.f32 %v624, 1.0
    %v630 = vadd.f32 %v626, 1.0
    %v631 = vadd.f32 %v628, 1.0
    %v632 = vrcp.pop %v629
    %v633 = vmul.f32 1.0, %v632
    %v634 = vrcp.pop %v630
    %v635 = vmul.f32 1.0, %v634
    %v636 = vrcp.pop %v631
    %v637 = vmul.f32 1.0, %v636
    %v638 = vtanh.pop %v619
    %v639 = vmul.f32 %v635, 0.0
    %v640 = vmul.f32 %v633, %v638
    %v641 = vadd.f32 %v639, %v640
    %v642 = vtanh.pop %v641
    %v643 = vmul.f32 %v637, %v642
    %644 = vmatprep.subr.mxu0 %v342
    %645 = vmatpush1.msra.mxu0 %v341
    %646 = vmatprep.subr.mxu0 %v338
    %647 = vmatpush1.msra.mxu0 %v337
    %648 = vmatprep.subr.mxu0 %v334
    %649 = vmatpush1.msra.mxu0 %v333
    %650 = vmatprep.subr.mxu0 %v330
    %651 = vmatpush1.msra.mxu0 %v329
    %652 = vmatprep.subr.mxu0 %v326
    %653 = vmatpush1.msra.mxu0 %v325
    %654 = vmatprep.subr.mxu0 %v322
    %655 = vmatpush1.msra.mxu0 %v321
    %656 = vmatprep.subr.mxu0 %v318
    %657 = vmatpush1.msra.mxu0 %v317
    %658 = vmatprep.subr.mxu0 %v314
    %659 = vmatpush1.msra.mxu0 %v313
    %660 = vmatprep.subr.mxu0 %v310
    %661 = vmatpush1.msra.mxu0 %v309
    %662 = vmatprep.subr.mxu0 %v306
    %663 = vmatpush1.msra.mxu0 %v305
    %664 = vmatprep.subr.mxu0 %v302
    %665 = vmatpush1.msra.mxu0 %v301
    %666 = vmatprep.subr.mxu0 %v298
    %667 = vmatpush1.msra.mxu0 %v297
    %668 = vmatprep.subr.mxu0 %v294
    %669 = vmatpush1.msra.mxu0 %v293
    %670 = vmatprep.subr.mxu0 %v290
    %671 = vmatpush1.msra.mxu0 %v289
    %672 = vmatprep.subr.mxu0 %v286
    %673 = vmatpush1.msra.mxu0 %v285
    %674 = vmatprep.subr.mxu0 %v282
    %675 = vmatpush1.msra.mxu0 %v281
    %676 = vmatprep.subr.mxu0 0.0
    %677 = vmatpush2.msra.mxu0 0.0
    %678 = vmatprep.subr.mxu0 0.0
    %679 = vmatpush2.msra.mxu0 0.0
    %680 = vmatprep.subr.mxu0 0.0
    %681 = vmatpush2.msra.mxu0 0.0
    %682 = vmatprep.subr.mxu0 0.0
    %683 = vmatpush2.msra.mxu0 0.0
    %684 = vmatprep.subr.mxu0 0.0
    %685 = vmatpush2.msra.mxu0 0.0
    %686 = vmatprep.subr.mxu0 0.0
    %687 = vmatpush2.msra.mxu0 0.0
    %688 = vmatprep.subr.mxu0 0.0
    %689 = vmatpush2.msra.mxu0 0.0
    %690 = vmatprep.subr.mxu0 0.0
    %691 = vmatpush2.msra.mxu0 0.0
    %692 = vmatprep.subr.mxu0 0.0
    %693 = vmatpush2.msra.mxu0 0.0
    %694 = vmatprep.subr.mxu0 0.0
    %695 = vmatpush2.msra.mxu0 0.0
    %696 = vmatprep.subr.mxu0 0.0
    %697 = vmatpush2.msra.mxu0 0.0
    %698 = vmatprep.subr.mxu0 0.0
    %699 = vmatpush2.msra.mxu0 0.0
    %700 = vmatprep.subr.mxu0 0.0
    %701 = vmatpush2.msra.mxu0 0.0
    %702 = vmatprep.subr.mxu0 0.0
    %703 = vmatpush2.msra.mxu0 0.0
    %704 = vmatprep.subr.mxu0 0.0
    %705 = vmatpush2.msra.mxu0 0.0
    %706 = vmatprep.subr.mxu0 0.0
    %707 = vmatpush2.msra.mxu0 0.0
    %708 = vmatprep.mubr.f32.mxu0 0.0
    %709 = vmatmul.mubr.f32.gmra.mxu0 %v643
    %v710 = vpop.f32.mrf.mxu0
    %v711 = vadd.f32 0.0, %v710
    %v712 = vpop.f32.mrf.mxu0
    %v713 = vadd.f32 0.0, %v712
    %714 = vdwg.mxu0
    %715 = vmatprep.subr.mxu0 %v344
    %716 = vmatpush1.msra.mxu0 %v343
    %717 = vmatprep.subr.mxu0 %v340
    %718 = vmatpush1.msra.mxu0 %v339
    %719 = vmatprep.subr.mxu0 %v336
    %720 = vmatpush1.msra.mxu0 %v335
    %721 = vmatprep.subr.mxu0 %v332
    %722 = vmatpush1.msra.mxu0 %v331
    %723 = vmatprep.subr.mxu0 %v328
    %724 = vmatpush1.msra.mxu0 %v327
    %725 = vmatprep.subr.mxu0 %v324
    %726 = vmatpush1.msra.mxu0 %v323
    %727 = vmatprep.subr.mxu0 %v320
    %728 = vmatpush1.msra.mxu0 %v319
    %729 = vmatprep.subr.mxu0 %v316
    %730 = vmatpush1.msra.mxu0 %v315
    %731 = vmatprep.subr.mxu0 %v312
    %732 = vmatpush1.msra.mxu0 %v311
    %733 = vmatprep.subr.mxu0 %v308
    %734 = vmatpush1.msra.mxu0 %v307
    %735 = vmatprep.subr.mxu0 %v304
    %736 = vmatpush1.msra.mxu0 %v303
    %737 = vmatprep.subr.mxu0 %v300
    %738 = vmatpush1.msra.mxu0 %v299
    %739 = vmatprep.subr.mxu0 %v296
    %740 = vmatpush1.msra.mxu0 %v295
    %741 = vmatprep.subr.mxu0 %v292
    %742 = vmatpush1.msra.mxu0 %v291
    %743 = vmatprep.subr.mxu0 %v288
    %744 = vmatpush1.msra.mxu0 %v287
    %745 = vmatprep.subr.mxu0 %v284
    %746 = vmatpush1.msra.mxu0 %v283
    %747 = vmatprep.subr.mxu0 0.0
    %748 = vmatpush2.msra.mxu0 0.0
    %749 = vmatprep.subr.mxu0 0.0
    %750 = vmatpush2.msra.mxu0 0.0
    %751 = vmatprep.subr.mxu0 0.0
    %752 = vmatpush2.msra.mxu0 0.0
    %753 = vmatprep.subr.mxu0 0.0
    %754 = vmatpush2.msra.mxu0 0.0
    %755 = vmatprep.subr.mxu0 0.0
    %756 = vmatpush2.msra.mxu0 0.0
    %757 = vmatprep.subr.mxu0 0.0
    %758 = vmatpush2.msra.mxu0 0.0
    %759 = vmatprep.subr.mxu0 0.0
    %760 = vmatpush2.msra.mxu0 0.0
    %761 = vmatprep.subr.mxu0 0.0
    %762 = vmatpush2.msra.mxu0 0.0
    %763 = vmatprep.subr.mxu0 0.0
    %764 = vmatpush2.msra.mxu0 0.0
    %765 = vmatprep.subr.mxu0 0.0
    %766 = vmatpush2.msra.mxu0 0.0
    %767 = vmatprep.subr.mxu0 0.0
    %768 = vmatpush2.msra.mxu0 0.0
    %769 = vmatprep.subr.mxu0 0.0
    %770 = vmatpush2.msra.mxu0 0.0
    %771 = vmatprep.subr.mxu0 0.0
    %772 = vmatpush2.msra.mxu0 0.0
    %773 = vmatprep.subr.mxu0 0.0
    %774 = vmatpush2.msra.mxu0 0.0
    %775 = vmatprep.subr.mxu0 0.0
    %776 = vmatpush2.msra.mxu0 0.0
    %777 = vmatprep.subr.mxu0 0.0
    %778 = vmatpush2.msra.mxu0 0.0
    %779 = vmatprep.mubr.f32.mxu0 0.0
    %780 = vmatmul.mubr.f32.gmra.mxu0 %v643
    %v781 = vpop.f32.mrf.mxu0
    %v782 = vadd.f32 0.0, %v781
    %v783 = vpop.f32.mrf.mxu0
    %v784 = vadd.f32 0.0, %v783
    %785 = vdwg.mxu0
    %v790 = vrot.slane %v711, 6
    %v791 = vrot.slane %v713, 6
    %v792 = vrot.slane %v782, 6
    %v793 = vrot.slane %v784, 6
    %v798 = vadd.f32 %v194, %v790
    %v799 = vadd.f32 %v196, %v791
    %v800 = vadd.f32 %v271, %v792
    %v801 = vadd.f32 %v273, %v793
    %v802 = vxor.u32 %v798, 2147483648
    %v803 = vxor.u32 %v799, 2147483648
    %v804 = vxor.u32 %v800, 2147483648
    %v805 = vmul.f32 %v802, 1.442695
    %v806 = vpow.pop %v805
    %v807 = vmul.f32 %v803, 1.442695
    %v808 = vpow.pop %v807
    %v809 = vmul.f32 %v804, 1.442695
    %v810 = vpow.pop %v809
    %v811 = vadd.f32 %v806, 1.0
    %v812 = vadd.f32 %v808, 1.0
    %v813 = vadd.f32 %v810, 1.0
    %v814 = vrcp.pop %v811
    %v815 = vmul.f32 1.0, %v814
    %v816 = vrcp.pop %v812
    %v817 = vmul.f32 1.0, %v816
    %v818 = vrcp.pop %v813
    %v819 = vmul.f32 1.0, %v818
    %v820 = vtanh.pop %v801
    %v822 = vrot.slane %v641, 6
    %v824 = vmul.f32 %v817, %v822
    %v825 = vmul.f32 %v815, %v820
    %v826 = vadd.f32 %v824, %v825
    %v827 = vtanh.pop %v826
    %v828 = vmul.f32 %v819, %v827
    %v830 = vlaneseq
    %v831 = vshrl.u32 %v830, 7
    %v832 = vsub.s32 0, %v831
    %v833 = vrot.slane %v473, %v832
    %v834 = vlaneseq
    %v835 = vshrl.u32 %v834, 7
    %v836 = vsub.s32 1, %v835
    %v837 = vrot.slane %v473, %v836
    %v838 = vlaneseq
    %v839 = vshrl.u32 %v838, 7
    %v840 = vsub.s32 2, %v839
    %v841 = vrot.slane %v473, %v840
    %v842 = vlaneseq
    %v843 = vshrl.u32 %v842, 7
    %v844 = vsub.s32 3, %v843
    %v845 = vrot.slane %v473, %v844
    %850 = vmatprep.subr.mxu0 %v470
    %851 = vmatpush1.msra.mxu0 %v469
    %852 = vmatprep.subr.mxu0 %v466
    %853 = vmatpush1.msra.mxu0 %v465
    %854 = vmatprep.subr.mxu0 %v462
    %855 = vmatpush1.msra.mxu0 %v461
    %856 = vmatprep.subr.mxu0 %v458
    %857 = vmatpush1.msra.mxu0 %v457
    %858 = vmatprep.subr.mxu0 %v454
    %859 = vmatpush1.msra.mxu0 %v453
    %860 = vmatprep.subr.mxu0 %v450
    %861 = vmatpush1.msra.mxu0 %v449
    %862 = vmatprep.subr.mxu0 %v446
    %863 = vmatpush1.msra.mxu0 %v445
    %864 = vmatprep.subr.mxu0 %v442
    %865 = vmatpush1.msra.mxu0 %v441
    %866 = vmatprep.subr.mxu0 %v438
    %867 = vmatpush1.msra.mxu0 %v437
    %868 = vmatprep.subr.mxu0 %v434
    %869 = vmatpush1.msra.mxu0 %v433
    %870 = vmatprep.subr.mxu0 %v430
    %871 = vmatpush1.msra.mxu0 %v429
    %872 = vmatprep.subr.mxu0 %v426
    %873 = vmatpush1.msra.mxu0 %v425
    %874 = vmatprep.subr.mxu0 %v422
    %875 = vmatpush1.msra.mxu0 %v421
    %876 = vmatprep.subr.mxu0 %v418
    %877 = vmatpush1.msra.mxu0 %v417
    %878 = vmatprep.subr.mxu0 %v414
    %879 = vmatpush1.msra.mxu0 %v413
    %880 = vmatprep.subr.mxu0 %v410
    %881 = vmatpush1.msra.mxu0 %v409
    %882 = vmatprep.subr.mxu0 0.0
    %883 = vmatpush2.msra.mxu0 0.0
    %884 = vmatprep.subr.mxu0 0.0
    %885 = vmatpush2.msra.mxu0 0.0
    %886 = vmatprep.subr.mxu0 0.0
    %887 = vmatpush2.msra.mxu0 0.0
    %888 = vmatprep.subr.mxu0 0.0
    %889 = vmatpush2.msra.mxu0 0.0
    %890 = vmatprep.subr.mxu0 0.0
    %891 = vmatpush2.msra.mxu0 0.0
    %892 = vmatprep.subr.mxu0 0.0
    %893 = vmatpush2.msra.mxu0 0.0
    %894 = vmatprep.subr.mxu0 0.0
    %895 = vmatpush2.msra.mxu0 0.0
    %896 = vmatprep.subr.mxu0 0.0
    %897 = vmatpush2.msra.mxu0 0.0
    %898 = vmatprep.subr.mxu0 0.0
    %899 = vmatpush2.msra.mxu0 0.0
    %900 = vmatprep.subr.mxu0 0.0
    %901 = vmatpush2.msra.mxu0 0.0
    %902 = vmatprep.subr.mxu0 0.0
    %903 = vmatpush2.msra.mxu0 0.0
    %904 = vmatprep.subr.mxu0 0.0
    %905 = vmatpush2.msra.mxu0 0.0
    %906 = vmatprep.subr.mxu0 0.0
    %907 = vmatpush2.msra.mxu0 0.0
    %908 = vmatprep.subr.mxu0 0.0
    %909 = vmatpush2.msra.mxu0 0.0
    %910 = vmatprep.subr.mxu0 0.0
    %911 = vmatpush2.msra.mxu0 0.0
    %912 = vmatprep.subr.mxu0 0.0
    %913 = vmatpush2.msra.mxu0 0.0
    %914 = vmatprep.mubr.f32.mxu0 0.0
    %915 = vmatmul.mubr.f32.gmra.mxu0 %v643
    %v916 = vpop.f32.mrf.mxu0
    %v917 = vadd.f32 %v833, %v916
    %v918 = vpop.f32.mrf.mxu0
    %v919 = vadd.f32 %v837, %v918
    %920 = vdwg.mxu0
    %921 = vmatprep.subr.mxu0 %v472
    %922 = vmatpush1.msra.mxu0 %v471
    %923 = vmatprep.subr.mxu0 %v468
    %924 = vmatpush1.msra.mxu0 %v467
    %925 = vmatprep.subr.mxu0 %v464
    %926 = vmatpush1.msra.mxu0 %v463
    %927 = vmatprep.subr.mxu0 %v460
    %928 = vmatpush1.msra.mxu0 %v459
    %929 = vmatprep.subr.mxu0 %v456
    %930 = vmatpush1.msra.mxu0 %v455
    %931 = vmatprep.subr.mxu0 %v452
    %932 = vmatpush1.msra.mxu0 %v451
    %933 = vmatprep.subr.mxu0 %v448
    %934 = vmatpush1.msra.mxu0 %v447
    %935 = vmatprep.subr.mxu0 %v444
    %936 = vmatpush1.msra.mxu0 %v443
    %937 = vmatprep.subr.mxu0 %v440
    %938 = vmatpush1.msra.mxu0 %v439
    %939 = vmatprep.subr.mxu0 %v436
    %940 = vmatpush1.msra.mxu0 %v435
    %941 = vmatprep.subr.mxu0 %v432
    %942 = vmatpush1.msra.mxu0 %v431
    %943 = vmatprep.subr.mxu0 %v428
    %944 = vmatpush1.msra.mxu0 %v427
    %945 = vmatprep.subr.mxu0 %v424
    %946 = vmatpush1.msra.mxu0 %v423
    %947 = vmatprep.subr.mxu0 %v420
    %948 = vmatpush1.msra.mxu0 %v419
    %949 = vmatprep.subr.mxu0 %v416
    %950 = vmatpush1.msra.mxu0 %v415
    %951 = vmatprep.subr.mxu0 %v412
    %952 = vmatpush1.msra.mxu0 %v411
    %953 = vmatprep.subr.mxu0 0.0
    %954 = vmatpush2.msra.mxu0 0.0
    %955 = vmatprep.subr.mxu0 0.0
    %956 = vmatpush2.msra.mxu0 0.0
    %957 = vmatprep.subr.mxu0 0.0
    %958 = vmatpush2.msra.mxu0 0.0
    %959 = vmatprep.subr.mxu0 0.0
    %960 = vmatpush2.msra.mxu0 0.0
    %961 = vmatprep.subr.mxu0 0.0
    %962 = vmatpush2.msra.mxu0 0.0
    %963 = vmatprep.subr.mxu0 0.0
    %964 = vmatpush2.msra.mxu0 0.0
    %965 = vmatprep.subr.mxu0 0.0
    %966 = vmatpush2.msra.mxu0 0.0
    %967 = vmatprep.subr.mxu0 0.0
    %968 = vmatpush2.msra.mxu0 0.0
    %969 = vmatprep.subr.mxu0 0.0
    %970 = vmatpush2.msra.mxu0 0.0
    %971 = vmatprep.subr.mxu0 0.0
    %972 = vmatpush2.msra.mxu0 0.0
    %973 = vmatprep.subr.mxu0 0.0
    %974 = vmatpush2.msra.mxu0 0.0
    %975 = vmatprep.subr.mxu0 0.0
    %976 = vmatpush2.msra.mxu0 0.0
    %977 = vmatprep.subr.mxu0 0.0
    %978 = vmatpush2.msra.mxu0 0.0
    %979 = vmatprep.subr.mxu0 0.0
    %980 = vmatpush2.msra.mxu0 0.0
    %981 = vmatprep.subr.mxu0 0.0
    %982 = vmatpush2.msra.mxu0 0.0
    %983 = vmatprep.subr.mxu0 0.0
    %984 = vmatpush2.msra.mxu0 0.0
    %985 = vmatprep.mubr.f32.mxu0 0.0
    %986 = vmatmul.mubr.f32.gmra.mxu0 %v643
    %v987 = vpop.f32.mrf.mxu0
    %v988 = vadd.f32 %v841, %v987
    %v989 = vpop.f32.mrf.mxu0
    %v990 = vadd.f32 %v845, %v989
    %991 = vdwg.mxu0
    %992 = vmatprep.subr.mxu0 %v406
    %993 = vmatpush1.msra.mxu0 %v405
    %994 = vmatprep.subr.mxu0 %v402
    %995 = vmatpush1.msra.mxu0 %v401
    %996 = vmatprep.subr.mxu0 %v398
    %997 = vmatpush1.msra.mxu0 %v397
    %998 = vmatprep.subr.mxu0 %v394
    %999 = vmatpush1.msra.mxu0 %v393
    %1000 = vmatprep.subr.mxu0 %v390
    %1001 = vmatpush1.msra.mxu0 %v389
    %1002 = vmatprep.subr.mxu0 %v386
    %1003 = vmatpush1.msra.mxu0 %v385
    %1004 = vmatprep.subr.mxu0 %v382
    %1005 = vmatpush1.msra.mxu0 %v381
    %1006 = vmatprep.subr.mxu0 %v378
    %1007 = vmatpush1.msra.mxu0 %v377
    %1008 = vmatprep.subr.mxu0 %v374
    %1009 = vmatpush1.msra.mxu0 %v373
    %1010 = vmatprep.subr.mxu0 %v370
    %1011 = vmatpush1.msra.mxu0 %v369
    %1012 = vmatprep.subr.mxu0 %v366
    %1013 = vmatpush1.msra.mxu0 %v365
    %1014 = vmatprep.subr.mxu0 %v362
    %1015 = vmatpush1.msra.mxu0 %v361
    %1016 = vmatprep.subr.mxu0 %v358
    %1017 = vmatpush1.msra.mxu0 %v357
    %1018 = vmatprep.subr.mxu0 %v354
    %1019 = vmatpush1.msra.mxu0 %v353
    %1020 = vmatprep.subr.mxu0 %v350
    %1021 = vmatpush1.msra.mxu0 %v349
    %1022 = vmatprep.subr.mxu0 %v346
    %1023 = vmatpush1.msra.mxu0 %v345
    %1024 = vmatprep.subr.mxu0 0.0
    %1025 = vmatpush2.msra.mxu0 0.0
    %1026 = vmatprep.subr.mxu0 0.0
    %1027 = vmatpush2.msra.mxu0 0.0
    %1028 = vmatprep.subr.mxu0 0.0
    %1029 = vmatpush2.msra.mxu0 0.0
    %1030 = vmatprep.subr.mxu0 0.0
    %1031 = vmatpush2.msra.mxu0 0.0
    %1032 = vmatprep.subr.mxu0 0.0
    %1033 = vmatpush2.msra.mxu0 0.0
    %1034 = vmatprep.subr.mxu0 0.0
    %1035 = vmatpush2.msra.mxu0 0.0
    %1036 = vmatprep.subr.mxu0 0.0
    %1037 = vmatpush2.msra.mxu0 0.0
    %1038 = vmatprep.subr.mxu0 0.0
    %1039 = vmatpush2.msra.mxu0 0.0
    %1040 = vmatprep.subr.mxu0 0.0
    %1041 = vmatpush2.msra.mxu0 0.0
    %1042 = vmatprep.subr.mxu0 0.0
    %1043 = vmatpush2.msra.mxu0 0.0
    %1044 = vmatprep.subr.mxu0 0.0
    %1045 = vmatpush2.msra.mxu0 0.0
    %1046 = vmatprep.subr.mxu0 0.0
    %1047 = vmatpush2.msra.mxu0 0.0
    %1048 = vmatprep.subr.mxu0 0.0
    %1049 = vmatpush2.msra.mxu0 0.0
    %1050 = vmatprep.subr.mxu0 0.0
    %1051 = vmatpush2.msra.mxu0 0.0
    %1052 = vmatprep.subr.mxu0 0.0
    %1053 = vmatpush2.msra.mxu0 0.0
    %1054 = vmatprep.subr.mxu0 0.0
    %1055 = vmatpush2.msra.mxu0 0.0
    %1056 = vmatprep.mubr.f32.mxu0 0.0
    %1057 = vmatmul.mubr.f32.gmra.mxu0 0.0
    %v1058 = vpop.f32.mrf.mxu0
    %v1059 = vadd.f32 0.0, %v1058
    %v1060 = vpop.f32.mrf.mxu0
    %v1061 = vadd.f32 0.0, %v1060
    %1062 = vdwg.mxu0
    %1063 = vmatprep.subr.mxu0 %v408
    %1064 = vmatpush1.msra.mxu0 %v407
    %1065 = vmatprep.subr.mxu0 %v404
    %1066 = vmatpush1.msra.mxu0 %v403
    %1067 = vmatprep.subr.mxu0 %v400
    %1068 = vmatpush1.msra.mxu0 %v399
    %1069 = vmatprep.subr.mxu0 %v396
    %1070 = vmatpush1.msra.mxu0 %v395
    %1071 = vmatprep.subr.mxu0 %v392
    %1072 = vmatpush1.msra.mxu0 %v391
    %1073 = vmatprep.subr.mxu0 %v388
    %1074 = vmatpush1.msra.mxu0 %v387
    %1075 = vmatprep.subr.mxu0 %v384
    %1076 = vmatpush1.msra.mxu0 %v383
    %1077 = vmatprep.subr.mxu0 %v380
    %1078 = vmatpush1.msra.mxu0 %v379
    %1079 = vmatprep.subr.mxu0 %v376
    %1080 = vmatpush1.msra.mxu0 %v375
    %1081 = vmatprep.subr.mxu0 %v372
    %1082 = vmatpush1.msra.mxu0 %v371
    %1083 = vmatprep.subr.mxu0 %v368
    %1084 = vmatpush1.msra.mxu0 %v367
    %1085 = vmatprep.subr.mxu0 %v364
    %1086 = vmatpush1.msra.mxu0 %v363
    %1087 = vmatprep.subr.mxu0 %v360
    %1088 = vmatpush1.msra.mxu0 %v359
    %1089 = vmatprep.subr.mxu0 %v356
    %1090 = vmatpush1.msra.mxu0 %v355
    %1091 = vmatprep.subr.mxu0 %v352
    %1092 = vmatpush1.msra.mxu0 %v351
    %1093 = vmatprep.subr.mxu0 %v348
    %1094 = vmatpush1.msra.mxu0 %v347
    %1095 = vmatprep.subr.mxu0 0.0
    %1096 = vmatpush2.msra.mxu0 0.0
    %1097 = vmatprep.subr.mxu0 0.0
    %1098 = vmatpush2.msra.mxu0 0.0
    %1099 = vmatprep.subr.mxu0 0.0
    %1100 = vmatpush2.msra.mxu0 0.0
    %1101 = vmatprep.subr.mxu0 0.0
    %1102 = vmatpush2.msra.mxu0 0.0
    %1103 = vmatprep.subr.mxu0 0.0
    %1104 = vmatpush2.msra.mxu0 0.0
    %1105 = vmatprep.subr.mxu0 0.0
    %1106 = vmatpush2.msra.mxu0 0.0
    %1107 = vmatprep.subr.mxu0 0.0
    %1108 = vmatpush2.msra.mxu0 0.0
    %1109 = vmatprep.subr.mxu0 0.0
    %1110 = vmatpush2.msra.mxu0 0.0
    %1111 = vmatprep.subr.mxu0 0.0
    %1112 = vmatpush2.msra.mxu0 0.0
    %1113 = vmatprep.subr.mxu0 0.0
    %1114 = vmatpush2.msra.mxu0 0.0
    %1115 = vmatprep.subr.mxu0 0.0
    %1116 = vmatpush2.msra.mxu0 0.0
    %1117 = vmatprep.subr.mxu0 0.0
    %1118 = vmatpush2.msra.mxu0 0.0
    %1119 = vmatprep.subr.mxu0 0.0
    %1120 = vmatpush2.msra.mxu0 0.0
    %1121 = vmatprep.subr.mxu0 0.0
    %1122 = vmatpush2.msra.mxu0 0.0
    %1123 = vmatprep.subr.mxu0 0.0
    %1124 = vmatpush2.msra.mxu0 0.0
    %1125 = vmatprep.subr.mxu0 0.0
    %1126 = vmatpush2.msra.mxu0 0.0
    %1127 = vmatprep.mubr.f32.mxu0 0.0
    %1128 = vmatmul.mubr.f32.gmra.mxu0 0.0
    %v1129 = vpop.f32.mrf.mxu0
    %v1130 = vadd.f32 0.0, %v1129
    %v1131 = vpop.f32.mrf.mxu0
    %v1132 = vadd.f32 0.0, %v1131
    %1133 = vdwg.mxu0
    %v1134 = vadd.f32 %v917, %v1059
    %v1135 = vadd.f32 %v919, %v1061
    %v1136 = vadd.f32 %v988, %v1130
    %v1137 = vadd.f32 %v990, %v1132
    %v1138 = vxor.u32 %v1134, 2147483648
    %v1139 = vxor.u32 %v1135, 2147483648
    %v1140 = vxor.u32 %v1136, 2147483648
    %v1141 = vmul.f32 %v1138, 1.442695
    %v1142 = vpow.pop %v1141
    %v1143 = vmul.f32 %v1139, 1.442695
    %v1144 = vpow.pop %v1143
    %v1145 = vmul.f32 %v1140, 1.442695
    %v1146 = vpow.pop %v1145
    %v1147 = vadd.f32 %v1142, 1.0
    %v1148 = vadd.f32 %v1144, 1.0
    %v1149 = vadd.f32 %v1146, 1.0
    %v1150 = vrcp.pop %v1147
    %v1151 = vmul.f32 1.0, %v1150
    %v1152 = vrcp.pop %v1148
    %v1153 = vmul.f32 1.0, %v1152
    %v1154 = vrcp.pop %v1149
    %v1155 = vmul.f32 1.0, %v1154
    %v1156 = vtanh.pop %v1137
    %v1157 = vmul.f32 %v1153, 0.0
    %v1158 = vmul.f32 %v1151, %v1156
    %v1159 = vadd.f32 %v1157, %v1158
    %v1160 = vtanh.pop %v1159
    %v1161 = vmul.f32 %v1155, %v1160
    %v1163 = vrot.slane %v828, 2
    %1165 = vmatprep.subr.mxu0 %v342
    %1166 = vmatpush1.msra.mxu0 %v341
    %1167 = vmatprep.subr.mxu0 %v338
    %1168 = vmatpush1.msra.mxu0 %v337
    %1169 = vmatprep.subr.mxu0 %v334
    %1170 = vmatpush1.msra.mxu0 %v333
    %1171 = vmatprep.subr.mxu0 %v330
    %1172 = vmatpush1.msra.mxu0 %v329
    %1173 = vmatprep.subr.mxu0 %v326
    %1174 = vmatpush1.msra.mxu0 %v325
    %1175 = vmatprep.subr.mxu0 %v322
    %1176 = vmatpush1.msra.mxu0 %v321
    %1177 = vmatprep.subr.mxu0 %v318
    %1178 = vmatpush1.msra.mxu0 %v317
    %1179 = vmatprep.subr.mxu0 %v314
    %1180 = vmatpush1.msra.mxu0 %v313
    %1181 = vmatprep.subr.mxu0 %v310
    %1182 = vmatpush1.msra.mxu0 %v309
    %1183 = vmatprep.subr.mxu0 %v306
    %1184 = vmatpush1.msra.mxu0 %v305
    %1185 = vmatprep.subr.mxu0 %v302
    %1186 = vmatpush1.msra.mxu0 %v301
    %1187 = vmatprep.subr.mxu0 %v298
    %1188 = vmatpush1.msra.mxu0 %v297
    %1189 = vmatprep.subr.mxu0 %v294
    %1190 = vmatpush1.msra.mxu0 %v293
    %1191 = vmatprep.subr.mxu0 %v290
    %1192 = vmatpush1.msra.mxu0 %v289
    %1193 = vmatprep.subr.mxu0 %v286
    %1194 = vmatpush1.msra.mxu0 %v285
    %1195 = vmatprep.subr.mxu0 %v282
    %1196 = vmatpush1.msra.mxu0 %v281
    %1197 = vmatprep.subr.mxu0 0.0
    %1198 = vmatpush2.msra.mxu0 0.0
    %1199 = vmatprep.subr.mxu0 0.0
    %1200 = vmatpush2.msra.mxu0 0.0
    %1201 = vmatprep.subr.mxu0 0.0
    %1202 = vmatpush2.msra.mxu0 0.0
    %1203 = vmatprep.subr.mxu0 0.0
    %1204 = vmatpush2.msra.mxu0 0.0
    %1205 = vmatprep.subr.mxu0 0.0
    %1206 = vmatpush2.msra.mxu0 0.0
    %1207 = vmatprep.subr.mxu0 0.0
    %1208 = vmatpush2.msra.mxu0 0.0
    %1209 = vmatprep.subr.mxu0 0.0
    %1210 = vmatpush2.msra.mxu0 0.0
    %1211 = vmatprep.subr.mxu0 0.0
    %1212 = vmatpush2.msra.mxu0 0.0
    %1213 = vmatprep.subr.mxu0 0.0
    %1214 = vmatpush2.msra.mxu0 0.0
    %1215 = vmatprep.subr.mxu0 0.0
    %1216 = vmatpush2.msra.mxu0 0.0
    %1217 = vmatprep.subr.mxu0 0.0
    %1218 = vmatpush2.msra.mxu0 0.0
    %1219 = vmatprep.subr.mxu0 0.0
    %1220 = vmatpush2.msra.mxu0 0.0
    %1221 = vmatprep.subr.mxu0 0.0
    %1222 = vmatpush2.msra.mxu0 0.0
    %1223 = vmatprep.subr.mxu0 0.0
    %1224 = vmatpush2.msra.mxu0 0.0
    %1225 = vmatprep.subr.mxu0 0.0
    %1226 = vmatpush2.msra.mxu0 0.0
    %1227 = vmatprep.subr.mxu0 0.0
    %1228 = vmatpush2.msra.mxu0 0.0
    %1229 = vmatprep.mubr.f32.mxu0 0.0
    %1230 = vmatmul.mubr.f32.gmra.mxu0 %v1163
    %v1231 = vpop.f32.mrf.mxu0
    %v1232 = vadd.f32 0.0, %v1231
    %v1233 = vpop.f32.mrf.mxu0
    %v1234 = vadd.f32 0.0, %v1233
    %1235 = vdwg.mxu0
    %1236 = vmatprep.subr.mxu0 %v344
    %1237 = vmatpush1.msra.mxu0 %v343
    %1238 = vmatprep.subr.mxu0 %v340
    %1239 = vmatpush1.msra.mxu0 %v339
    %1240 = vmatprep.subr.mxu0 %v336
    %1241 = vmatpush1.msra.mxu0 %v335
    %1242 = vmatprep.subr.mxu0 %v332
    %1243 = vmatpush1.msra.mxu0 %v331
    %1244 = vmatprep.subr.mxu0 %v328
    %1245 = vmatpush1.msra.mxu0 %v327
    %1246 = vmatprep.subr.mxu0 %v324
    %1247 = vmatpush1.msra.mxu0 %v323
    %1248 = vmatprep.subr.mxu0 %v320
    %1249 = vmatpush1.msra.mxu0 %v319
    %1250 = vmatprep.subr.mxu0 %v316
    %1251 = vmatpush1.msra.mxu0 %v315
    %1252 = vmatprep.subr.mxu0 %v312
    %1253 = vmatpush1.msra.mxu0 %v311
    %1254 = vmatprep.subr.mxu0 %v308
    %1255 = vmatpush1.msra.mxu0 %v307
    %1256 = vmatprep.subr.mxu0 %v304
    %1257 = vmatpush1.msra.mxu0 %v303
    %1258 = vmatprep.subr.mxu0 %v300
    %1259 = vmatpush1.msra.mxu0 %v299
    %1260 = vmatprep.subr.mxu0 %v296
    %1261 = vmatpush1.msra.mxu0 %v295
    %1262 = vmatprep.subr.mxu0 %v292
    %1263 = vmatpush1.msra.mxu0 %v291
    %1264 = vmatprep.subr.mxu0 %v288
    %1265 = vmatpush1.msra.mxu0 %v287
    %1266 = vmatprep.subr.mxu0 %v284
    %1267 = vmatpush1.msra.mxu0 %v283
    %1268 = vmatprep.subr.mxu0 0.0
    %1269 = vmatpush2.msra.mxu0 0.0
    %1270 = vmatprep.subr.mxu0 0.0
    %1271 = vmatpush2.msra.mxu0 0.0
    %1272 = vmatprep.subr.mxu0 0.0
    %1273 = vmatpush2.msra.mxu0 0.0
    %1274 = vmatprep.subr.mxu0 0.0
    %1275 = vmatpush2.msra.mxu0 0.0
    %1276 = vmatprep.subr.mxu0 0.0
    %1277 = vmatpush2.msra.mxu0 0.0
    %1278 = vmatprep.subr.mxu0 0.0
    %1279 = vmatpush2.msra.mxu0 0.0
    %1280 = vmatprep.subr.mxu0 0.0
    %1281 = vmatpush2.msra.mxu0 0.0
    %1282 = vmatprep.subr.mxu0 0.0
    %1283 = vmatpush2.msra.mxu0 0.0
    %1284 = vmatprep.subr.mxu0 0.0
    %1285 = vmatpush2.msra.mxu0 0.0
    %1286 = vmatprep.subr.mxu0 0.0
    %1287 = vmatpush2.msra.mxu0 0.0
    %1288 = vmatprep.subr.mxu0 0.0
    %1289 = vmatpush2.msra.mxu0 0.0
    %1290 = vmatprep.subr.mxu0 0.0
    %1291 = vmatpush2.msra.mxu0 0.0
    %1292 = vmatprep.subr.mxu0 0.0
    %1293 = vmatpush2.msra.mxu0 0.0
    %1294 = vmatprep.subr.mxu0 0.0
    %1295 = vmatpush2.msra.mxu0 0.0
    %1296 = vmatprep.subr.mxu0 0.0
    %1297 = vmatpush2.msra.mxu0 0.0
    %1298 = vmatprep.subr.mxu0 0.0
    %1299 = vmatpush2.msra.mxu0 0.0
    %1300 = vmatprep.mubr.f32.mxu0 0.0
    %1301 = vmatmul.mubr.f32.gmra.mxu0 %v1163
    %v1302 = vpop.f32.mrf.mxu0
    %v1303 = vadd.f32 0.0, %v1302
    %v1304 = vpop.f32.mrf.mxu0
    %v1305 = vadd.f32 0.0, %v1304
    %1306 = vdwg.mxu0
    %v1311 = vrot.slane %v1232, 4
    %v1312 = vrot.slane %v1234, 4
    %v1313 = vrot.slane %v1303, 4
    %v1314 = vrot.slane %v1305, 4
    %v1319 = vadd.f32 %v194, %v1311
    %v1320 = vadd.f32 %v196, %v1312
    %v1321 = vadd.f32 %v271, %v1313
    %v1322 = vadd.f32 %v273, %v1314
    %v1323 = vxor.u32 %v1319, 2147483648
    %v1324 = vxor.u32 %v1320, 2147483648
    %v1325 = vxor.u32 %v1321, 2147483648
    %v1326 = vmul.f32 %v1323, 1.442695
    %v1327 = vpow.pop %v1326
    %v1328 = vmul.f32 %v1324, 1.442695
    %v1329 = vpow.pop %v1328
    %v1330 = vmul.f32 %v1325, 1.442695
    %v1331 = vpow.pop %v1330
    %v1332 = vadd.f32 %v1327, 1.0
    %v1333 = vadd.f32 %v1329, 1.0
    %v1334 = vadd.f32 %v1331, 1.0
    %v1335 = vrcp.pop %v1332
    %v1336 = vmul.f32 1.0, %v1335
    %v1337 = vrcp.pop %v1333
    %v1338 = vmul.f32 1.0, %v1337
    %v1339 = vrcp.pop %v1334
    %v1340 = vmul.f32 1.0, %v1339
    %v1341 = vtanh.pop %v1322
    %v1343 = vrot.slane %v826, 6
    %v1345 = vmul.f32 %v1338, %v1343
    %v1346 = vmul.f32 %v1336, %v1341
    %v1347 = vadd.f32 %v1345, %v1346
    %v1348 = vtanh.pop %v1347
    %v1349 = vmul.f32 %v1340, %v1348
    %1350 = vmatprep.subr.mxu0 %v470
    %1351 = vmatpush1.msra.mxu0 %v469
    %1352 = vmatprep.subr.mxu0 %v466
    %1353 = vmatpush1.msra.mxu0 %v465
    %1354 = vmatprep.subr.mxu0 %v462
    %1355 = vmatpush1.msra.mxu0 %v461
    %1356 = vmatprep.subr.mxu0 %v458
    %1357 = vmatpush1.msra.mxu0 %v457
    %1358 = vmatprep.subr.mxu0 %v454
    %1359 = vmatpush1.msra.mxu0 %v453
    %1360 = vmatprep.subr.mxu0 %v450
    %1361 = vmatpush1.msra.mxu0 %v449
    %1362 = vmatprep.subr.mxu0 %v446
    %1363 = vmatpush1.msra.mxu0 %v445
    %1364 = vmatprep.subr.mxu0 %v442
    %1365 = vmatpush1.msra.mxu0 %v441
    %1366 = vmatprep.subr.mxu0 %v438
    %1367 = vmatpush1.msra.mxu0 %v437
    %1368 = vmatprep.subr.mxu0 %v434
    %1369 = vmatpush1.msra.mxu0 %v433
    %1370 = vmatprep.subr.mxu0 %v430
    %1371 = vmatpush1.msra.mxu0 %v429
    %1372 = vmatprep.subr.mxu0 %v426
    %1373 = vmatpush1.msra.mxu0 %v425
    %1374 = vmatprep.subr.mxu0 %v422
    %1375 = vmatpush1.msra.mxu0 %v421
    %1376 = vmatprep.subr.mxu0 %v418
    %1377 = vmatpush1.msra.mxu0 %v417
    %1378 = vmatprep.subr.mxu0 %v414
    %1379 = vmatpush1.msra.mxu0 %v413
    %1380 = vmatprep.subr.mxu0 %v410
    %1381 = vmatpush1.msra.mxu0 %v409
    %1382 = vmatprep.subr.mxu0 0.0
    %1383 = vmatpush2.msra.mxu0 0.0
    %1384 = vmatprep.subr.mxu0 0.0
    %1385 = vmatpush2.msra.mxu0 0.0
    %1386 = vmatprep.subr.mxu0 0.0
    %1387 = vmatpush2.msra.mxu0 0.0
    %1388 = vmatprep.subr.mxu0 0.0
    %1389 = vmatpush2.msra.mxu0 0.0
    %1390 = vmatprep.subr.mxu0 0.0
    %1391 = vmatpush2.msra.mxu0 0.0
    %1392 = vmatprep.subr.mxu0 0.0
    %1393 = vmatpush2.msra.mxu0 0.0
    %1394 = vmatprep.subr.mxu0 0.0
    %1395 = vmatpush2.msra.mxu0 0.0
    %1396 = vmatprep.subr.mxu0 0.0
    %1397 = vmatpush2.msra.mxu0 0.0
    %1398 = vmatprep.subr.mxu0 0.0
    %1399 = vmatpush2.msra.mxu0 0.0
    %1400 = vmatprep.subr.mxu0 0.0
    %1401 = vmatpush2.msra.mxu0 0.0
    %1402 = vmatprep.subr.mxu0 0.0
    %1403 = vmatpush2.msra.mxu0 0.0
    %1404 = vmatprep.subr.mxu0 0.0
    %1405 = vmatpush2.msra.mxu0 0.0
    %1406 = vmatprep.subr.mxu0 0.0
    %1407 = vmatpush2.msra.mxu0 0.0
    %1408 = vmatprep.subr.mxu0 0.0
    %1409 = vmatpush2.msra.mxu0 0.0
    %1410 = vmatprep.subr.mxu0 0.0
    %1411 = vmatpush2.msra.mxu0 0.0
    %1412 = vmatprep.subr.mxu0 0.0
    %1413 = vmatpush2.msra.mxu0 0.0
    %1414 = vmatprep.mubr.f32.mxu0 0.0
    %1415 = vmatmul.mubr.f32.gmra.mxu0 %v1163
    %v1416 = vpop.f32.mrf.mxu0
    %v1417 = vadd.f32 %v833, %v1416
    %v1418 = vpop.f32.mrf.mxu0
    %v1419 = vadd.f32 %v837, %v1418
    %1420 = vdwg.mxu0
    %1421 = vmatprep.subr.mxu0 %v472
    %1422 = vmatpush1.msra.mxu0 %v471
    %1423 = vmatprep.subr.mxu0 %v468
    %1424 = vmatpush1.msra.mxu0 %v467
    %1425 = vmatprep.subr.mxu0 %v464
    %1426 = vmatpush1.msra.mxu0 %v463
    %1427 = vmatprep.subr.mxu0 %v460
    %1428 = vmatpush1.msra.mxu0 %v459
    %1429 = vmatprep.subr.mxu0 %v456
    %1430 = vmatpush1.msra.mxu0 %v455
    %1431 = vmatprep.subr.mxu0 %v452
    %1432 = vmatpush1.msra.mxu0 %v451
    %1433 = vmatprep.subr.mxu0 %v448
    %1434 = vmatpush1.msra.mxu0 %v447
    %1435 = vmatprep.subr.mxu0 %v444
    %1436 = vmatpush1.msra.mxu0 %v443
    %1437 = vmatprep.subr.mxu0 %v440
    %1438 = vmatpush1.msra.mxu0 %v439
    %1439 = vmatprep.subr.mxu0 %v436
    %1440 = vmatpush1.msra.mxu0 %v435
    %1441 = vmatprep.subr.mxu0 %v432
    %1442 = vmatpush1.msra.mxu0 %v431
    %1443 = vmatprep.subr.mxu0 %v428
    %1444 = vmatpush1.msra.mxu0 %v427
    %1445 = vmatprep.subr.mxu0 %v424
    %1446 = vmatpush1.msra.mxu0 %v423
    %1447 = vmatprep.subr.mxu0 %v420
    %1448 = vmatpush1.msra.mxu0 %v419
    %1449 = vmatprep.subr.mxu0 %v416
    %1450 = vmatpush1.msra.mxu0 %v415
    %1451 = vmatprep.subr.mxu0 %v412
    %1452 = vmatpush1.msra.mxu0 %v411
    %1453 = vmatprep.subr.mxu0 0.0
    %1454 = vmatpush2.msra.mxu0 0.0
    %1455 = vmatprep.subr.mxu0 0.0
    %1456 = vmatpush2.msra.mxu0 0.0
    %1457 = vmatprep.subr.mxu0 0.0
    %1458 = vmatpush2.msra.mxu0 0.0
    %1459 = vmatprep.subr.mxu0 0.0
    %1460 = vmatpush2.msra.mxu0 0.0
    %1461 = vmatprep.subr.mxu0 0.0
    %1462 = vmatpush2.msra.mxu0 0.0
    %1463 = vmatprep.subr.mxu0 0.0
    %1464 = vmatpush2.msra.mxu0 0.0
    %1465 = vmatprep.subr.mxu0 0.0
    %1466 = vmatpush2.msra.mxu0 0.0
    %1467 = vmatprep.subr.mxu0 0.0
    %1468 = vmatpush2.msra.mxu0 0.0
    %1469 = vmatprep.subr.mxu0 0.0
    %1470 = vmatpush2.msra.mxu0 0.0
    %1471 = vmatprep.subr.mxu0 0.0
    %1472 = vmatpush2.msra.mxu0 0.0
    %1473 = vmatprep.subr.mxu0 0.0
    %1474 = vmatpush2.msra.mxu0 0.0
    %1475 = vmatprep.subr.mxu0 0.0
    %1476 = vmatpush2.msra.mxu0 0.0
    %1477 = vmatprep.subr.mxu0 0.0
    %1478 = vmatpush2.msra.mxu0 0.0
    %1479 = vmatprep.subr.mxu0 0.0
    %1480 = vmatpush2.msra.mxu0 0.0
    %1481 = vmatprep.subr.mxu0 0.0
    %1482 = vmatpush2.msra.mxu0 0.0
    %1483 = vmatprep.subr.mxu0 0.0
    %1484 = vmatpush2.msra.mxu0 0.0
    %1485 = vmatprep.mubr.f32.mxu0 0.0
    %1486 = vmatmul.mubr.f32.gmra.mxu0 %v1163
    %v1487 = vpop.f32.mrf.mxu0
    %v1488 = vadd.f32 %v841, %v1487
    %v1489 = vpop.f32.mrf.mxu0
    %v1490 = vadd.f32 %v845, %v1489
    %1491 = vdwg.mxu0
    %1492 = vmatprep.subr.mxu0 %v406
    %1493 = vmatpush1.msra.mxu0 %v405
    %1494 = vmatprep.subr.mxu0 %v402
    %1495 = vmatpush1.msra.mxu0 %v401
    %1496 = vmatprep.subr.mxu0 %v398
    %1497 = vmatpush1.msra.mxu0 %v397
    %1498 = vmatprep.subr.mxu0 %v394
    %1499 = vmatpush1.msra.mxu0 %v393
    %1500 = vmatprep.subr.mxu0 %v390
    %1501 = vmatpush1.msra.mxu0 %v389
    %1502 = vmatprep.subr.mxu0 %v386
    %1503 = vmatpush1.msra.mxu0 %v385
    %1504 = vmatprep.subr.mxu0 %v382
    %1505 = vmatpush1.msra.mxu0 %v381
    %1506 = vmatprep.subr.mxu0 %v378
    %1507 = vmatpush1.msra.mxu0 %v377
    %1508 = vmatprep.subr.mxu0 %v374
    %1509 = vmatpush1.msra.mxu0 %v373
    %1510 = vmatprep.subr.mxu0 %v370
    %1511 = vmatpush1.msra.mxu0 %v369
    %1512 = vmatprep.subr.mxu0 %v366
    %1513 = vmatpush1.msra.mxu0 %v365
    %1514 = vmatprep.subr.mxu0 %v362
    %1515 = vmatpush1.msra.mxu0 %v361
    %1516 = vmatprep.subr.mxu0 %v358
    %1517 = vmatpush1.msra.mxu0 %v357
    %1518 = vmatprep.subr.mxu0 %v354
    %1519 = vmatpush1.msra.mxu0 %v353
    %1520 = vmatprep.subr.mxu0 %v350
    %1521 = vmatpush1.msra.mxu0 %v349
    %1522 = vmatprep.subr.mxu0 %v346
    %1523 = vmatpush1.msra.mxu0 %v345
    %1524 = vmatprep.subr.mxu0 0.0
    %1525 = vmatpush2.msra.mxu0 0.0
    %1526 = vmatprep.subr.mxu0 0.0
    %1527 = vmatpush2.msra.mxu0 0.0
    %1528 = vmatprep.subr.mxu0 0.0
    %1529 = vmatpush2.msra.mxu0 0.0
    %1530 = vmatprep.subr.mxu0 0.0
    %1531 = vmatpush2.msra.mxu0 0.0
    %1532 = vmatprep.subr.mxu0 0.0
    %1533 = vmatpush2.msra.mxu0 0.0
    %1534 = vmatprep.subr.mxu0 0.0
    %1535 = vmatpush2.msra.mxu0 0.0
    %1536 = vmatprep.subr.mxu0 0.0
    %1537 = vmatpush2.msra.mxu0 0.0
    %1538 = vmatprep.subr.mxu0 0.0
    %1539 = vmatpush2.msra.mxu0 0.0
    %1540 = vmatprep.subr.mxu0 0.0
    %1541 = vmatpush2.msra.mxu0 0.0
    %1542 = vmatprep.subr.mxu0 0.0
    %1543 = vmatpush2.msra.mxu0 0.0
    %1544 = vmatprep.subr.mxu0 0.0
    %1545 = vmatpush2.msra.mxu0 0.0
    %1546 = vmatprep.subr.mxu0 0.0
    %1547 = vmatpush2.msra.mxu0 0.0
    %1548 = vmatprep.subr.mxu0 0.0
    %1549 = vmatpush2.msra.mxu0 0.0
    %1550 = vmatprep.subr.mxu0 0.0
    %1551 = vmatpush2.msra.mxu0 0.0
    %1552 = vmatprep.subr.mxu0 0.0
    %1553 = vmatpush2.msra.mxu0 0.0
    %1554 = vmatprep.subr.mxu0 0.0
    %1555 = vmatpush2.msra.mxu0 0.0
    %1556 = vmatprep.mubr.f32.mxu0 0.0
    %1557 = vmatmul.mubr.f32.gmra.mxu0 %v1161
    %v1558 = vpop.f32.mrf.mxu0
    %v1559 = vadd.f32 0.0, %v1558
    %v1560 = vpop.f32.mrf.mxu0
    %v1561 = vadd.f32 0.0, %v1560
    %1562 = vdwg.mxu0
    %1563 = vmatprep.subr.mxu0 %v408
    %1564 = vmatpush1.msra.mxu0 %v407
    %1565 = vmatprep.subr.mxu0 %v404
    %1566 = vmatpush1.msra.mxu0 %v403
    %1567 = vmatprep.subr.mxu0 %v400
    %1568 = vmatpush1.msra.mxu0 %v399
    %1569 = vmatprep.subr.mxu0 %v396
    %1570 = vmatpush1.msra.mxu0 %v395
    %1571 = vmatprep.subr.mxu0 %v392
    %1572 = vmatpush1.msra.mxu0 %v391
    %1573 = vmatprep.subr.mxu0 %v388
    %1574 = vmatpush1.msra.mxu0 %v387
    %1575 = vmatprep.subr.mxu0 %v384
    %1576 = vmatpush1.msra.mxu0 %v383
    %1577 = vmatprep.subr.mxu0 %v380
    %1578 = vmatpush1.msra.mxu0 %v379
    %1579 = vmatprep.subr.mxu0 %v376
    %1580 = vmatpush1.msra.mxu0 %v375
    %1581 = vmatprep.subr.mxu0 %v372
    %1582 = vmatpush1.msra.mxu0 %v371
    %1583 = vmatprep.subr.mxu0 %v368
    %1584 = vmatpush1.msra.mxu0 %v367
    %1585 = vmatprep.subr.mxu0 %v364
    %1586 = vmatpush1.msra.mxu0 %v363
    %1587 = vmatprep.subr.mxu0 %v360
    %1588 = vmatpush1.msra.mxu0 %v359
    %1589 = vmatprep.subr.mxu0 %v356
    %1590 = vmatpush1.msra.mxu0 %v355
    %1591 = vmatprep.subr.mxu0 %v352
    %1592 = vmatpush1.msra.mxu0 %v351
    %1593 = vmatprep.subr.mxu0 %v348
    %1594 = vmatpush1.msra.mxu0 %v347
    %1595 = vmatprep.subr.mxu0 0.0
    %1596 = vmatpush2.msra.mxu0 0.0
    %1597 = vmatprep.subr.mxu0 0.0
    %1598 = vmatpush2.msra.mxu0 0.0
    %1599 = vmatprep.subr.mxu0 0.0
    %1600 = vmatpush2.msra.mxu0 0.0
    %1601 = vmatprep.subr.mxu0 0.0
    %1602 = vmatpush2.msra.mxu0 0.0
    %1603 = vmatprep.subr.mxu0 0.0
    %1604 = vmatpush2.msra.mxu0 0.0
    %1605 = vmatprep.subr.mxu0 0.0
    %1606 = vmatpush2.msra.mxu0 0.0
    %1607 = vmatprep.subr.mxu0 0.0
    %1608 = vmatpush2.msra.mxu0 0.0
    %1609 = vmatprep.subr.mxu0 0.0
    %1610 = vmatpush2.msra.mxu0 0.0
    %1611 = vmatprep.subr.mxu0 0.0
    %1612 = vmatpush2.msra.mxu0 0.0
    %1613 = vmatprep.subr.mxu0 0.0
    %1614 = vmatpush2.msra.mxu0 0.0
    %1615 = vmatprep.subr.mxu0 0.0
    %1616 = vmatpush2.msra.mxu0 0.0
    %1617 = vmatprep.subr.mxu0 0.0
    %1618 = vmatpush2.msra.mxu0 0.0
    %1619 = vmatprep.subr.mxu0 0.0
    %1620 = vmatpush2.msra.mxu0 0.0
    %1621 = vmatprep.subr.mxu0 0.0
    %1622 = vmatpush2.msra.mxu0 0.0
    %1623 = vmatprep.subr.mxu0 0.0
    %1624 = vmatpush2.msra.mxu0 0.0
    %1625 = vmatprep.subr.mxu0 0.0
    %1626 = vmatpush2.msra.mxu0 0.0
    %1627 = vmatprep.mubr.f32.mxu0 0.0
    %1628 = vmatmul.mubr.f32.gmra.mxu0 %v1161
    %v1629 = vpop.f32.mrf.mxu0
    %v1630 = vadd.f32 0.0, %v1629
    %v1631 = vpop.f32.mrf.mxu0
    %v1632 = vadd.f32 0.0, %v1631
    %1633 = vdwg.mxu0
    %v1634 = vadd.f32 %v1417, %v1559
    %v1635 = vadd.f32 %v1419, %v1561
    %v1636 = vadd.f32 %v1488, %v1630
    %v1637 = vadd.f32 %v1490, %v1632
    %v1638 = vxor.u32 %v1634, 2147483648
    %v1639 = vxor.u32 %v1635, 2147483648
    %v1640 = vxor.u32 %v1636, 2147483648
    %v1641 = vmul.f32 %v1638, 1.442695
    %v1642 = vpow.pop %v1641
    %v1643 = vmul.f32 %v1639, 1.442695
    %v1644 = vpow.pop %v1643
    %v1645 = vmul.f32 %v1640, 1.442695
    %v1646 = vpow.pop %v1645
    %v1647 = vadd.f32 %v1642, 1.0
    %v1648 = vadd.f32 %v1644, 1.0
    %v1649 = vadd.f32 %v1646, 1.0
    %v1650 = vrcp.pop %v1647
    %v1651 = vmul.f32 1.0, %v1650
    %v1652 = vrcp.pop %v1648
    %v1653 = vmul.f32 1.0, %v1652
    %v1654 = vrcp.pop %v1649
    %v1655 = vmul.f32 1.0, %v1654
    %v1656 = vtanh.pop %v1637
    %v1657 = vmul.f32 %v1653, %v1159
    %v1658 = vmul.f32 %v1651, %v1656
    %v1659 = vadd.f32 %v1657, %v1658
    %v1660 = vtanh.pop %v1659
    %v1661 = vmul.f32 %v1655, %v1660
    %v1663 = vrot.slane %v1349, 4
    %1665 = vmatprep.subr.mxu0 %v342
    %1666 = vmatpush1.msra.mxu0 %v341
    %1667 = vmatprep.subr.mxu0 %v338
    %1668 = vmatpush1.msra.mxu0 %v337
    %1669 = vmatprep.subr.mxu0 %v334
    %1670 = vmatpush1.msra.mxu0 %v333
    %1671 = vmatprep.subr.mxu0 %v330
    %1672 = vmatpush1.msra.mxu0 %v329
    %1673 = vmatprep.subr.mxu0 %v326
    %1674 = vmatpush1.msra.mxu0 %v325
    %1675 = vmatprep.subr.mxu0 %v322
    %1676 = vmatpush1.msra.mxu0 %v321
    %1677 = vmatprep.subr.mxu0 %v318
    %1678 = vmatpush1.msra.mxu0 %v317
    %1679 = vmatprep.subr.mxu0 %v314
    %1680 = vmatpush1.msra.mxu0 %v313
    %1681 = vmatprep.subr.mxu0 %v310
    %1682 = vmatpush1.msra.mxu0 %v309
    %1683 = vmatprep.subr.mxu0 %v306
    %1684 = vmatpush1.msra.mxu0 %v305
    %1685 = vmatprep.subr.mxu0 %v302
    %1686 = vmatpush1.msra.mxu0 %v301
    %1687 = vmatprep.subr.mxu0 %v298
    %1688 = vmatpush1.msra.mxu0 %v297
    %1689 = vmatprep.subr.mxu0 %v294
    %1690 = vmatpush1.msra.mxu0 %v293
    %1691 = vmatprep.subr.mxu0 %v290
    %1692 = vmatpush1.msra.mxu0 %v289
    %1693 = vmatprep.subr.mxu0 %v286
    %1694 = vmatpush1.msra.mxu0 %v285
    %1695 = vmatprep.subr.mxu0 %v282
    %1696 = vmatpush1.msra.mxu0 %v281
    %1697 = vmatprep.subr.mxu0 0.0
    %1698 = vmatpush2.msra.mxu0 0.0
    %1699 = vmatprep.subr.mxu0 0.0
    %1700 = vmatpush2.msra.mxu0 0.0
    %1701 = vmatprep.subr.mxu0 0.0
    %1702 = vmatpush2.msra.mxu0 0.0
    %1703 = vmatprep.subr.mxu0 0.0
    %1704 = vmatpush2.msra.mxu0 0.0
    %1705 = vmatprep.subr.mxu0 0.0
    %1706 = vmatpush2.msra.mxu0 0.0
    %1707 = vmatprep.subr.mxu0 0.0
    %1708 = vmatpush2.msra.mxu0 0.0
    %1709 = vmatprep.subr.mxu0 0.0
    %1710 = vmatpush2.msra.mxu0 0.0
    %1711 = vmatprep.subr.mxu0 0.0
    %1712 = vmatpush2.msra.mxu0 0.0
    %1713 = vmatprep.subr.mxu0 0.0
    %1714 = vmatpush2.msra.mxu0 0.0
    %1715 = vmatprep.subr.mxu0 0.0
    %1716 = vmatpush2.msra.mxu0 0.0
    %1717 = vmatprep.subr.mxu0 0.0
    %1718 = vmatpush2.msra.mxu0 0.0
    %1719 = vmatprep.subr.mxu0 0.0
    %1720 = vmatpush2.msra.mxu0 0.0
    %1721 = vmatprep.subr.mxu0 0.0
    %1722 = vmatpush2.msra.mxu0 0.0
    %1723 = vmatprep.subr.mxu0 0.0
    %1724 = vmatpush2.msra.mxu0 0.0
    %1725 = vmatprep.subr.mxu0 0.0
    %1726 = vmatpush2.msra.mxu0 0.0
    %1727 = vmatprep.subr.mxu0 0.0
    %1728 = vmatpush2.msra.mxu0 0.0
    %1729 = vmatprep.mubr.f32.mxu0 0.0
    %1730 = vmatmul.mubr.f32.gmra.mxu0 %v1663
    %v1731 = vpop.f32.mrf.mxu0
    %v1732 = vadd.f32 0.0, %v1731
    %v1733 = vpop.f32.mrf.mxu0
    %v1734 = vadd.f32 0.0, %v1733
    %1735 = vdwg.mxu0
    %1736 = vmatprep.subr.mxu0 %v344
    %1737 = vmatpush1.msra.mxu0 %v343
    %1738 = vmatprep.subr.mxu0 %v340
    %1739 = vmatpush1.msra.mxu0 %v339
    %1740 = vmatprep.subr.mxu0 %v336
    %1741 = vmatpush1.msra.mxu0 %v335
    %1742 = vmatprep.subr.mxu0 %v332
    %1743 = vmatpush1.msra.mxu0 %v331
    %1744 = vmatprep.subr.mxu0 %v328
    %1745 = vmatpush1.msra.mxu0 %v327
    %1746 = vmatprep.subr.mxu0 %v324
    %1747 = vmatpush1.msra.mxu0 %v323
    %1748 = vmatprep.subr.mxu0 %v320
    %1749 = vmatpush1.msra.mxu0 %v319
    %1750 = vmatprep.subr.mxu0 %v316
    %1751 = vmatpush1.msra.mxu0 %v315
    %1752 = vmatprep.subr.mxu0 %v312
    %1753 = vmatpush1.msra.mxu0 %v311
    %1754 = vmatprep.subr.mxu0 %v308
    %1755 = vmatpush1.msra.mxu0 %v307
    %1756 = vmatprep.subr.mxu0 %v304
    %1757 = vmatpush1.msra.mxu0 %v303
    %1758 = vmatprep.subr.mxu0 %v300
    %1759 = vmatpush1.msra.mxu0 %v299
    %1760 = vmatprep.subr.mxu0 %v296
    %1761 = vmatpush1.msra.mxu0 %v295
    %1762 = vmatprep.subr.mxu0 %v292
    %1763 = vmatpush1.msra.mxu0 %v291
    %1764 = vmatprep.subr.mxu0 %v288
    %1765 = vmatpush1.msra.mxu0 %v287
    %1766 = vmatprep.subr.mxu0 %v284
    %1767 = vmatpush1.msra.mxu0 %v283
    %1768 = vmatprep.subr.mxu0 0.0
    %1769 = vmatpush2.msra.mxu0 0.0
    %1770 = vmatprep.subr.mxu0 0.0
    %1771 = vmatpush2.msra.mxu0 0.0
    %1772 = vmatprep.subr.mxu0 0.0
    %1773 = vmatpush2.msra.mxu0 0.0
    %1774 = vmatprep.subr.mxu0 0.0
    %1775 = vmatpush2.msra.mxu0 0.0
    %1776 = vmatprep.subr.mxu0 0.0
    %1777 = vmatpush2.msra.mxu0 0.0
    %1778 = vmatprep.subr.mxu0 0.0
    %1779 = vmatpush2.msra.mxu0 0.0
    %1780 = vmatprep.subr.mxu0 0.0
    %1781 = vmatpush2.msra.mxu0 0.0
    %1782 = vmatprep.subr.mxu0 0.0
    %1783 = vmatpush2.msra.mxu0 0.0
    %1784 = vmatprep.subr.mxu0 0.0
    %1785 = vmatpush2.msra.mxu0 0.0
    %1786 = vmatprep.subr.mxu0 0.0
    %1787 = vmatpush2.msra.mxu0 0.0
    %1788 = vmatprep.subr.mxu0 0.0
    %1789 = vmatpush2.msra.mxu0 0.0
    %1790 = vmatprep.subr.mxu0 0.0
    %1791 = vmatpush2.msra.mxu0 0.0
    %1792 = vmatprep.subr.mxu0 0.0
    %1793 = vmatpush2.msra.mxu0 0.0
    %1794 = vmatprep.subr.mxu0 0.0
    %1795 = vmatpush2.msra.mxu0 0.0
    %1796 = vmatprep.subr.mxu0 0.0
    %1797 = vmatpush2.msra.mxu0 0.0
    %1798 = vmatprep.subr.mxu0 0.0
    %1799 = vmatpush2.msra.mxu0 0.0
    %1800 = vmatprep.mubr.f32.mxu0 0.0
    %1801 = vmatmul.mubr.f32.gmra.mxu0 %v1663
    %v1802 = vpop.f32.mrf.mxu0
    %v1803 = vadd.f32 0.0, %v1802
    %v1804 = vpop.f32.mrf.mxu0
    %v1805 = vadd.f32 0.0, %v1804
    %1806 = vdwg.mxu0
    %v1811 = vrot.slane %v1732, 2
    %v1812 = vrot.slane %v1734, 2
    %v1813 = vrot.slane %v1803, 2
    %v1814 = vrot.slane %v1805, 2
    %v1819 = vadd.f32 %v194, %v1811
    %v1820 = vadd.f32 %v196, %v1812
    %v1821 = vadd.f32 %v271, %v1813
    %v1822 = vadd.f32 %v273, %v1814
    %v1823 = vxor.u32 %v1819, 2147483648
    %v1824 = vxor.u32 %v1820, 2147483648
    %v1825 = vxor.u32 %v1821, 2147483648
    %v1826 = vmul.f32 %v1823, 1.442695
    %v1827 = vpow.pop %v1826
    %v1828 = vmul.f32 %v1824, 1.442695
    %v1829 = vpow.pop %v1828
    %v1830 = vmul.f32 %v1825, 1.442695
    %v1831 = vpow.pop %v1830
    %v1832 = vadd.f32 %v1827, 1.0
    %v1833 = vadd.f32 %v1829, 1.0
    %v1834 = vadd.f32 %v1831, 1.0
    %v1835 = vrcp.pop %v1832
    %v1836 = vmul.f32 1.0, %v1835
    %v1837 = vrcp.pop %v1833
    %v1838 = vmul.f32 1.0, %v1837
    %v1839 = vrcp.pop %v1834
    %v1840 = vmul.f32 1.0, %v1839
    %v1841 = vtanh.pop %v1822
    %v1843 = vrot.slane %v1347, 6
    %v1845 = vmul.f32 %v1838, %v1843
    %v1846 = vmul.f32 %v1836, %v1841
    %v1847 = vadd.f32 %v1845, %v1846
    %v1848 = vtanh.pop %v1847
    %v1849 = vmul.f32 %v1840, %v1848
    %1850 = vmatprep.subr.mxu0 %v470
    %1851 = vmatpush1.msra.mxu0 %v469
    %1852 = vmatprep.subr.mxu0 %v466
    %1853 = vmatpush1.msra.mxu0 %v465
    %1854 = vmatprep.subr.mxu0 %v462
    %1855 = vmatpush1.msra.mxu0 %v461
    %1856 = vmatprep.subr.mxu0 %v458
    %1857 = vmatpush1.msra.mxu0 %v457
    %1858 = vmatprep.subr.mxu0 %v454
    %1859 = vmatpush1.msra.mxu0 %v453
    %1860 = vmatprep.subr.mxu0 %v450
    %1861 = vmatpush1.msra.mxu0 %v449
    %1862 = vmatprep.subr.mxu0 %v446
    %1863 = vmatpush1.msra.mxu0 %v445
    %1864 = vmatprep.subr.mxu0 %v442
    %1865 = vmatpush1.msra.mxu0 %v441
    %1866 = vmatprep.subr.mxu0 %v438
    %1867 = vmatpush1.msra.mxu0 %v437
    %1868 = vmatprep.subr.mxu0 %v434
    %1869 = vmatpush1.msra.mxu0 %v433
    %1870 = vmatprep.subr.mxu0 %v430
    %1871 = vmatpush1.msra.mxu0 %v429
    %1872 = vmatprep.subr.mxu0 %v426
    %1873 = vmatpush1.msra.mxu0 %v425
    %1874 = vmatprep.subr.mxu0 %v422
    %1875 = vmatpush1.msra.mxu0 %v421
    %1876 = vmatprep.subr.mxu0 %v418
    %1877 = vmatpush1.msra.mxu0 %v417
    %1878 = vmatprep.subr.mxu0 %v414
    %1879 = vmatpush1.msra.mxu0 %v413
    %1880 = vmatprep.subr.mxu0 %v410
    %1881 = vmatpush1.msra.mxu0 %v409
    %1882 = vmatprep.subr.mxu0 0.0
    %1883 = vmatpush2.msra.mxu0 0.0
    %1884 = vmatprep.subr.mxu0 0.0
    %1885 = vmatpush2.msra.mxu0 0.0
    %1886 = vmatprep.subr.mxu0 0.0
    %1887 = vmatpush2.msra.mxu0 0.0
    %1888 = vmatprep.subr.mxu0 0.0
    %1889 = vmatpush2.msra.mxu0 0.0
    %1890 = vmatprep.subr.mxu0 0.0
    %1891 = vmatpush2.msra.mxu0 0.0
    %1892 = vmatprep.subr.mxu0 0.0
    %1893 = vmatpush2.msra.mxu0 0.0
    %1894 = vmatprep.subr.mxu0 0.0
    %1895 = vmatpush2.msra.mxu0 0.0
    %1896 = vmatprep.subr.mxu0 0.0
    %1897 = vmatpush2.msra.mxu0 0.0
    %1898 = vmatprep.subr.mxu0 0.0
    %1899 = vmatpush2.msra.mxu0 0.0
    %1900 = vmatprep.subr.mxu0 0.0
    %1901 = vmatpush2.msra.mxu0 0.0
    %1902 = vmatprep.subr.mxu0 0.0
    %1903 = vmatpush2.msra.mxu0 0.0
    %1904 = vmatprep.subr.mxu0 0.0
    %1905 = vmatpush2.msra.mxu0 0.0
    %1906 = vmatprep.subr.mxu0 0.0
    %1907 = vmatpush2.msra.mxu0 0.0
    %1908 = vmatprep.subr.mxu0 0.0
    %1909 = vmatpush2.msra.mxu0 0.0
    %1910 = vmatprep.subr.mxu0 0.0
    %1911 = vmatpush2.msra.mxu0 0.0
    %1912 = vmatprep.subr.mxu0 0.0
    %1913 = vmatpush2.msra.mxu0 0.0
    %1914 = vmatprep.mubr.f32.mxu0 0.0
    %1915 = vmatmul.mubr.f32.gmra.mxu0 %v1663
    %v1916 = vpop.f32.mrf.mxu0
    %v1917 = vadd.f32 %v833, %v1916
    %v1918 = vpop.f32.mrf.mxu0
    %v1919 = vadd.f32 %v837, %v1918
    %1920 = vdwg.mxu0
    %1921 = vmatprep.subr.mxu0 %v472
    %1922 = vmatpush1.msra.mxu0 %v471
    %1923 = vmatprep.subr.mxu0 %v468
    %1924 = vmatpush1.msra.mxu0 %v467
    %1925 = vmatprep.subr.mxu0 %v464
    %1926 = vmatpush1.msra.mxu0 %v463
    %1927 = vmatprep.subr.mxu0 %v460
    %1928 = vmatpush1.msra.mxu0 %v459
    %1929 = vmatprep.subr.mxu0 %v456
    %1930 = vmatpush1.msra.mxu0 %v455
    %1931 = vmatprep.subr.mxu0 %v452
    %1932 = vmatpush1.msra.mxu0 %v451
    %1933 = vmatprep.subr.mxu0 %v448
    %1934 = vmatpush1.msra.mxu0 %v447
    %1935 = vmatprep.subr.mxu0 %v444
    %1936 = vmatpush1.msra.mxu0 %v443
    %1937 = vmatprep.subr.mxu0 %v440
    %1938 = vmatpush1.msra.mxu0 %v439
    %1939 = vmatprep.subr.mxu0 %v436
    %1940 = vmatpush1.msra.mxu0 %v435
    %1941 = vmatprep.subr.mxu0 %v432
    %1942 = vmatpush1.msra.mxu0 %v431
    %1943 = vmatprep.subr.mxu0 %v428
    %1944 = vmatpush1.msra.mxu0 %v427
    %1945 = vmatprep.subr.mxu0 %v424
    %1946 = vmatpush1.msra.mxu0 %v423
    %1947 = vmatprep.subr.mxu0 %v420
    %1948 = vmatpush1.msra.mxu0 %v419
    %1949 = vmatprep.subr.mxu0 %v416
    %1950 = vmatpush1.msra.mxu0 %v415
    %1951 = vmatprep.subr.mxu0 %v412
    %1952 = vmatpush1.msra.mxu0 %v411
    %1953 = vmatprep.subr.mxu0 0.0
    %1954 = vmatpush2.msra.mxu0 0.0
    %1955 = vmatprep.subr.mxu0 0.0
    %1956 = vmatpush2.msra.mxu0 0.0
    %1957 = vmatprep.subr.mxu0 0.0
    %1958 = vmatpush2.msra.mxu0 0.0
    %1959 = vmatprep.subr.mxu0 0.0
    %1960 = vmatpush2.msra.mxu0 0.0
    %1961 = vmatprep.subr.mxu0 0.0
    %1962 = vmatpush2.msra.mxu0 0.0
    %1963 = vmatprep.subr.mxu0 0.0
    %1964 = vmatpush2.msra.mxu0 0.0
    %1965 = vmatprep.subr.mxu0 0.0
    %1966 = vmatpush2.msra.mxu0 0.0
    %1967 = vmatprep.subr.mxu0 0.0
    %1968 = vmatpush2.msra.mxu0 0.0
    %1969 = vmatprep.subr.mxu0 0.0
    %1970 = vmatpush2.msra.mxu0 0.0
    %1971 = vmatprep.subr.mxu0 0.0
    %1972 = vmatpush2.msra.mxu0 0.0
    %1973 = vmatprep.subr.mxu0 0.0
    %1974 = vmatpush2.msra.mxu0 0.0
    %1975 = vmatprep.subr.mxu0 0.0
    %1976 = vmatpush2.msra.mxu0 0.0
    %1977 = vmatprep.subr.mxu0 0.0
    %1978 = vmatpush2.msra.mxu0 0.0
    %1979 = vmatprep.subr.mxu0 0.0
    %1980 = vmatpush2.msra.mxu0 0.0
    %1981 = vmatprep.subr.mxu0 0.0
    %1982 = vmatpush2.msra.mxu0 0.0
    %1983 = vmatprep.subr.mxu0 0.0
    %1984 = vmatpush2.msra.mxu0 0.0
    %1985 = vmatprep.mubr.f32.mxu0 0.0
    %1986 = vmatmul.mubr.f32.gmra.mxu0 %v1663
    %v1987 = vpop.f32.mrf.mxu0
    %v1988 = vadd.f32 %v841, %v1987
    %v1989 = vpop.f32.mrf.mxu0
    %v1990 = vadd.f32 %v845, %v1989
    %1991 = vdwg.mxu0
    %1992 = vmatprep.subr.mxu0 %v406
    %1993 = vmatpush1.msra.mxu0 %v405
    %1994 = vmatprep.subr.mxu0 %v402
    %1995 = vmatpush1.msra.mxu0 %v401
    %1996 = vmatprep.subr.mxu0 %v398
    %1997 = vmatpush1.msra.mxu0 %v397
    %1998 = vmatprep.subr.mxu0 %v394
    %1999 = vmatpush1.msra.mxu0 %v393
    %2000 = vmatprep.subr.mxu0 %v390
    %2001 = vmatpush1.msra.mxu0 %v389
    %2002 = vmatprep.subr.mxu0 %v386
    %2003 = vmatpush1.msra.mxu0 %v385
    %2004 = vmatprep.subr.mxu0 %v382
    %2005 = vmatpush1.msra.mxu0 %v381
    %2006 = vmatprep.subr.mxu0 %v378
    %2007 = vmatpush1.msra.mxu0 %v377
    %2008 = vmatprep.subr.mxu0 %v374
    %2009 = vmatpush1.msra.mxu0 %v373
    %2010 = vmatprep.subr.mxu0 %v370
    %2011 = vmatpush1.msra.mxu0 %v369
    %2012 = vmatprep.subr.mxu0 %v366
    %2013 = vmatpush1.msra.mxu0 %v365
    %2014 = vmatprep.subr.mxu0 %v362
    %2015 = vmatpush1.msra.mxu0 %v361
    %2016 = vmatprep.subr.mxu0 %v358
    %2017 = vmatpush1.msra.mxu0 %v357
    %2018 = vmatprep.subr.mxu0 %v354
    %2019 = vmatpush1.msra.mxu0 %v353
    %2020 = vmatprep.subr.mxu0 %v350
    %2021 = vmatpush1.msra.mxu0 %v349
    %2022 = vmatprep.subr.mxu0 %v346
    %2023 = vmatpush1.msra.mxu0 %v345
    %2024 = vmatprep.subr.mxu0 0.0
    %2025 = vmatpush2.msra.mxu0 0.0
    %2026 = vmatprep.subr.mxu0 0.0
    %2027 = vmatpush2.msra.mxu0 0.0
    %2028 = vmatprep.subr.mxu0 0.0
    %2029 = vmatpush2.msra.mxu0 0.0
    %2030 = vmatprep.subr.mxu0 0.0
    %2031 = vmatpush2.msra.mxu0 0.0
    %2032 = vmatprep.subr.mxu0 0.0
    %2033 = vmatpush2.msra.mxu0 0.0
    %2034 = vmatprep.subr.mxu0 0.0
    %2035 = vmatpush2.msra.mxu0 0.0
    %2036 = vmatprep.subr.mxu0 0.0
    %2037 = vmatpush2.msra.mxu0 0.0
    %2038 = vmatprep.subr.mxu0 0.0
    %2039 = vmatpush2.msra.mxu0 0.0
    %2040 = vmatprep.subr.mxu0 0.0
    %2041 = vmatpush2.msra.mxu0 0.0
    %2042 = vmatprep.subr.mxu0 0.0
    %2043 = vmatpush2.msra.mxu0 0.0
    %2044 = vmatprep.subr.mxu0 0.0
    %2045 = vmatpush2.msra.mxu0 0.0
    %2046 = vmatprep.subr.mxu0 0.0
    %2047 = vmatpush2.msra.mxu0 0.0
    %2048 = vmatprep.subr.mxu0 0.0
    %2049 = vmatpush2.msra.mxu0 0.0
    %2050 = vmatprep.subr.mxu0 0.0
    %2051 = vmatpush2.msra.mxu0 0.0
    %2052 = vmatprep.subr.mxu0 0.0
    %2053 = vmatpush2.msra.mxu0 0.0
    %2054 = vmatprep.subr.mxu0 0.0
    %2055 = vmatpush2.msra.mxu0 0.0
    %2056 = vmatprep.mubr.f32.mxu0 0.0
    %2057 = vmatmul.mubr.f32.gmra.mxu0 %v1661
    %v2058 = vpop.f32.mrf.mxu0
    %v2059 = vadd.f32 0.0, %v2058
    %v2060 = vpop.f32.mrf.mxu0
    %v2061 = vadd.f32 0.0, %v2060
    %2062 = vdwg.mxu0
    %2063 = vmatprep.subr.mxu0 %v408
    %2064 = vmatpush1.msra.mxu0 %v407
    %2065 = vmatprep.subr.mxu0 %v404
    %2066 = vmatpush1.msra.mxu0 %v403
    %2067 = vmatprep.subr.mxu0 %v400
    %2068 = vmatpush1.msra.mxu0 %v399
    %2069 = vmatprep.subr.mxu0 %v396
    %2070 = vmatpush1.msra.mxu0 %v395
    %2071 = vmatprep.subr.mxu0 %v392
    %2072 = vmatpush1.msra.mxu0 %v391
    %2073 = vmatprep.subr.mxu0 %v388
    %2074 = vmatpush1.msra.mxu0 %v387
    %2075 = vmatprep.subr.mxu0 %v384
    %2076 = vmatpush1.msra.mxu0 %v383
    %2077 = vmatprep.subr.mxu0 %v380
    %2078 = vmatpush1.msra.mxu0 %v379
    %2079 = vmatprep.subr.mxu0 %v376
    %2080 = vmatpush1.msra.mxu0 %v375
    %2081 = vmatprep.subr.mxu0 %v372
    %2082 = vmatpush1.msra.mxu0 %v371
    %2083 = vmatprep.subr.mxu0 %v368
    %2084 = vmatpush1.msra.mxu0 %v367
    %2085 = vmatprep.subr.mxu0 %v364
    %2086 = vmatpush1.msra.mxu0 %v363
    %2087 = vmatprep.subr.mxu0 %v360
    %2088 = vmatpush1.msra.mxu0 %v359
    %2089 = vmatprep.subr.mxu0 %v356
    %2090 = vmatpush1.msra.mxu0 %v355
    %2091 = vmatprep.subr.mxu0 %v352
    %2092 = vmatpush1.msra.mxu0 %v351
    %2093 = vmatprep.subr.mxu0 %v348
    %2094 = vmatpush1.msra.mxu0 %v347
    %2095 = vmatprep.subr.mxu0 0.0
    %2096 = vmatpush2.msra.mxu0 0.0
    %2097 = vmatprep.subr.mxu0 0.0
    %2098 = vmatpush2.msra.mxu0 0.0
    %2099 = vmatprep.subr.mxu0 0.0
    %2100 = vmatpush2.msra.mxu0 0.0
    %2101 = vmatprep.subr.mxu0 0.0
    %2102 = vmatpush2.msra.mxu0 0.0
    %2103 = vmatprep.subr.mxu0 0.0
    %2104 = vmatpush2.msra.mxu0 0.0
    %2105 = vmatprep.subr.mxu0 0.0
    %2106 = vmatpush2.msra.mxu0 0.0
    %2107 = vmatprep.subr.mxu0 0.0
    %2108 = vmatpush2.msra.mxu0 0.0
    %2109 = vmatprep.subr.mxu0 0.0
    %2110 = vmatpush2.msra.mxu0 0.0
    %2111 = vmatprep.subr.mxu0 0.0
    %2112 = vmatpush2.msra.mxu0 0.0
    %2113 = vmatprep.subr.mxu0 0.0
    %2114 = vmatpush2.msra.mxu0 0.0
    %2115 = vmatprep.subr.mxu0 0.0
    %2116 = vmatpush2.msra.mxu0 0.0
    %2117 = vmatprep.subr.mxu0 0.0
    %2118 = vmatpush2.msra.mxu0 0.0
    %2119 = vmatprep.subr.mxu0 0.0
    %2120 = vmatpush2.msra.mxu0 0.0
    %2121 = vmatprep.subr.mxu0 0.0
    %2122 = vmatpush2.msra.mxu0 0.0
    %2123 = vmatprep.subr.mxu0 0.0
    %2124 = vmatpush2.msra.mxu0 0.0
    %2125 = vmatprep.subr.mxu0 0.0
    %2126 = vmatpush2.msra.mxu0 0.0
    %2127 = vmatprep.mubr.f32.mxu0 0.0
    %2128 = vmatmul.mubr.f32.gmra.mxu0 %v1661
    %v2129 = vpop.f32.mrf.mxu0
    %v2130 = vadd.f32 0.0, %v2129
    %v2131 = vpop.f32.mrf.mxu0
    %v2132 = vadd.f32 0.0, %v2131
    %2133 = vdwg.mxu0
    %v2134 = vadd.f32 %v1917, %v2059
    %v2135 = vadd.f32 %v1919, %v2061
    %v2136 = vadd.f32 %v1988, %v2130
    %v2137 = vadd.f32 %v1990, %v2132
    %v2138 = vxor.u32 %v2134, 2147483648
    %v2139 = vxor.u32 %v2135, 2147483648
    %v2140 = vxor.u32 %v2136, 2147483648
    %v2141 = vmul.f32 %v2138, 1.442695
    %v2142 = vpow.pop %v2141
    %v2143 = vmul.f32 %v2139, 1.442695
    %v2144 = vpow.pop %v2143
    %v2145 = vmul.f32 %v2140, 1.442695
    %v2146 = vpow.pop %v2145
    %v2147 = vadd.f32 %v2142, 1.0
    %v2148 = vadd.f32 %v2144, 1.0
    %v2149 = vadd.f32 %v2146, 1.0
    %v2150 = vrcp.pop %v2147
    %v2151 = vmul.f32 1.0, %v2150
    %v2152 = vrcp.pop %v2148
    %v2153 = vmul.f32 1.0, %v2152
    %v2154 = vrcp.pop %v2149
    %v2155 = vmul.f32 1.0, %v2154
    %v2156 = vtanh.pop %v2137
    %v2157 = vmul.f32 %v2153, %v1659
    %v2158 = vmul.f32 %v2151, %v2156
    %v2159 = vadd.f32 %v2157, %v2158
    %v2160 = vtanh.pop %v2159
    %v2161 = vmul.f32 %v2155, %v2160
    %v2163 = vrot.slane %v1849, 6
    %2165 = vmatprep.subr.mxu0 %v342
    %2166 = vmatpush1.msra.mxu0 %v341
    %2167 = vmatprep.subr.mxu0 %v338
    %2168 = vmatpush1.msra.mxu0 %v337
    %2169 = vmatprep.subr.mxu0 %v334
    %2170 = vmatpush1.msra.mxu0 %v333
    %2171 = vmatprep.subr.mxu0 %v330
    %2172 = vmatpush1.msra.mxu0 %v329
    %2173 = vmatprep.subr.mxu0 %v326
    %2174 = vmatpush1.msra.mxu0 %v325
    %2175 = vmatprep.subr.mxu0 %v322
    %2176 = vmatpush1.msra.mxu0 %v321
    %2177 = vmatprep.subr.mxu0 %v318
    %2178 = vmatpush1.msra.mxu0 %v317
    %2179 = vmatprep.subr.mxu0 %v314
    %2180 = vmatpush1.msra.mxu0 %v313
    %2181 = vmatprep.subr.mxu0 %v310
    %2182 = vmatpush1.msra.mxu0 %v309
    %2183 = vmatprep.subr.mxu0 %v306
    %2184 = vmatpush1.msra.mxu0 %v305
    %2185 = vmatprep.subr.mxu0 %v302
    %2186 = vmatpush1.msra.mxu0 %v301
    %2187 = vmatprep.subr.mxu0 %v298
    %2188 = vmatpush1.msra.mxu0 %v297
    %2189 = vmatprep.subr.mxu0 %v294
    %2190 = vmatpush1.msra.mxu0 %v293
    %2191 = vmatprep.subr.mxu0 %v290
    %2192 = vmatpush1.msra.mxu0 %v289
    %2193 = vmatprep.subr.mxu0 %v286
    %2194 = vmatpush1.msra.mxu0 %v285
    %2195 = vmatprep.subr.mxu0 %v282
    %2196 = vmatpush1.msra.mxu0 %v281
    %2197 = vmatprep.subr.mxu0 0.0
    %2198 = vmatpush2.msra.mxu0 0.0
    %2199 = vmatprep.subr.mxu0 0.0
    %2200 = vmatpush2.msra.mxu0 0.0
    %2201 = vmatprep.subr.mxu0 0.0
    %2202 = vmatpush2.msra.mxu0 0.0
    %2203 = vmatprep.subr.mxu0 0.0
    %2204 = vmatpush2.msra.mxu0 0.0
    %2205 = vmatprep.subr.mxu0 0.0
    %2206 = vmatpush2.msra.mxu0 0.0
    %2207 = vmatprep.subr.mxu0 0.0
    %2208 = vmatpush2.msra.mxu0 0.0
    %2209 = vmatprep.subr.mxu0 0.0
    %2210 = vmatpush2.msra.mxu0 0.0
    %2211 = vmatprep.subr.mxu0 0.0
    %2212 = vmatpush2.msra.mxu0 0.0
    %2213 = vmatprep.subr.mxu0 0.0
    %2214 = vmatpush2.msra.mxu0 0.0
    %2215 = vmatprep.subr.mxu0 0.0
    %2216 = vmatpush2.msra.mxu0 0.0
    %2217 = vmatprep.subr.mxu0 0.0
    %2218 = vmatpush2.msra.mxu0 0.0
    %2219 = vmatprep.subr.mxu0 0.0
    %2220 = vmatpush2.msra.mxu0 0.0
    %2221 = vmatprep.subr.mxu0 0.0
    %2222 = vmatpush2.msra.mxu0 0.0
    %2223 = vmatprep.subr.mxu0 0.0
    %2224 = vmatpush2.msra.mxu0 0.0
    %2225 = vmatprep.subr.mxu0 0.0
    %2226 = vmatpush2.msra.mxu0 0.0
    %2227 = vmatprep.subr.mxu0 0.0
    %2228 = vmatpush2.msra.mxu0 0.0
    %2229 = vmatprep.mubr.f32.mxu0 0.0
    %2230 = vmatmul.mubr.f32.gmra.mxu0 %v2163
    %v2231 = vpop.f32.mrf.mxu0
    %v2232 = vadd.f32 0.0, %v2231
    %v2233 = vpop.f32.mrf.mxu0
    %v2234 = vadd.f32 0.0, %v2233
    %2235 = vdwg.mxu0
    %2236 = vmatprep.subr.mxu0 %v344
    %2237 = vmatpush1.msra.mxu0 %v343
    %2238 = vmatprep.subr.mxu0 %v340
    %2239 = vmatpush1.msra.mxu0 %v339
    %2240 = vmatprep.subr.mxu0 %v336
    %2241 = vmatpush1.msra.mxu0 %v335
    %2242 = vmatprep.subr.mxu0 %v332
    %2243 = vmatpush1.msra.mxu0 %v331
    %2244 = vmatprep.subr.mxu0 %v328
    %2245 = vmatpush1.msra.mxu0 %v327
    %2246 = vmatprep.subr.mxu0 %v324
    %2247 = vmatpush1.msra.mxu0 %v323
    %2248 = vmatprep.subr.mxu0 %v320
    %2249 = vmatpush1.msra.mxu0 %v319
    %2250 = vmatprep.subr.mxu0 %v316
    %2251 = vmatpush1.msra.mxu0 %v315
    %2252 = vmatprep.subr.mxu0 %v312
    %2253 = vmatpush1.msra.mxu0 %v311
    %2254 = vmatprep.subr.mxu0 %v308
    %2255 = vmatpush1.msra.mxu0 %v307
    %2256 = vmatprep.subr.mxu0 %v304
    %2257 = vmatpush1.msra.mxu0 %v303
    %2258 = vmatprep.subr.mxu0 %v300
    %2259 = vmatpush1.msra.mxu0 %v299
    %2260 = vmatprep.subr.mxu0 %v296
    %2261 = vmatpush1.msra.mxu0 %v295
    %2262 = vmatprep.subr.mxu0 %v292
    %2263 = vmatpush1.msra.mxu0 %v291
    %2264 = vmatprep.subr.mxu0 %v288
    %2265 = vmatpush1.msra.mxu0 %v287
    %2266 = vmatprep.subr.mxu0 %v284
    %2267 = vmatpush1.msra.mxu0 %v283
    %2268 = vmatprep.subr.mxu0 0.0
    %2269 = vmatpush2.msra.mxu0 0.0
    %2270 = vmatprep.subr.mxu0 0.0
    %2271 = vmatpush2.msra.mxu0 0.0
    %2272 = vmatprep.subr.mxu0 0.0
    %2273 = vmatpush2.msra.mxu0 0.0
    %2274 = vmatprep.subr.mxu0 0.0
    %2275 = vmatpush2.msra.mxu0 0.0
    %2276 = vmatprep.subr.mxu0 0.0
    %2277 = vmatpush2.msra.mxu0 0.0
    %2278 = vmatprep.subr.mxu0 0.0
    %2279 = vmatpush2.msra.mxu0 0.0
    %2280 = vmatprep.subr.mxu0 0.0
    %2281 = vmatpush2.msra.mxu0 0.0
    %2282 = vmatprep.subr.mxu0 0.0
    %2283 = vmatpush2.msra.mxu0 0.0
    %2284 = vmatprep.subr.mxu0 0.0
    %2285 = vmatpush2.msra.mxu0 0.0
    %2286 = vmatprep.subr.mxu0 0.0
    %2287 = vmatpush2.msra.mxu0 0.0
    %2288 = vmatprep.subr.mxu0 0.0
    %2289 = vmatpush2.msra.mxu0 0.0
    %2290 = vmatprep.subr.mxu0 0.0
    %2291 = vmatpush2.msra.mxu0 0.0
    %2292 = vmatprep.subr.mxu0 0.0
    %2293 = vmatpush2.msra.mxu0 0.0
    %2294 = vmatprep.subr.mxu0 0.0
    %2295 = vmatpush2.msra.mxu0 0.0
    %2296 = vmatprep.subr.mxu0 0.0
    %2297 = vmatpush2.msra.mxu0 0.0
    %2298 = vmatprep.subr.mxu0 0.0
    %2299 = vmatpush2.msra.mxu0 0.0
    %2300 = vmatprep.mubr.f32.mxu0 0.0
    %2301 = vmatmul.mubr.f32.gmra.mxu0 %v2163
    %v2302 = vpop.f32.mrf.mxu0
    %v2303 = vadd.f32 0.0, %v2302
    %v2304 = vpop.f32.mrf.mxu0
    %v2305 = vadd.f32 0.0, %v2304
    %2306 = vdwg.mxu0
    %v2307 = vadd.f32 %v200, %v2232
    %v2308 = vadd.f32 %v202, %v2234
    %v2309 = vadd.f32 %v277, %v2303
    %v2310 = vadd.f32 %v279, %v2305
    %v2311 = vxor.u32 %v2307, 2147483648
    %v2312 = vxor.u32 %v2308, 2147483648
    %v2313 = vxor.u32 %v2309, 2147483648
    %v2314 = vmul.f32 %v2311, 1.442695
    %v2315 = vpow.pop %v2314
    %v2316 = vmul.f32 %v2312, 1.442695
    %v2317 = vpow.pop %v2316
    %v2318 = vmul.f32 %v2313, 1.442695
    %v2319 = vpow.pop %v2318
    %v2320 = vadd.f32 %v2315, 1.0
    %v2321 = vadd.f32 %v2317, 1.0
    %v2322 = vadd.f32 %v2319, 1.0
    %v2323 = vrcp.pop %v2320
    %v2324 = vmul.f32 1.0, %v2323
    %v2325 = vrcp.pop %v2321
    %v2326 = vmul.f32 1.0, %v2325
    %v2327 = vrcp.pop %v2322
    %v2328 = vmul.f32 1.0, %v2327
    %v2329 = vtanh.pop %v2310
    %v2331 = vrot.slane %v1847, 6
    %v2333 = vmul.f32 %v2326, %v2331
    %v2334 = vmul.f32 %v2324, %v2329
    %v2335 = vadd.f32 %v2333, %v2334
    %v2336 = vtanh.pop %v2335
    %v2337 = vmul.f32 %v2328, %v2336
    %2338 = vmatprep.subr.mxu0 %v470
    %2339 = vmatpush1.msra.mxu0 %v469
    %2340 = vmatprep.subr.mxu0 %v466
    %2341 = vmatpush1.msra.mxu0 %v465
    %2342 = vmatprep.subr.mxu0 %v462
    %2343 = vmatpush1.msra.mxu0 %v461
    %2344 = vmatprep.subr.mxu0 %v458
    %2345 = vmatpush1.msra.mxu0 %v457
    %2346 = vmatprep.subr.mxu0 %v454
    %2347 = vmatpush1.msra.mxu0 %v453
    %2348 = vmatprep.subr.mxu0 %v450
    %2349 = vmatpush1.msra.mxu0 %v449
    %2350 = vmatprep.subr.mxu0 %v446
    %2351 = vmatpush1.msra.mxu0 %v445
    %2352 = vmatprep.subr.mxu0 %v442
    %2353 = vmatpush1.msra.mxu0 %v441
    %2354 = vmatprep.subr.mxu0 %v438
    %2355 = vmatpush1.msra.mxu0 %v437
    %2356 = vmatprep.subr.mxu0 %v434
    %2357 = vmatpush1.msra.mxu0 %v433
    %2358 = vmatprep.subr.mxu0 %v430
    %2359 = vmatpush1.msra.mxu0 %v429
    %2360 = vmatprep.subr.mxu0 %v426
    %2361 = vmatpush1.msra.mxu0 %v425
    %2362 = vmatprep.subr.mxu0 %v422
    %2363 = vmatpush1.msra.mxu0 %v421
    %2364 = vmatprep.subr.mxu0 %v418
    %2365 = vmatpush1.msra.mxu0 %v417
    %2366 = vmatprep.subr.mxu0 %v414
    %2367 = vmatpush1.msra.mxu0 %v413
    %2368 = vmatprep.subr.mxu0 %v410
    %2369 = vmatpush1.msra.mxu0 %v409
    %2370 = vmatprep.subr.mxu0 0.0
    %2371 = vmatpush2.msra.mxu0 0.0
    %2372 = vmatprep.subr.mxu0 0.0
    %2373 = vmatpush2.msra.mxu0 0.0
    %2374 = vmatprep.subr.mxu0 0.0
    %2375 = vmatpush2.msra.mxu0 0.0
    %2376 = vmatprep.subr.mxu0 0.0
    %2377 = vmatpush2.msra.mxu0 0.0
    %2378 = vmatprep.subr.mxu0 0.0
    %2379 = vmatpush2.msra.mxu0 0.0
    %2380 = vmatprep.subr.mxu0 0.0
    %2381 = vmatpush2.msra.mxu0 0.0
    %2382 = vmatprep.subr.mxu0 0.0
    %2383 = vmatpush2.msra.mxu0 0.0
    %2384 = vmatprep.subr.mxu0 0.0
    %2385 = vmatpush2.msra.mxu0 0.0
    %2386 = vmatprep.subr.mxu0 0.0
    %2387 = vmatpush2.msra.mxu0 0.0
    %2388 = vmatprep.subr.mxu0 0.0
    %2389 = vmatpush2.msra.mxu0 0.0
    %2390 = vmatprep.subr.mxu0 0.0
    %2391 = vmatpush2.msra.mxu0 0.0
    %2392 = vmatprep.subr.mxu0 0.0
    %2393 = vmatpush2.msra.mxu0 0.0
    %2394 = vmatprep.subr.mxu0 0.0
    %2395 = vmatpush2.msra.mxu0 0.0
    %2396 = vmatprep.subr.mxu0 0.0
    %2397 = vmatpush2.msra.mxu0 0.0
    %2398 = vmatprep.subr.mxu0 0.0
    %2399 = vmatpush2.msra.mxu0 0.0
    %2400 = vmatprep.subr.mxu0 0.0
    %2401 = vmatpush2.msra.mxu0 0.0
    %2402 = vmatprep.mubr.f32.mxu0 0.0
    %2403 = vmatmul.mubr.f32.gmra.mxu0 %v2163
    %v2404 = vpop.f32.mrf.mxu0
    %v2405 = vadd.f32 %v833, %v2404
    %v2406 = vpop.f32.mrf.mxu0
    %v2407 = vadd.f32 %v837, %v2406
    %2408 = vdwg.mxu0
    %2409 = vmatprep.subr.mxu0 %v472
    %2410 = vmatpush1.msra.mxu0 %v471
    %2411 = vmatprep.subr.mxu0 %v468
    %2412 = vmatpush1.msra.mxu0 %v467
    %2413 = vmatprep.subr.mxu0 %v464
    %2414 = vmatpush1.msra.mxu0 %v463
    %2415 = vmatprep.subr.mxu0 %v460
    %2416 = vmatpush1.msra.mxu0 %v459
    %2417 = vmatprep.subr.mxu0 %v456
    %2418 = vmatpush1.msra.mxu0 %v455
    %2419 = vmatprep.subr.mxu0 %v452
    %2420 = vmatpush1.msra.mxu0 %v451
    %2421 = vmatprep.subr.mxu0 %v448
    %2422 = vmatpush1.msra.mxu0 %v447
    %2423 = vmatprep.subr.mxu0 %v444
    %2424 = vmatpush1.msra.mxu0 %v443
    %2425 = vmatprep.subr.mxu0 %v440
    %2426 = vmatpush1.msra.mxu0 %v439
    %2427 = vmatprep.subr.mxu0 %v436
    %2428 = vmatpush1.msra.mxu0 %v435
    %2429 = vmatprep.subr.mxu0 %v432
    %2430 = vmatpush1.msra.mxu0 %v431
    %2431 = vmatprep.subr.mxu0 %v428
    %2432 = vmatpush1.msra.mxu0 %v427
    %2433 = vmatprep.subr.mxu0 %v424
    %2434 = vmatpush1.msra.mxu0 %v423
    %2435 = vmatprep.subr.mxu0 %v420
    %2436 = vmatpush1.msra.mxu0 %v419
    %2437 = vmatprep.subr.mxu0 %v416
    %2438 = vmatpush1.msra.mxu0 %v415
    %2439 = vmatprep.subr.mxu0 %v412
    %2440 = vmatpush1.msra.mxu0 %v411
    %2441 = vmatprep.subr.mxu0 0.0
    %2442 = vmatpush2.msra.mxu0 0.0
    %2443 = vmatprep.subr.mxu0 0.0
    %2444 = vmatpush2.msra.mxu0 0.0
    %2445 = vmatprep.subr.mxu0 0.0
    %2446 = vmatpush2.msra.mxu0 0.0
    %2447 = vmatprep.subr.mxu0 0.0
    %2448 = vmatpush2.msra.mxu0 0.0
    %2449 = vmatprep.subr.mxu0 0.0
    %2450 = vmatpush2.msra.mxu0 0.0
    %2451 = vmatprep.subr.mxu0 0.0
    %2452 = vmatpush2.msra.mxu0 0.0
    %2453 = vmatprep.subr.mxu0 0.0
    %2454 = vmatpush2.msra.mxu0 0.0
    %2455 = vmatprep.subr.mxu0 0.0
    %2456 = vmatpush2.msra.mxu0 0.0
    %2457 = vmatprep.subr.mxu0 0.0
    %2458 = vmatpush2.msra.mxu0 0.0
    %2459 = vmatprep.subr.mxu0 0.0
    %2460 = vmatpush2.msra.mxu0 0.0
    %2461 = vmatprep.subr.mxu0 0.0
    %2462 = vmatpush2.msra.mxu0 0.0
    %2463 = vmatprep.subr.mxu0 0.0
    %2464 = vmatpush2.msra.mxu0 0.0
    %2465 = vmatprep.subr.mxu0 0.0
    %2466 = vmatpush2.msra.mxu0 0.0
    %2467 = vmatprep.subr.mxu0 0.0
    %2468 = vmatpush2.msra.mxu0 0.0
    %2469 = vmatprep.subr.mxu0 0.0
    %2470 = vmatpush2.msra.mxu0 0.0
    %2471 = vmatprep.subr.mxu0 0.0
    %2472 = vmatpush2.msra.mxu0 0.0
    %2473 = vmatprep.mubr.f32.mxu0 0.0
    %2474 = vmatmul.mubr.f32.gmra.mxu0 %v2163
    %v2475 = vpop.f32.mrf.mxu0
    %v2476 = vadd.f32 %v841, %v2475
    %v2477 = vpop.f32.mrf.mxu0
    %v2478 = vadd.f32 %v845, %v2477
    %2479 = vdwg.mxu0
    %2480 = vmatprep.subr.mxu0 %v406
    %2481 = vmatpush1.msra.mxu0 %v405
    %2482 = vmatprep.subr.mxu0 %v402
    %2483 = vmatpush1.msra.mxu0 %v401
    %2484 = vmatprep.subr.mxu0 %v398
    %2485 = vmatpush1.msra.mxu0 %v397
    %2486 = vmatprep.subr.mxu0 %v394
    %2487 = vmatpush1.msra.mxu0 %v393
    %2488 = vmatprep.subr.mxu0 %v390
    %2489 = vmatpush1.msra.mxu0 %v389
    %2490 = vmatprep.subr.mxu0 %v386
    %2491 = vmatpush1.msra.mxu0 %v385
    %2492 = vmatprep.subr.mxu0 %v382
    %2493 = vmatpush1.msra.mxu0 %v381
    %2494 = vmatprep.subr.mxu0 %v378
    %2495 = vmatpush1.msra.mxu0 %v377
    %2496 = vmatprep.subr.mxu0 %v374
    %2497 = vmatpush1.msra.mxu0 %v373
    %2498 = vmatprep.subr.mxu0 %v370
    %2499 = vmatpush1.msra.mxu0 %v369
    %2500 = vmatprep.subr.mxu0 %v366
    %2501 = vmatpush1.msra.mxu0 %v365
    %2502 = vmatprep.subr.mxu0 %v362
    %2503 = vmatpush1.msra.mxu0 %v361
    %2504 = vmatprep.subr.mxu0 %v358
    %2505 = vmatpush1.msra.mxu0 %v357
    %2506 = vmatprep.subr.mxu0 %v354
    %2507 = vmatpush1.msra.mxu0 %v353
    %2508 = vmatprep.subr.mxu0 %v350
    %2509 = vmatpush1.msra.mxu0 %v349
    %2510 = vmatprep.subr.mxu0 %v346
    %2511 = vmatpush1.msra.mxu0 %v345
    %2512 = vmatprep.subr.mxu0 0.0
    %2513 = vmatpush2.msra.mxu0 0.0
    %2514 = vmatprep.subr.mxu0 0.0
    %2515 = vmatpush2.msra.mxu0 0.0
    %2516 = vmatprep.subr.mxu0 0.0
    %2517 = vmatpush2.msra.mxu0 0.0
    %2518 = vmatprep.subr.mxu0 0.0
    %2519 = vmatpush2.msra.mxu0 0.0
    %2520 = vmatprep.subr.mxu0 0.0
    %2521 = vmatpush2.msra.mxu0 0.0
    %2522 = vmatprep.subr.mxu0 0.0
    %2523 = vmatpush2.msra.mxu0 0.0
    %2524 = vmatprep.subr.mxu0 0.0
    %2525 = vmatpush2.msra.mxu0 0.0
    %2526 = vmatprep.subr.mxu0 0.0
    %2527 = vmatpush2.msra.mxu0 0.0
    %2528 = vmatprep.subr.mxu0 0.0
    %2529 = vmatpush2.msra.mxu0 0.0
    %2530 = vmatprep.subr.mxu0 0.0
    %2531 = vmatpush2.msra.mxu0 0.0
    %2532 = vmatprep.subr.mxu0 0.0
    %2533 = vmatpush2.msra.mxu0 0.0
    %2534 = vmatprep.subr.mxu0 0.0
    %2535 = vmatpush2.msra.mxu0 0.0
    %2536 = vmatprep.subr.mxu0 0.0
    %2537 = vmatpush2.msra.mxu0 0.0
    %2538 = vmatprep.subr.mxu0 0.0
    %2539 = vmatpush2.msra.mxu0 0.0
    %2540 = vmatprep.subr.mxu0 0.0
    %2541 = vmatpush2.msra.mxu0 0.0
    %2542 = vmatprep.subr.mxu0 0.0
    %2543 = vmatpush2.msra.mxu0 0.0
    %2544 = vmatprep.mubr.f32.mxu0 0.0
    %2545 = vmatmul.mubr.f32.gmra.mxu0 %v2161
    %v2546 = vpop.f32.mrf.mxu0
    %v2547 = vadd.f32 0.0, %v2546
    %v2548 = vpop.f32.mrf.mxu0
    %v2549 = vadd.f32 0.0, %v2548
    %2550 = vdwg.mxu0
    %2551 = vmatprep.subr.mxu0 %v408
    %2552 = vmatpush1.msra.mxu0 %v407
    %2553 = vmatprep.subr.mxu0 %v404
    %2554 = vmatpush1.msra.mxu0 %v403
    %2555 = vmatprep.subr.mxu0 %v400
    %2556 = vmatpush1.msra.mxu0 %v399
    %2557 = vmatprep.subr.mxu0 %v396
    %2558 = vmatpush1.msra.mxu0 %v395
    %2559 = vmatprep.subr.mxu0 %v392
    %2560 = vmatpush1.msra.mxu0 %v391
    %2561 = vmatprep.subr.mxu0 %v388
    %2562 = vmatpush1.msra.mxu0 %v387
    %2563 = vmatprep.subr.mxu0 %v384
    %2564 = vmatpush1.msra.mxu0 %v383
    %2565 = vmatprep.subr.mxu0 %v380
    %2566 = vmatpush1.msra.mxu0 %v379
    %2567 = vmatprep.subr.mxu0 %v376
    %2568 = vmatpush1.msra.mxu0 %v375
    %2569 = vmatprep.subr.mxu0 %v372
    %2570 = vmatpush1.msra.mxu0 %v371
    %2571 = vmatprep.subr.mxu0 %v368
    %2572 = vmatpush1.msra.mxu0 %v367
    %2573 = vmatprep.subr.mxu0 %v364
    %2574 = vmatpush1.msra.mxu0 %v363
    %2575 = vmatprep.subr.mxu0 %v360
    %2576 = vmatpush1.msra.mxu0 %v359
    %2577 = vmatprep.subr.mxu0 %v356
    %2578 = vmatpush1.msra.mxu0 %v355
    %2579 = vmatprep.subr.mxu0 %v352
    %2580 = vmatpush1.msra.mxu0 %v351
    %2581 = vmatprep.subr.mxu0 %v348
    %2582 = vmatpush1.msra.mxu0 %v347
    %2583 = vmatprep.subr.mxu0 0.0
    %2584 = vmatpush2.msra.mxu0 0.0
    %2585 = vmatprep.subr.mxu0 0.0
    %2586 = vmatpush2.msra.mxu0 0.0
    %2587 = vmatprep.subr.mxu0 0.0
    %2588 = vmatpush2.msra.mxu0 0.0
    %2589 = vmatprep.subr.mxu0 0.0
    %2590 = vmatpush2.msra.mxu0 0.0
    %2591 = vmatprep.subr.mxu0 0.0
    %2592 = vmatpush2.msra.mxu0 0.0
    %2593 = vmatprep.subr.mxu0 0.0
    %2594 = vmatpush2.msra.mxu0 0.0
    %2595 = vmatprep.subr.mxu0 0.0
    %2596 = vmatpush2.msra.mxu0 0.0
    %2597 = vmatprep.subr.mxu0 0.0
    %2598 = vmatpush2.msra.mxu0 0.0
    %2599 = vmatprep.subr.mxu0 0.0
    %2600 = vmatpush2.msra.mxu0 0.0
    %2601 = vmatprep.subr.mxu0 0.0
    %2602 = vmatpush2.msra.mxu0 0.0
    %2603 = vmatprep.subr.mxu0 0.0
    %2604 = vmatpush2.msra.mxu0 0.0
    %2605 = vmatprep.subr.mxu0 0.0
    %2606 = vmatpush2.msra.mxu0 0.0
    %2607 = vmatprep.subr.mxu0 0.0
    %2608 = vmatpush2.msra.mxu0 0.0
    %2609 = vmatprep.subr.mxu0 0.0
    %2610 = vmatpush2.msra.mxu0 0.0
    %2611 = vmatprep.subr.mxu0 0.0
    %2612 = vmatpush2.msra.mxu0 0.0
    %2613 = vmatprep.subr.mxu0 0.0
    %2614 = vmatpush2.msra.mxu0 0.0
    %2615 = vmatprep.mubr.f32.mxu0 0.0
    %2616 = vmatmul.mubr.f32.gmra.mxu0 %v2161
    %v2617 = vpop.f32.mrf.mxu0
    %v2618 = vadd.f32 0.0, %v2617
    %v2619 = vpop.f32.mrf.mxu0
    %v2620 = vadd.f32 0.0, %v2619
    %2621 = vdwg.mxu0
    %v2622 = vadd.f32 %v2405, %v2547
    %v2623 = vadd.f32 %v2407, %v2549
    %v2624 = vadd.f32 %v2476, %v2618
    %v2625 = vadd.f32 %v2478, %v2620
    %v2626 = vxor.u32 %v2622, 2147483648
    %v2627 = vxor.u32 %v2623, 2147483648
    %v2628 = vxor.u32 %v2624, 2147483648
    %v2629 = vmul.f32 %v2626, 1.442695
    %v2630 = vpow.pop %v2629
    %v2631 = vmul.f32 %v2627, 1.442695
    %v2632 = vpow.pop %v2631
    %v2633 = vmul.f32 %v2628, 1.442695
    %v2634 = vpow.pop %v2633
    %v2635 = vadd.f32 %v2630, 1.0
    %v2636 = vadd.f32 %v2632, 1.0
    %v2637 = vadd.f32 %v2634, 1.0
    %v2638 = vrcp.pop %v2635
    %v2639 = vmul.f32 1.0, %v2638
    %v2640 = vrcp.pop %v2636
    %v2641 = vmul.f32 1.0, %v2640
    %v2642 = vrcp.pop %v2637
    %v2643 = vmul.f32 1.0, %v2642
    %v2644 = vtanh.pop %v2625
    %v2645 = vmul.f32 %v2641, %v2159
    %v2646 = vmul.f32 %v2639, %v2644
    %v2647 = vadd.f32 %v2645, %v2646
    %v2648 = vtanh.pop %v2647
    %v2649 = vmul.f32 %v2643, %v2648
    %2650 = vmatprep.subr.mxu0 %v342
    %2651 = vmatpush1.msra.mxu0 %v341
    %2652 = vmatprep.subr.mxu0 %v338
    %2653 = vmatpush1.msra.mxu0 %v337
    %2654 = vmatprep.subr.mxu0 %v334
    %2655 = vmatpush1.msra.mxu0 %v333
    %2656 = vmatprep.subr.mxu0 %v330
    %2657 = vmatpush1.msra.mxu0 %v329
    %2658 = vmatprep.subr.mxu0 %v326
    %2659 = vmatpush1.msra.mxu0 %v325
    %2660 = vmatprep.subr.mxu0 %v322
    %2661 = vmatpush1.msra.mxu0 %v321
    %2662 = vmatprep.subr.mxu0 %v318
    %2663 = vmatpush1.msra.mxu0 %v317
    %2664 = vmatprep.subr.mxu0 %v314
    %2665 = vmatpush1.msra.mxu0 %v313
    %2666 = vmatprep.subr.mxu0 %v310
    %2667 = vmatpush1.msra.mxu0 %v309
    %2668 = vmatprep.subr.mxu0 %v306
    %2669 = vmatpush1.msra.mxu0 %v305
    %2670 = vmatprep.subr.mxu0 %v302
    %2671 = vmatpush1.msra.mxu0 %v301
    %2672 = vmatprep.subr.mxu0 %v298
    %2673 = vmatpush1.msra.mxu0 %v297
    %2674 = vmatprep.subr.mxu0 %v294
    %2675 = vmatpush1.msra.mxu0 %v293
    %2676 = vmatprep.subr.mxu0 %v290
    %2677 = vmatpush1.msra.mxu0 %v289
    %2678 = vmatprep.subr.mxu0 %v286
    %2679 = vmatpush1.msra.mxu0 %v285
    %2680 = vmatprep.subr.mxu0 %v282
    %2681 = vmatpush1.msra.mxu0 %v281
    %2682 = vmatprep.subr.mxu0 0.0
    %2683 = vmatpush2.msra.mxu0 0.0
    %2684 = vmatprep.subr.mxu0 0.0
    %2685 = vmatpush2.msra.mxu0 0.0
    %2686 = vmatprep.subr.mxu0 0.0
    %2687 = vmatpush2.msra.mxu0 0.0
    %2688 = vmatprep.subr.mxu0 0.0
    %2689 = vmatpush2.msra.mxu0 0.0
    %2690 = vmatprep.subr.mxu0 0.0
    %2691 = vmatpush2.msra.mxu0 0.0
    %2692 = vmatprep.subr.mxu0 0.0
    %2693 = vmatpush2.msra.mxu0 0.0
    %2694 = vmatprep.subr.mxu0 0.0
    %2695 = vmatpush2.msra.mxu0 0.0
    %2696 = vmatprep.subr.mxu0 0.0
    %2697 = vmatpush2.msra.mxu0 0.0
    %2698 = vmatprep.subr.mxu0 0.0
    %2699 = vmatpush2.msra.mxu0 0.0
    %2700 = vmatprep.subr.mxu0 0.0
    %2701 = vmatpush2.msra.mxu0 0.0
    %2702 = vmatprep.subr.mxu0 0.0
    %2703 = vmatpush2.msra.mxu0 0.0
    %2704 = vmatprep.subr.mxu0 0.0
    %2705 = vmatpush2.msra.mxu0 0.0
    %2706 = vmatprep.subr.mxu0 0.0
    %2707 = vmatpush2.msra.mxu0 0.0
    %2708 = vmatprep.subr.mxu0 0.0
    %2709 = vmatpush2.msra.mxu0 0.0
    %2710 = vmatprep.subr.mxu0 0.0
    %2711 = vmatpush2.msra.mxu0 0.0
    %2712 = vmatprep.subr.mxu0 0.0
    %2713 = vmatpush2.msra.mxu0 0.0
    %2714 = vmatprep.mubr.f32.mxu0 0.0
    %2715 = vmatmul.mubr.f32.gmra.mxu0 %v2337
    %v2716 = vpop.f32.mrf.mxu0
    %v2717 = vadd.f32 0.0, %v2716
    %v2718 = vpop.f32.mrf.mxu0
    %v2719 = vadd.f32 0.0, %v2718
    %2720 = vdwg.mxu0
    %2721 = vmatprep.subr.mxu0 %v344
    %2722 = vmatpush1.msra.mxu0 %v343
    %2723 = vmatprep.subr.mxu0 %v340
    %2724 = vmatpush1.msra.mxu0 %v339
    %2725 = vmatprep.subr.mxu0 %v336
    %2726 = vmatpush1.msra.mxu0 %v335
    %2727 = vmatprep.subr.mxu0 %v332
    %2728 = vmatpush1.msra.mxu0 %v331
    %2729 = vmatprep.subr.mxu0 %v328
    %2730 = vmatpush1.msra.mxu0 %v327
    %2731 = vmatprep.subr.mxu0 %v324
    %2732 = vmatpush1.msra.mxu0 %v323
    %2733 = vmatprep.subr.mxu0 %v320
    %2734 = vmatpush1.msra.mxu0 %v319
    %2735 = vmatprep.subr.mxu0 %v316
    %2736 = vmatpush1.msra.mxu0 %v315
    %2737 = vmatprep.subr.mxu0 %v312
    %2738 = vmatpush1.msra.mxu0 %v311
    %2739 = vmatprep.subr.mxu0 %v308
    %2740 = vmatpush1.msra.mxu0 %v307
    %2741 = vmatprep.subr.mxu0 %v304
    %2742 = vmatpush1.msra.mxu0 %v303
    %2743 = vmatprep.subr.mxu0 %v300
    %2744 = vmatpush1.msra.mxu0 %v299
    %2745 = vmatprep.subr.mxu0 %v296
    %2746 = vmatpush1.msra.mxu0 %v295
    %2747 = vmatprep.subr.mxu0 %v292
    %2748 = vmatpush1.msra.mxu0 %v291
    %2749 = vmatprep.subr.mxu0 %v288
    %2750 = vmatpush1.msra.mxu0 %v287
    %2751 = vmatprep.subr.mxu0 %v284
    %2752 = vmatpush1.msra.mxu0 %v283
    %2753 = vmatprep.subr.mxu0 0.0
    %2754 = vmatpush2.msra.mxu0 0.0
    %2755 = vmatprep.subr.mxu0 0.0
    %2756 = vmatpush2.msra.mxu0 0.0
    %2757 = vmatprep.subr.mxu0 0.0
    %2758 = vmatpush2.msra.mxu0 0.0
    %2759 = vmatprep.subr.mxu0 0.0
    %2760 = vmatpush2.msra.mxu0 0.0
    %2761 = vmatprep.subr.mxu0 0.0
    %2762 = vmatpush2.msra.mxu0 0.0
    %2763 = vmatprep.subr.mxu0 0.0
    %2764 = vmatpush2.msra.mxu0 0.0
    %2765 = vmatprep.subr.mxu0 0.0
    %2766 = vmatpush2.msra.mxu0 0.0
    %2767 = vmatprep.subr.mxu0 0.0
    %2768 = vmatpush2.msra.mxu0 0.0
    %2769 = vmatprep.subr.mxu0 0.0
    %2770 = vmatpush2.msra.mxu0 0.0
    %2771 = vmatprep.subr.mxu0 0.0
    %2772 = vmatpush2.msra.mxu0 0.0
    %2773 = vmatprep.subr.mxu0 0.0
    %2774 = vmatpush2.msra.mxu0 0.0
    %2775 = vmatprep.subr.mxu0 0.0
    %2776 = vmatpush2.msra.mxu0 0.0
    %2777 = vmatprep.subr.mxu0 0.0
    %2778 = vmatpush2.msra.mxu0 0.0
    %2779 = vmatprep.subr.mxu0 0.0
    %2780 = vmatpush2.msra.mxu0 0.0
    %2781 = vmatprep.subr.mxu0 0.0
    %2782 = vmatpush2.msra.mxu0 0.0
    %2783 = vmatprep.subr.mxu0 0.0
    %2784 = vmatpush2.msra.mxu0 0.0
    %2785 = vmatprep.mubr.f32.mxu0 0.0
    %2786 = vmatmul.mubr.f32.gmra.mxu0 %v2337
    %v2787 = vpop.f32.mrf.mxu0
    %v2788 = vadd.f32 0.0, %v2787
    %v2789 = vpop.f32.mrf.mxu0
    %v2790 = vadd.f32 0.0, %v2789
    %2791 = vdwg.mxu0
    %v2796 = vrot.slane %v2717, 6
    %v2797 = vrot.slane %v2719, 6
    %v2798 = vrot.slane %v2788, 6
    %v2799 = vrot.slane %v2790, 6
    %v2804 = vadd.f32 %v200, %v2796
    %v2805 = vadd.f32 %v202, %v2797
    %v2806 = vadd.f32 %v277, %v2798
    %v2807 = vadd.f32 %v279, %v2799
    %v2808 = vxor.u32 %v2804, 2147483648
    %v2809 = vxor.u32 %v2805, 2147483648
    %v2810 = vxor.u32 %v2806, 2147483648
    %v2811 = vmul.f32 %v2808, 1.442695
    %v2812 = vpow.pop %v2811
    %v2813 = vmul.f32 %v2809, 1.442695
    %v2814 = vpow.pop %v2813
    %v2815 = vmul.f32 %v2810, 1.442695
    %v2816 = vpow.pop %v2815
    %v2817 = vadd.f32 %v2812, 1.0
    %v2818 = vadd.f32 %v2814, 1.0
    %v2819 = vadd.f32 %v2816, 1.0
    %v2820 = vrcp.pop %v2817
    %v2821 = vmul.f32 1.0, %v2820
    %v2822 = vrcp.pop %v2818
    %v2823 = vmul.f32 1.0, %v2822
    %v2824 = vrcp.pop %v2819
    %v2825 = vmul.f32 1.0, %v2824
    %v2826 = vtanh.pop %v2807
    %v2828 = vrot.slane %v2335, 6
    %v2830 = vmul.f32 %v2823, %v2828
    %v2831 = vmul.f32 %v2821, %v2826
    %v2832 = vadd.f32 %v2830, %v2831
    %v2833 = vtanh.pop %v2832
    %v2834 = vmul.f32 %v2825, %v2833
    %2835 = vmatprep.subr.mxu0 %v470
    %2836 = vmatpush1.msra.mxu0 %v469
    %2837 = vmatprep.subr.mxu0 %v466
    %2838 = vmatpush1.msra.mxu0 %v465
    %2839 = vmatprep.subr.mxu0 %v462
    %2840 = vmatpush1.msra.mxu0 %v461
    %2841 = vmatprep.subr.mxu0 %v458
    %2842 = vmatpush1.msra.mxu0 %v457
    %2843 = vmatprep.subr.mxu0 %v454
    %2844 = vmatpush1.msra.mxu0 %v453
    %2845 = vmatprep.subr.mxu0 %v450
    %2846 = vmatpush1.msra.mxu0 %v449
    %2847 = vmatprep.subr.mxu0 %v446
    %2848 = vmatpush1.msra.mxu0 %v445
    %2849 = vmatprep.subr.mxu0 %v442
    %2850 = vmatpush1.msra.mxu0 %v441
    %2851 = vmatprep.subr.mxu0 %v438
    %2852 = vmatpush1.msra.mxu0 %v437
    %2853 = vmatprep.subr.mxu0 %v434
    %2854 = vmatpush1.msra.mxu0 %v433
    %2855 = vmatprep.subr.mxu0 %v430
    %2856 = vmatpush1.msra.mxu0 %v429
    %2857 = vmatprep.subr.mxu0 %v426
    %2858 = vmatpush1.msra.mxu0 %v425
    %2859 = vmatprep.subr.mxu0 %v422
    %2860 = vmatpush1.msra.mxu0 %v421
    %2861 = vmatprep.subr.mxu0 %v418
    %2862 = vmatpush1.msra.mxu0 %v417
    %2863 = vmatprep.subr.mxu0 %v414
    %2864 = vmatpush1.msra.mxu0 %v413
    %2865 = vmatprep.subr.mxu0 %v410
    %2866 = vmatpush1.msra.mxu0 %v409
    %2867 = vmatprep.subr.mxu0 0.0
    %2868 = vmatpush2.msra.mxu0 0.0
    %2869 = vmatprep.subr.mxu0 0.0
    %2870 = vmatpush2.msra.mxu0 0.0
    %2871 = vmatprep.subr.mxu0 0.0
    %2872 = vmatpush2.msra.mxu0 0.0
    %2873 = vmatprep.subr.mxu0 0.0
    %2874 = vmatpush2.msra.mxu0 0.0
    %2875 = vmatprep.subr.mxu0 0.0
    %2876 = vmatpush2.msra.mxu0 0.0
    %2877 = vmatprep.subr.mxu0 0.0
    %2878 = vmatpush2.msra.mxu0 0.0
    %2879 = vmatprep.subr.mxu0 0.0
    %2880 = vmatpush2.msra.mxu0 0.0
    %2881 = vmatprep.subr.mxu0 0.0
    %2882 = vmatpush2.msra.mxu0 0.0
    %2883 = vmatprep.subr.mxu0 0.0
    %2884 = vmatpush2.msra.mxu0 0.0
    %2885 = vmatprep.subr.mxu0 0.0
    %2886 = vmatpush2.msra.mxu0 0.0
    %2887 = vmatprep.subr.mxu0 0.0
    %2888 = vmatpush2.msra.mxu0 0.0
    %2889 = vmatprep.subr.mxu0 0.0
    %2890 = vmatpush2.msra.mxu0 0.0
    %2891 = vmatprep.subr.mxu0 0.0
    %2892 = vmatpush2.msra.mxu0 0.0
    %2893 = vmatprep.subr.mxu0 0.0
    %2894 = vmatpush2.msra.mxu0 0.0
    %2895 = vmatprep.subr.mxu0 0.0
    %2896 = vmatpush2.msra.mxu0 0.0
    %2897 = vmatprep.subr.mxu0 0.0
    %2898 = vmatpush2.msra.mxu0 0.0
    %2899 = vmatprep.mubr.f32.mxu0 0.0
    %2900 = vmatmul.mubr.f32.gmra.mxu0 %v2337
    %v2901 = vpop.f32.mrf.mxu0
    %v2902 = vadd.f32 %v833, %v2901
    %v2903 = vpop.f32.mrf.mxu0
    %v2904 = vadd.f32 %v837, %v2903
    %2905 = vdwg.mxu0
    %2906 = vmatprep.subr.mxu0 %v472
    %2907 = vmatpush1.msra.mxu0 %v471
    %2908 = vmatprep.subr.mxu0 %v468
    %2909 = vmatpush1.msra.mxu0 %v467
    %2910 = vmatprep.subr.mxu0 %v464
    %2911 = vmatpush1.msra.mxu0 %v463
    %2912 = vmatprep.subr.mxu0 %v460
    %2913 = vmatpush1.msra.mxu0 %v459
    %2914 = vmatprep.subr.mxu0 %v456
    %2915 = vmatpush1.msra.mxu0 %v455
    %2916 = vmatprep.subr.mxu0 %v452
    %2917 = vmatpush1.msra.mxu0 %v451
    %2918 = vmatprep.subr.mxu0 %v448
    %2919 = vmatpush1.msra.mxu0 %v447
    %2920 = vmatprep.subr.mxu0 %v444
    %2921 = vmatpush1.msra.mxu0 %v443
    %2922 = vmatprep.subr.mxu0 %v440
    %2923 = vmatpush1.msra.mxu0 %v439
    %2924 = vmatprep.subr.mxu0 %v436
    %2925 = vmatpush1.msra.mxu0 %v435
    %2926 = vmatprep.subr.mxu0 %v432
    %2927 = vmatpush1.msra.mxu0 %v431
    %2928 = vmatprep.subr.mxu0 %v428
    %2929 = vmatpush1.msra.mxu0 %v427
    %2930 = vmatprep.subr.mxu0 %v424
    %2931 = vmatpush1.msra.mxu0 %v423
    %2932 = vmatprep.subr.mxu0 %v420
    %2933 = vmatpush1.msra.mxu0 %v419
    %2934 = vmatprep.subr.mxu0 %v416
    %2935 = vmatpush1.msra.mxu0 %v415
    %2936 = vmatprep.subr.mxu0 %v412
    %2937 = vmatpush1.msra.mxu0 %v411
    %2938 = vmatprep.subr.mxu0 0.0
    %2939 = vmatpush2.msra.mxu0 0.0
    %2940 = vmatprep.subr.mxu0 0.0
    %2941 = vmatpush2.msra.mxu0 0.0
    %2942 = vmatprep.subr.mxu0 0.0
    %2943 = vmatpush2.msra.mxu0 0.0
    %2944 = vmatprep.subr.mxu0 0.0
    %2945 = vmatpush2.msra.mxu0 0.0
    %2946 = vmatprep.subr.mxu0 0.0
    %2947 = vmatpush2.msra.mxu0 0.0
    %2948 = vmatprep.subr.mxu0 0.0
    %2949 = vmatpush2.msra.mxu0 0.0
    %2950 = vmatprep.subr.mxu0 0.0
    %2951 = vmatpush2.msra.mxu0 0.0
    %2952 = vmatprep.subr.mxu0 0.0
    %2953 = vmatpush2.msra.mxu0 0.0
    %2954 = vmatprep.subr.mxu0 0.0
    %2955 = vmatpush2.msra.mxu0 0.0
    %2956 = vmatprep.subr.mxu0 0.0
    %2957 = vmatpush2.msra.mxu0 0.0
    %2958 = vmatprep.subr.mxu0 0.0
    %2959 = vmatpush2.msra.mxu0 0.0
    %2960 = vmatprep.subr.mxu0 0.0
    %2961 = vmatpush2.msra.mxu0 0.0
    %2962 = vmatprep.subr.mxu0 0.0
    %2963 = vmatpush2.msra.mxu0 0.0
    %2964 = vmatprep.subr.mxu0 0.0
    %2965 = vmatpush2.msra.mxu0 0.0
    %2966 = vmatprep.subr.mxu0 0.0
    %2967 = vmatpush2.msra.mxu0 0.0
    %2968 = vmatprep.subr.mxu0 0.0
    %2969 = vmatpush2.msra.mxu0 0.0
    %2970 = vmatprep.mubr.f32.mxu0 0.0
    %2971 = vmatmul.mubr.f32.gmra.mxu0 %v2337
    %v2972 = vpop.f32.mrf.mxu0
    %v2973 = vadd.f32 %v841, %v2972
    %v2974 = vpop.f32.mrf.mxu0
    %v2975 = vadd.f32 %v845, %v2974
    %2976 = vdwg.mxu0
    %2977 = vmatprep.subr.mxu0 %v406
    %2978 = vmatpush1.msra.mxu0 %v405
    %2979 = vmatprep.subr.mxu0 %v402
    %2980 = vmatpush1.msra.mxu0 %v401
    %2981 = vmatprep.subr.mxu0 %v398
    %2982 = vmatpush1.msra.mxu0 %v397
    %2983 = vmatprep.subr.mxu0 %v394
    %2984 = vmatpush1.msra.mxu0 %v393
    %2985 = vmatprep.subr.mxu0 %v390
    %2986 = vmatpush1.msra.mxu0 %v389
    %2987 = vmatprep.subr.mxu0 %v386
    %2988 = vmatpush1.msra.mxu0 %v385
    %2989 = vmatprep.subr.mxu0 %v382
    %2990 = vmatpush1.msra.mxu0 %v381
    %2991 = vmatprep.subr.mxu0 %v378
    %2992 = vmatpush1.msra.mxu0 %v377
    %2993 = vmatprep.subr.mxu0 %v374
    %2994 = vmatpush1.msra.mxu0 %v373
    %2995 = vmatprep.subr.mxu0 %v370
    %2996 = vmatpush1.msra.mxu0 %v369
    %2997 = vmatprep.subr.mxu0 %v366
    %2998 = vmatpush1.msra.mxu0 %v365
    %2999 = vmatprep.subr.mxu0 %v362
    %3000 = vmatpush1.msra.mxu0 %v361
    %3001 = vmatprep.subr.mxu0 %v358
    %3002 = vmatpush1.msra.mxu0 %v357
    %3003 = vmatprep.subr.mxu0 %v354
    %3004 = vmatpush1.msra.mxu0 %v353
    %3005 = vmatprep.subr.mxu0 %v350
    %3006 = vmatpush1.msra.mxu0 %v349
    %3007 = vmatprep.subr.mxu0 %v346
    %3008 = vmatpush1.msra.mxu0 %v345
    %3009 = vmatprep.subr.mxu0 0.0
    %3010 = vmatpush2.msra.mxu0 0.0
    %3011 = vmatprep.subr.mxu0 0.0
    %3012 = vmatpush2.msra.mxu0 0.0
    %3013 = vmatprep.subr.mxu0 0.0
    %3014 = vmatpush2.msra.mxu0 0.0
    %3015 = vmatprep.subr.mxu0 0.0
    %3016 = vmatpush2.msra.mxu0 0.0
    %3017 = vmatprep.subr.mxu0 0.0
    %3018 = vmatpush2.msra.mxu0 0.0
    %3019 = vmatprep.subr.mxu0 0.0
    %3020 = vmatpush2.msra.mxu0 0.0
    %3021 = vmatprep.subr.mxu0 0.0
    %3022 = vmatpush2.msra.mxu0 0.0
    %3023 = vmatprep.subr.mxu0 0.0
    %3024 = vmatpush2.msra.mxu0 0.0
    %3025 = vmatprep.subr.mxu0 0.0
    %3026 = vmatpush2.msra.mxu0 0.0
    %3027 = vmatprep.subr.mxu0 0.0
    %3028 = vmatpush2.msra.mxu0 0.0
    %3029 = vmatprep.subr.mxu0 0.0
    %3030 = vmatpush2.msra.mxu0 0.0
    %3031 = vmatprep.subr.mxu0 0.0
    %3032 = vmatpush2.msra.mxu0 0.0
    %3033 = vmatprep.subr.mxu0 0.0
    %3034 = vmatpush2.msra.mxu0 0.0
    %3035 = vmatprep.subr.mxu0 0.0
    %3036 = vmatpush2.msra.mxu0 0.0
    %3037 = vmatprep.subr.mxu0 0.0
    %3038 = vmatpush2.msra.mxu0 0.0
    %3039 = vmatprep.subr.mxu0 0.0
    %3040 = vmatpush2.msra.mxu0 0.0
    %3041 = vmatprep.mubr.f32.mxu0 0.0
    %3042 = vmatmul.mubr.f32.gmra.mxu0 %v2649
    %v3043 = vpop.f32.mrf.mxu0
    %v3044 = vadd.f32 0.0, %v3043
    %v3045 = vpop.f32.mrf.mxu0
    %v3046 = vadd.f32 0.0, %v3045
    %3047 = vdwg.mxu0
    %3048 = vmatprep.subr.mxu0 %v408
    %3049 = vmatpush1.msra.mxu0 %v407
    %3050 = vmatprep.subr.mxu0 %v404
    %3051 = vmatpush1.msra.mxu0 %v403
    %3052 = vmatprep.subr.mxu0 %v400
    %3053 = vmatpush1.msra.mxu0 %v399
    %3054 = vmatprep.subr.mxu0 %v396
    %3055 = vmatpush1.msra.mxu0 %v395
    %3056 = vmatprep.subr.mxu0 %v392
    %3057 = vmatpush1.msra.mxu0 %v391
    %3058 = vmatprep.subr.mxu0 %v388
    %3059 = vmatpush1.msra.mxu0 %v387
    %3060 = vmatprep.subr.mxu0 %v384
    %3061 = vmatpush1.msra.mxu0 %v383
    %3062 = vmatprep.subr.mxu0 %v380
    %3063 = vmatpush1.msra.mxu0 %v379
    %3064 = vmatprep.subr.mxu0 %v376
    %3065 = vmatpush1.msra.mxu0 %v375
    %3066 = vmatprep.subr.mxu0 %v372
    %3067 = vmatpush1.msra.mxu0 %v371
    %3068 = vmatprep.subr.mxu0 %v368
    %3069 = vmatpush1.msra.mxu0 %v367
    %3070 = vmatprep.subr.mxu0 %v364
    %3071 = vmatpush1.msra.mxu0 %v363
    %3072 = vmatprep.subr.mxu0 %v360
    %3073 = vmatpush1.msra.mxu0 %v359
    %3074 = vmatprep.subr.mxu0 %v356
    %3075 = vmatpush1.msra.mxu0 %v355
    %3076 = vmatprep.subr.mxu0 %v352
    %3077 = vmatpush1.msra.mxu0 %v351
    %3078 = vmatprep.subr.mxu0 %v348
    %3079 = vmatpush1.msra.mxu0 %v347
    %3080 = vmatprep.subr.mxu0 0.0
    %3081 = vmatpush2.msra.mxu0 0.0
    %3082 = vmatprep.subr.mxu0 0.0
    %3083 = vmatpush2.msra.mxu0 0.0
    %3084 = vmatprep.subr.mxu0 0.0
    %3085 = vmatpush2.msra.mxu0 0.0
    %3086 = vmatprep.subr.mxu0 0.0
    %3087 = vmatpush2.msra.mxu0 0.0
    %3088 = vmatprep.subr.mxu0 0.0
    %3089 = vmatpush2.msra.mxu0 0.0
    %3090 = vmatprep.subr.mxu0 0.0
    %3091 = vmatpush2.msra.mxu0 0.0
    %3092 = vmatprep.subr.mxu0 0.0
    %3093 = vmatpush2.msra.mxu0 0.0
    %3094 = vmatprep.subr.mxu0 0.0
    %3095 = vmatpush2.msra.mxu0 0.0
    %3096 = vmatprep.subr.mxu0 0.0
    %3097 = vmatpush2.msra.mxu0 0.0
    %3098 = vmatprep.subr.mxu0 0.0
    %3099 = vmatpush2.msra.mxu0 0.0
    %3100 = vmatprep.subr.mxu0 0.0
    %3101 = vmatpush2.msra.mxu0 0.0
    %3102 = vmatprep.subr.mxu0 0.0
    %3103 = vmatpush2.msra.mxu0 0.0
    %3104 = vmatprep.subr.mxu0 0.0
    %3105 = vmatpush2.msra.mxu0 0.0
    %3106 = vmatprep.subr.mxu0 0.0
    %3107 = vmatpush2.msra.mxu0 0.0
    %3108 = vmatprep.subr.mxu0 0.0
    %3109 = vmatpush2.msra.mxu0 0.0
    %3110 = vmatprep.subr.mxu0 0.0
    %3111 = vmatpush2.msra.mxu0 0.0
    %3112 = vmatprep.mubr.f32.mxu0 0.0
    %3113 = vmatmul.mubr.f32.gmra.mxu0 %v2649
    %v3114 = vpop.f32.mrf.mxu0
    %v3115 = vadd.f32 0.0, %v3114
    %v3116 = vpop.f32.mrf.mxu0
    %v3117 = vadd.f32 0.0, %v3116
    %3118 = vdwg.mxu0
    %v3119 = vadd.f32 %v2902, %v3044
    %v3120 = vadd.f32 %v2904, %v3046
    %v3121 = vadd.f32 %v2973, %v3115
    %v3122 = vadd.f32 %v2975, %v3117
    %v3123 = vxor.u32 %v3119, 2147483648
    %v3124 = vxor.u32 %v3120, 2147483648
    %v3125 = vxor.u32 %v3121, 2147483648
    %v3126 = vmul.f32 %v3123, 1.442695
    %v3127 = vpow.pop %v3126
    %v3128 = vmul.f32 %v3124, 1.442695
    %v3129 = vpow.pop %v3128
    %v3130 = vmul.f32 %v3125, 1.442695
    %v3131 = vpow.pop %v3130
    %v3132 = vadd.f32 %v3127, 1.0
    %v3133 = vadd.f32 %v3129, 1.0
    %v3134 = vadd.f32 %v3131, 1.0
    %v3135 = vrcp.pop %v3132
    %v3136 = vmul.f32 1.0, %v3135
    %v3137 = vrcp.pop %v3133
    %v3138 = vmul.f32 1.0, %v3137
    %v3139 = vrcp.pop %v3134
    %v3140 = vmul.f32 1.0, %v3139
    %v3141 = vtanh.pop %v3122
    %v3142 = vmul.f32 %v3138, %v2647
    %v3143 = vmul.f32 %v3136, %v3141
    %v3144 = vadd.f32 %v3142, %v3143
    %v3145 = vtanh.pop %v3144
    %v3146 = vmul.f32 %v3140, %v3145
    %v3148 = vrot.slane %v2834, 2
    %3150 = vmatprep.subr.mxu0 %v342
    %3151 = vmatpush1.msra.mxu0 %v341
    %3152 = vmatprep.subr.mxu0 %v338
    %3153 = vmatpush1.msra.mxu0 %v337
    %3154 = vmatprep.subr.mxu0 %v334
    %3155 = vmatpush1.msra.mxu0 %v333
    %3156 = vmatprep.subr.mxu0 %v330
    %3157 = vmatpush1.msra.mxu0 %v329
    %3158 = vmatprep.subr.mxu0 %v326
    %3159 = vmatpush1.msra.mxu0 %v325
    %3160 = vmatprep.subr.mxu0 %v322
    %3161 = vmatpush1.msra.mxu0 %v321
    %3162 = vmatprep.subr.mxu0 %v318
    %3163 = vmatpush1.msra.mxu0 %v317
    %3164 = vmatprep.subr.mxu0 %v314
    %3165 = vmatpush1.msra.mxu0 %v313
    %3166 = vmatprep.subr.mxu0 %v310
    %3167 = vmatpush1.msra.mxu0 %v309
    %3168 = vmatprep.subr.mxu0 %v306
    %3169 = vmatpush1.msra.mxu0 %v305
    %3170 = vmatprep.subr.mxu0 %v302
    %3171 = vmatpush1.msra.mxu0 %v301
    %3172 = vmatprep.subr.mxu0 %v298
    %3173 = vmatpush1.msra.mxu0 %v297
    %3174 = vmatprep.subr.mxu0 %v294
    %3175 = vmatpush1.msra.mxu0 %v293
    %3176 = vmatprep.subr.mxu0 %v290
    %3177 = vmatpush1.msra.mxu0 %v289
    %3178 = vmatprep.subr.mxu0 %v286
    %3179 = vmatpush1.msra.mxu0 %v285
    %3180 = vmatprep.subr.mxu0 %v282
    %3181 = vmatpush1.msra.mxu0 %v281
    %3182 = vmatprep.subr.mxu0 0.0
    %3183 = vmatpush2.msra.mxu0 0.0
    %3184 = vmatprep.subr.mxu0 0.0
    %3185 = vmatpush2.msra.mxu0 0.0
    %3186 = vmatprep.subr.mxu0 0.0
    %3187 = vmatpush2.msra.mxu0 0.0
    %3188 = vmatprep.subr.mxu0 0.0
    %3189 = vmatpush2.msra.mxu0 0.0
    %3190 = vmatprep.subr.mxu0 0.0
    %3191 = vmatpush2.msra.mxu0 0.0
    %3192 = vmatprep.subr.mxu0 0.0
    %3193 = vmatpush2.msra.mxu0 0.0
    %3194 = vmatprep.subr.mxu0 0.0
    %3195 = vmatpush2.msra.mxu0 0.0
    %3196 = vmatprep.subr.mxu0 0.0
    %3197 = vmatpush2.msra.mxu0 0.0
    %3198 = vmatprep.subr.mxu0 0.0
    %3199 = vmatpush2.msra.mxu0 0.0
    %3200 = vmatprep.subr.mxu0 0.0
    %3201 = vmatpush2.msra.mxu0 0.0
    %3202 = vmatprep.subr.mxu0 0.0
    %3203 = vmatpush2.msra.mxu0 0.0
    %3204 = vmatprep.subr.mxu0 0.0
    %3205 = vmatpush2.msra.mxu0 0.0
    %3206 = vmatprep.subr.mxu0 0.0
    %3207 = vmatpush2.msra.mxu0 0.0
    %3208 = vmatprep.subr.mxu0 0.0
    %3209 = vmatpush2.msra.mxu0 0.0
    %3210 = vmatprep.subr.mxu0 0.0
    %3211 = vmatpush2.msra.mxu0 0.0
    %3212 = vmatprep.subr.mxu0 0.0
    %3213 = vmatpush2.msra.mxu0 0.0
    %3214 = vmatprep.mubr.f32.mxu0 0.0
    %3215 = vmatmul.mubr.f32.gmra.mxu0 %v3148
    %v3216 = vpop.f32.mrf.mxu0
    %v3217 = vadd.f32 0.0, %v3216
    %v3218 = vpop.f32.mrf.mxu0
    %v3219 = vadd.f32 0.0, %v3218
    %3220 = vdwg.mxu0
    %3221 = vmatprep.subr.mxu0 %v344
    %3222 = vmatpush1.msra.mxu0 %v343
    %3223 = vmatprep.subr.mxu0 %v340
    %3224 = vmatpush1.msra.mxu0 %v339
    %3225 = vmatprep.subr.mxu0 %v336
    %3226 = vmatpush1.msra.mxu0 %v335
    %3227 = vmatprep.subr.mxu0 %v332
    %3228 = vmatpush1.msra.mxu0 %v331
    %3229 = vmatprep.subr.mxu0 %v328
    %3230 = vmatpush1.msra.mxu0 %v327
    %3231 = vmatprep.subr.mxu0 %v324
    %3232 = vmatpush1.msra.mxu0 %v323
    %3233 = vmatprep.subr.mxu0 %v320
    %3234 = vmatpush1.msra.mxu0 %v319
    %3235 = vmatprep.subr.mxu0 %v316
    %3236 = vmatpush1.msra.mxu0 %v315
    %3237 = vmatprep.subr.mxu0 %v312
    %3238 = vmatpush1.msra.mxu0 %v311
    %3239 = vmatprep.subr.mxu0 %v308
    %3240 = vmatpush1.msra.mxu0 %v307
    %3241 = vmatprep.subr.mxu0 %v304
    %3242 = vmatpush1.msra.mxu0 %v303
    %3243 = vmatprep.subr.mxu0 %v300
    %3244 = vmatpush1.msra.mxu0 %v299
    %3245 = vmatprep.subr.mxu0 %v296
    %3246 = vmatpush1.msra.mxu0 %v295
    %3247 = vmatprep.subr.mxu0 %v292
    %3248 = vmatpush1.msra.mxu0 %v291
    %3249 = vmatprep.subr.mxu0 %v288
    %3250 = vmatpush1.msra.mxu0 %v287
    %3251 = vmatprep.subr.mxu0 %v284
    %3252 = vmatpush1.msra.mxu0 %v283
    %3253 = vmatprep.subr.mxu0 0.0
    %3254 = vmatpush2.msra.mxu0 0.0
    %3255 = vmatprep.subr.mxu0 0.0
    %3256 = vmatpush2.msra.mxu0 0.0
    %3257 = vmatprep.subr.mxu0 0.0
    %3258 = vmatpush2.msra.mxu0 0.0
    %3259 = vmatprep.subr.mxu0 0.0
    %3260 = vmatpush2.msra.mxu0 0.0
    %3261 = vmatprep.subr.mxu0 0.0
    %3262 = vmatpush2.msra.mxu0 0.0
    %3263 = vmatprep.subr.mxu0 0.0
    %3264 = vmatpush2.msra.mxu0 0.0
    %3265 = vmatprep.subr.mxu0 0.0
    %3266 = vmatpush2.msra.mxu0 0.0
    %3267 = vmatprep.subr.mxu0 0.0
    %3268 = vmatpush2.msra.mxu0 0.0
    %3269 = vmatprep.subr.mxu0 0.0
    %3270 = vmatpush2.msra.mxu0 0.0
    %3271 = vmatprep.subr.mxu0 0.0
    %3272 = vmatpush2.msra.mxu0 0.0
    %3273 = vmatprep.subr.mxu0 0.0
    %3274 = vmatpush2.msra.mxu0 0.0
    %3275 = vmatprep.subr.mxu0 0.0
    %3276 = vmatpush2.msra.mxu0 0.0
    %3277 = vmatprep.subr.mxu0 0.0
    %3278 = vmatpush2.msra.mxu0 0.0
    %3279 = vmatprep.subr.mxu0 0.0
    %3280 = vmatpush2.msra.mxu0 0.0
    %3281 = vmatprep.subr.mxu0 0.0
    %3282 = vmatpush2.msra.mxu0 0.0
    %3283 = vmatprep.subr.mxu0 0.0
    %3284 = vmatpush2.msra.mxu0 0.0
    %3285 = vmatprep.mubr.f32.mxu0 0.0
    %3286 = vmatmul.mubr.f32.gmra.mxu0 %v3148
    %v3287 = vpop.f32.mrf.mxu0
    %v3288 = vadd.f32 0.0, %v3287
    %v3289 = vpop.f32.mrf.mxu0
    %v3290 = vadd.f32 0.0, %v3289
    %3291 = vdwg.mxu0
    %v3296 = vrot.slane %v3217, 4
    %v3297 = vrot.slane %v3219, 4
    %v3298 = vrot.slane %v3288, 4
    %v3299 = vrot.slane %v3290, 4
    %v3304 = vadd.f32 %v200, %v3296
    %v3305 = vadd.f32 %v202, %v3297
    %v3306 = vadd.f32 %v277, %v3298
    %v3307 = vadd.f32 %v279, %v3299
    %v3308 = vxor.u32 %v3304, 2147483648
    %v3309 = vxor.u32 %v3305, 2147483648
    %v3310 = vxor.u32 %v3306, 2147483648
    %v3311 = vmul.f32 %v3308, 1.442695
    %v3312 = vpow.pop %v3311
    %v3313 = vmul.f32 %v3309, 1.442695
    %v3314 = vpow.pop %v3313
    %v3315 = vmul.f32 %v3310, 1.442695
    %v3316 = vpow.pop %v3315
    %v3317 = vadd.f32 %v3312, 1.0
    %v3318 = vadd.f32 %v3314, 1.0
    %v3319 = vadd.f32 %v3316, 1.0
    %v3320 = vrcp.pop %v3317
    %v3321 = vmul.f32 1.0, %v3320
    %v3322 = vrcp.pop %v3318
    %v3323 = vmul.f32 1.0, %v3322
    %v3324 = vrcp.pop %v3319
    %v3325 = vmul.f32 1.0, %v3324
    %v3326 = vtanh.pop %v3307
    %v3328 = vrot.slane %v2832, 6
    %v3330 = vmul.f32 %v3323, %v3328
    %v3331 = vmul.f32 %v3321, %v3326
    %v3332 = vadd.f32 %v3330, %v3331
    %v3333 = vtanh.pop %v3332
    %v3334 = vmul.f32 %v3325, %v3333
    %3335 = vmatprep.subr.mxu0 %v470
    %3336 = vmatpush1.msra.mxu0 %v469
    %3337 = vmatprep.subr.mxu0 %v466
    %3338 = vmatpush1.msra.mxu0 %v465
    %3339 = vmatprep.subr.mxu0 %v462
    %3340 = vmatpush1.msra.mxu0 %v461
    %3341 = vmatprep.subr.mxu0 %v458
    %3342 = vmatpush1.msra.mxu0 %v457
    %3343 = vmatprep.subr.mxu0 %v454
    %3344 = vmatpush1.msra.mxu0 %v453
    %3345 = vmatprep.subr.mxu0 %v450
    %3346 = vmatpush1.msra.mxu0 %v449
    %3347 = vmatprep.subr.mxu0 %v446
    %3348 = vmatpush1.msra.mxu0 %v445
    %3349 = vmatprep.subr.mxu0 %v442
    %3350 = vmatpush1.msra.mxu0 %v441
    %3351 = vmatprep.subr.mxu0 %v438
    %3352 = vmatpush1.msra.mxu0 %v437
    %3353 = vmatprep.subr.mxu0 %v434
    %3354 = vmatpush1.msra.mxu0 %v433
    %3355 = vmatprep.subr.mxu0 %v430
    %3356 = vmatpush1.msra.mxu0 %v429
    %3357 = vmatprep.subr.mxu0 %v426
    %3358 = vmatpush1.msra.mxu0 %v425
    %3359 = vmatprep.subr.mxu0 %v422
    %3360 = vmatpush1.msra.mxu0 %v421
    %3361 = vmatprep.subr.mxu0 %v418
    %3362 = vmatpush1.msra.mxu0 %v417
    %3363 = vmatprep.subr.mxu0 %v414
    %3364 = vmatpush1.msra.mxu0 %v413
    %3365 = vmatprep.subr.mxu0 %v410
    %3366 = vmatpush1.msra.mxu0 %v409
    %3367 = vmatprep.subr.mxu0 0.0
    %3368 = vmatpush2.msra.mxu0 0.0
    %3369 = vmatprep.subr.mxu0 0.0
    %3370 = vmatpush2.msra.mxu0 0.0
    %3371 = vmatprep.subr.mxu0 0.0
    %3372 = vmatpush2.msra.mxu0 0.0
    %3373 = vmatprep.subr.mxu0 0.0
    %3374 = vmatpush2.msra.mxu0 0.0
    %3375 = vmatprep.subr.mxu0 0.0
    %3376 = vmatpush2.msra.mxu0 0.0
    %3377 = vmatprep.subr.mxu0 0.0
    %3378 = vmatpush2.msra.mxu0 0.0
    %3379 = vmatprep.subr.mxu0 0.0
    %3380 = vmatpush2.msra.mxu0 0.0
    %3381 = vmatprep.subr.mxu0 0.0
    %3382 = vmatpush2.msra.mxu0 0.0
    %3383 = vmatprep.subr.mxu0 0.0
    %3384 = vmatpush2.msra.mxu0 0.0
    %3385 = vmatprep.subr.mxu0 0.0
    %3386 = vmatpush2.msra.mxu0 0.0
    %3387 = vmatprep.subr.mxu0 0.0
    %3388 = vmatpush2.msra.mxu0 0.0
    %3389 = vmatprep.subr.mxu0 0.0
    %3390 = vmatpush2.msra.mxu0 0.0
    %3391 = vmatprep.subr.mxu0 0.0
    %3392 = vmatpush2.msra.mxu0 0.0
    %3393 = vmatprep.subr.mxu0 0.0
    %3394 = vmatpush2.msra.mxu0 0.0
    %3395 = vmatprep.subr.mxu0 0.0
    %3396 = vmatpush2.msra.mxu0 0.0
    %3397 = vmatprep.subr.mxu0 0.0
    %3398 = vmatpush2.msra.mxu0 0.0
    %3399 = vmatprep.mubr.f32.mxu0 0.0
    %3400 = vmatmul.mubr.f32.gmra.mxu0 %v3148
    %v3401 = vpop.f32.mrf.mxu0
    %v3402 = vadd.f32 %v833, %v3401
    %v3403 = vpop.f32.mrf.mxu0
    %v3404 = vadd.f32 %v837, %v3403
    %3405 = vdwg.mxu0
    %3406 = vmatprep.subr.mxu0 %v472
    %3407 = vmatpush1.msra.mxu0 %v471
    %3408 = vmatprep.subr.mxu0 %v468
    %3409 = vmatpush1.msra.mxu0 %v467
    %3410 = vmatprep.subr.mxu0 %v464
    %3411 = vmatpush1.msra.mxu0 %v463
    %3412 = vmatprep.subr.mxu0 %v460
    %3413 = vmatpush1.msra.mxu0 %v459
    %3414 = vmatprep.subr.mxu0 %v456
    %3415 = vmatpush1.msra.mxu0 %v455
    %3416 = vmatprep.subr.mxu0 %v452
    %3417 = vmatpush1.msra.mxu0 %v451
    %3418 = vmatprep.subr.mxu0 %v448
    %3419 = vmatpush1.msra.mxu0 %v447
    %3420 = vmatprep.subr.mxu0 %v444
    %3421 = vmatpush1.msra.mxu0 %v443
    %3422 = vmatprep.subr.mxu0 %v440
    %3423 = vmatpush1.msra.mxu0 %v439
    %3424 = vmatprep.subr.mxu0 %v436
    %3425 = vmatpush1.msra.mxu0 %v435
    %3426 = vmatprep.subr.mxu0 %v432
    %3427 = vmatpush1.msra.mxu0 %v431
    %3428 = vmatprep.subr.mxu0 %v428
    %3429 = vmatpush1.msra.mxu0 %v427
    %3430 = vmatprep.subr.mxu0 %v424
    %3431 = vmatpush1.msra.mxu0 %v423
    %3432 = vmatprep.subr.mxu0 %v420
    %3433 = vmatpush1.msra.mxu0 %v419
    %3434 = vmatprep.subr.mxu0 %v416
    %3435 = vmatpush1.msra.mxu0 %v415
    %3436 = vmatprep.subr.mxu0 %v412
    %3437 = vmatpush1.msra.mxu0 %v411
    %3438 = vmatprep.subr.mxu0 0.0
    %3439 = vmatpush2.msra.mxu0 0.0
    %3440 = vmatprep.subr.mxu0 0.0
    %3441 = vmatpush2.msra.mxu0 0.0
    %3442 = vmatprep.subr.mxu0 0.0
    %3443 = vmatpush2.msra.mxu0 0.0
    %3444 = vmatprep.subr.mxu0 0.0
    %3445 = vmatpush2.msra.mxu0 0.0
    %3446 = vmatprep.subr.mxu0 0.0
    %3447 = vmatpush2.msra.mxu0 0.0
    %3448 = vmatprep.subr.mxu0 0.0
    %3449 = vmatpush2.msra.mxu0 0.0
    %3450 = vmatprep.subr.mxu0 0.0
    %3451 = vmatpush2.msra.mxu0 0.0
    %3452 = vmatprep.subr.mxu0 0.0
    %3453 = vmatpush2.msra.mxu0 0.0
    %3454 = vmatprep.subr.mxu0 0.0
    %3455 = vmatpush2.msra.mxu0 0.0
    %3456 = vmatprep.subr.mxu0 0.0
    %3457 = vmatpush2.msra.mxu0 0.0
    %3458 = vmatprep.subr.mxu0 0.0
    %3459 = vmatpush2.msra.mxu0 0.0
    %3460 = vmatprep.subr.mxu0 0.0
    %3461 = vmatpush2.msra.mxu0 0.0
    %3462 = vmatprep.subr.mxu0 0.0
    %3463 = vmatpush2.msra.mxu0 0.0
    %3464 = vmatprep.subr.mxu0 0.0
    %3465 = vmatpush2.msra.mxu0 0.0
    %3466 = vmatprep.subr.mxu0 0.0
    %3467 = vmatpush2.msra.mxu0 0.0
    %3468 = vmatprep.subr.mxu0 0.0
    %3469 = vmatpush2.msra.mxu0 0.0
    %3470 = vmatprep.mubr.f32.mxu0 0.0
    %3471 = vmatmul.mubr.f32.gmra.mxu0 %v3148
    %v3472 = vpop.f32.mrf.mxu0
    %v3473 = vadd.f32 %v841, %v3472
    %v3474 = vpop.f32.mrf.mxu0
    %v3475 = vadd.f32 %v845, %v3474
    %3476 = vdwg.mxu0
    %3477 = vmatprep.subr.mxu0 %v406
    %3478 = vmatpush1.msra.mxu0 %v405
    %3479 = vmatprep.subr.mxu0 %v402
    %3480 = vmatpush1.msra.mxu0 %v401
    %3481 = vmatprep.subr.mxu0 %v398
    %3482 = vmatpush1.msra.mxu0 %v397
    %3483 = vmatprep.subr.mxu0 %v394
    %3484 = vmatpush1.msra.mxu0 %v393
    %3485 = vmatprep.subr.mxu0 %v390
    %3486 = vmatpush1.msra.mxu0 %v389
    %3487 = vmatprep.subr.mxu0 %v386
    %3488 = vmatpush1.msra.mxu0 %v385
    %3489 = vmatprep.subr.mxu0 %v382
    %3490 = vmatpush1.msra.mxu0 %v381
    %3491 = vmatprep.subr.mxu0 %v378
    %3492 = vmatpush1.msra.mxu0 %v377
    %3493 = vmatprep.subr.mxu0 %v374
    %3494 = vmatpush1.msra.mxu0 %v373
    %3495 = vmatprep.subr.mxu0 %v370
    %3496 = vmatpush1.msra.mxu0 %v369
    %3497 = vmatprep.subr.mxu0 %v366
    %3498 = vmatpush1.msra.mxu0 %v365
    %3499 = vmatprep.subr.mxu0 %v362
    %3500 = vmatpush1.msra.mxu0 %v361
    %3501 = vmatprep.subr.mxu0 %v358
    %3502 = vmatpush1.msra.mxu0 %v357
    %3503 = vmatprep.subr.mxu0 %v354
    %3504 = vmatpush1.msra.mxu0 %v353
    %3505 = vmatprep.subr.mxu0 %v350
    %3506 = vmatpush1.msra.mxu0 %v349
    %3507 = vmatprep.subr.mxu0 %v346
    %3508 = vmatpush1.msra.mxu0 %v345
    %3509 = vmatprep.subr.mxu0 0.0
    %3510 = vmatpush2.msra.mxu0 0.0
    %3511 = vmatprep.subr.mxu0 0.0
    %3512 = vmatpush2.msra.mxu0 0.0
    %3513 = vmatprep.subr.mxu0 0.0
    %3514 = vmatpush2.msra.mxu0 0.0
    %3515 = vmatprep.subr.mxu0 0.0
    %3516 = vmatpush2.msra.mxu0 0.0
    %3517 = vmatprep.subr.mxu0 0.0
    %3518 = vmatpush2.msra.mxu0 0.0
    %3519 = vmatprep.subr.mxu0 0.0
    %3520 = vmatpush2.msra.mxu0 0.0
    %3521 = vmatprep.subr.mxu0 0.0
    %3522 = vmatpush2.msra.mxu0 0.0
    %3523 = vmatprep.subr.mxu0 0.0
    %3524 = vmatpush2.msra.mxu0 0.0
    %3525 = vmatprep.subr.mxu0 0.0
    %3526 = vmatpush2.msra.mxu0 0.0
    %3527 = vmatprep.subr.mxu0 0.0
    %3528 = vmatpush2.msra.mxu0 0.0
    %3529 = vmatprep.subr.mxu0 0.0
    %3530 = vmatpush2.msra.mxu0 0.0
    %3531 = vmatprep.subr.mxu0 0.0
    %3532 = vmatpush2.msra.mxu0 0.0
    %3533 = vmatprep.subr.mxu0 0.0
    %3534 = vmatpush2.msra.mxu0 0.0
    %3535 = vmatprep.subr.mxu0 0.0
    %3536 = vmatpush2.msra.mxu0 0.0
    %3537 = vmatprep.subr.mxu0 0.0
    %3538 = vmatpush2.msra.mxu0 0.0
    %3539 = vmatprep.subr.mxu0 0.0
    %3540 = vmatpush2.msra.mxu0 0.0
    %3541 = vmatprep.mubr.f32.mxu0 0.0
    %3542 = vmatmul.mubr.f32.gmra.mxu0 %v3146
    %v3543 = vpop.f32.mrf.mxu0
    %v3544 = vadd.f32 0.0, %v3543
    %v3545 = vpop.f32.mrf.mxu0
    %v3546 = vadd.f32 0.0, %v3545
    %3547 = vdwg.mxu0
    %3548 = vmatprep.subr.mxu0 %v408
    %3549 = vmatpush1.msra.mxu0 %v407
    %3550 = vmatprep.subr.mxu0 %v404
    %3551 = vmatpush1.msra.mxu0 %v403
    %3552 = vmatprep.subr.mxu0 %v400
    %3553 = vmatpush1.msra.mxu0 %v399
    %3554 = vmatprep.subr.mxu0 %v396
    %3555 = vmatpush1.msra.mxu0 %v395
    %3556 = vmatprep.subr.mxu0 %v392
    %3557 = vmatpush1.msra.mxu0 %v391
    %3558 = vmatprep.subr.mxu0 %v388
    %3559 = vmatpush1.msra.mxu0 %v387
    %3560 = vmatprep.subr.mxu0 %v384
    %3561 = vmatpush1.msra.mxu0 %v383
    %3562 = vmatprep.subr.mxu0 %v380
    %3563 = vmatpush1.msra.mxu0 %v379
    %3564 = vmatprep.subr.mxu0 %v376
    %3565 = vmatpush1.msra.mxu0 %v375
    %3566 = vmatprep.subr.mxu0 %v372
    %3567 = vmatpush1.msra.mxu0 %v371
    %3568 = vmatprep.subr.mxu0 %v368
    %3569 = vmatpush1.msra.mxu0 %v367
    %3570 = vmatprep.subr.mxu0 %v364
    %3571 = vmatpush1.msra.mxu0 %v363
    %3572 = vmatprep.subr.mxu0 %v360
    %3573 = vmatpush1.msra.mxu0 %v359
    %3574 = vmatprep.subr.mxu0 %v356
    %3575 = vmatpush1.msra.mxu0 %v355
    %3576 = vmatprep.subr.mxu0 %v352
    %3577 = vmatpush1.msra.mxu0 %v351
    %3578 = vmatprep.subr.mxu0 %v348
    %3579 = vmatpush1.msra.mxu0 %v347
    %3580 = vmatprep.subr.mxu0 0.0
    %3581 = vmatpush2.msra.mxu0 0.0
    %3582 = vmatprep.subr.mxu0 0.0
    %3583 = vmatpush2.msra.mxu0 0.0
    %3584 = vmatprep.subr.mxu0 0.0
    %3585 = vmatpush2.msra.mxu0 0.0
    %3586 = vmatprep.subr.mxu0 0.0
    %3587 = vmatpush2.msra.mxu0 0.0
    %3588 = vmatprep.subr.mxu0 0.0
    %3589 = vmatpush2.msra.mxu0 0.0
    %3590 = vmatprep.subr.mxu0 0.0
    %3591 = vmatpush2.msra.mxu0 0.0
    %3592 = vmatprep.subr.mxu0 0.0
    %3593 = vmatpush2.msra.mxu0 0.0
    %3594 = vmatprep.subr.mxu0 0.0
    %3595 = vmatpush2.msra.mxu0 0.0
    %3596 = vmatprep.subr.mxu0 0.0
    %3597 = vmatpush2.msra.mxu0 0.0
    %3598 = vmatprep.subr.mxu0 0.0
    %3599 = vmatpush2.msra.mxu0 0.0
    %3600 = vmatprep.subr.mxu0 0.0
    %3601 = vmatpush2.msra.mxu0 0.0
    %3602 = vmatprep.subr.mxu0 0.0
    %3603 = vmatpush2.msra.mxu0 0.0
    %3604 = vmatprep.subr.mxu0 0.0
    %3605 = vmatpush2.msra.mxu0 0.0
    %3606 = vmatprep.subr.mxu0 0.0
    %3607 = vmatpush2.msra.mxu0 0.0
    %3608 = vmatprep.subr.mxu0 0.0
    %3609 = vmatpush2.msra.mxu0 0.0
    %3610 = vmatprep.subr.mxu0 0.0
    %3611 = vmatpush2.msra.mxu0 0.0
    %3612 = vmatprep.mubr.f32.mxu0 0.0
    %3613 = vmatmul.mubr.f32.gmra.mxu0 %v3146
    %v3614 = vpop.f32.mrf.mxu0
    %v3615 = vadd.f32 0.0, %v3614
    %v3616 = vpop.f32.mrf.mxu0
    %v3617 = vadd.f32 0.0, %v3616
    %3618 = vdwg.mxu0
    %v3619 = vadd.f32 %v3402, %v3544
    %v3620 = vadd.f32 %v3404, %v3546
    %v3621 = vadd.f32 %v3473, %v3615
    %v3622 = vadd.f32 %v3475, %v3617
    %v3623 = vxor.u32 %v3619, 2147483648
    %v3624 = vxor.u32 %v3620, 2147483648
    %v3625 = vxor.u32 %v3621, 2147483648
    %v3626 = vmul.f32 %v3623, 1.442695
    %v3627 = vpow.pop %v3626
    %v3628 = vmul.f32 %v3624, 1.442695
    %v3629 = vpow.pop %v3628
    %v3630 = vmul.f32 %v3625, 1.442695
    %v3631 = vpow.pop %v3630
    %v3632 = vadd.f32 %v3627, 1.0
    %v3633 = vadd.f32 %v3629, 1.0
    %v3634 = vadd.f32 %v3631, 1.0
    %v3635 = vrcp.pop %v3632
    %v3636 = vmul.f32 1.0, %v3635
    %v3637 = vrcp.pop %v3633
    %v3638 = vmul.f32 1.0, %v3637
    %v3639 = vrcp.pop %v3634
    %v3640 = vmul.f32 1.0, %v3639
    %v3641 = vtanh.pop %v3622
    %v3642 = vmul.f32 %v3638, %v3144
    %v3643 = vmul.f32 %v3636, %v3641
    %v3644 = vadd.f32 %v3642, %v3643
    %v3645 = vtanh.pop %v3644
    %v3646 = vmul.f32 %v3640, %v3645
    %v3648 = vrot.slane %v3334, 4
    %3650 = vmatprep.subr.mxu0 %v342
    %3651 = vmatpush1.msra.mxu0 %v341
    %3652 = vmatprep.subr.mxu0 %v338
    %3653 = vmatpush1.msra.mxu0 %v337
    %3654 = vmatprep.subr.mxu0 %v334
    %3655 = vmatpush1.msra.mxu0 %v333
    %3656 = vmatprep.subr.mxu0 %v330
    %3657 = vmatpush1.msra.mxu0 %v329
    %3658 = vmatprep.subr.mxu0 %v326
    %3659 = vmatpush1.msra.mxu0 %v325
    %3660 = vmatprep.subr.mxu0 %v322
    %3661 = vmatpush1.msra.mxu0 %v321
    %3662 = vmatprep.subr.mxu0 %v318
    %3663 = vmatpush1.msra.mxu0 %v317
    %3664 = vmatprep.subr.mxu0 %v314
    %3665 = vmatpush1.msra.mxu0 %v313
    %3666 = vmatprep.subr.mxu0 %v310
    %3667 = vmatpush1.msra.mxu0 %v309
    %3668 = vmatprep.subr.mxu0 %v306
    %3669 = vmatpush1.msra.mxu0 %v305
    %3670 = vmatprep.subr.mxu0 %v302
    %3671 = vmatpush1.msra.mxu0 %v301
    %3672 = vmatprep.subr.mxu0 %v298
    %3673 = vmatpush1.msra.mxu0 %v297
    %3674 = vmatprep.subr.mxu0 %v294
    %3675 = vmatpush1.msra.mxu0 %v293
    %3676 = vmatprep.subr.mxu0 %v290
    %3677 = vmatpush1.msra.mxu0 %v289
    %3678 = vmatprep.subr.mxu0 %v286
    %3679 = vmatpush1.msra.mxu0 %v285
    %3680 = vmatprep.subr.mxu0 %v282
    %3681 = vmatpush1.msra.mxu0 %v281
    %3682 = vmatprep.subr.mxu0 0.0
    %3683 = vmatpush2.msra.mxu0 0.0
    %3684 = vmatprep.subr.mxu0 0.0
    %3685 = vmatpush2.msra.mxu0 0.0
    %3686 = vmatprep.subr.mxu0 0.0
    %3687 = vmatpush2.msra.mxu0 0.0
    %3688 = vmatprep.subr.mxu0 0.0
    %3689 = vmatpush2.msra.mxu0 0.0
    %3690 = vmatprep.subr.mxu0 0.0
    %3691 = vmatpush2.msra.mxu0 0.0
    %3692 = vmatprep.subr.mxu0 0.0
    %3693 = vmatpush2.msra.mxu0 0.0
    %3694 = vmatprep.subr.mxu0 0.0
    %3695 = vmatpush2.msra.mxu0 0.0
    %3696 = vmatprep.subr.mxu0 0.0
    %3697 = vmatpush2.msra.mxu0 0.0
    %3698 = vmatprep.subr.mxu0 0.0
    %3699 = vmatpush2.msra.mxu0 0.0
    %3700 = vmatprep.subr.mxu0 0.0
    %3701 = vmatpush2.msra.mxu0 0.0
    %3702 = vmatprep.subr.mxu0 0.0
    %3703 = vmatpush2.msra.mxu0 0.0
    %3704 = vmatprep.subr.mxu0 0.0
    %3705 = vmatpush2.msra.mxu0 0.0
    %3706 = vmatprep.subr.mxu0 0.0
    %3707 = vmatpush2.msra.mxu0 0.0
    %3708 = vmatprep.subr.mxu0 0.0
    %3709 = vmatpush2.msra.mxu0 0.0
    %3710 = vmatprep.subr.mxu0 0.0
    %3711 = vmatpush2.msra.mxu0 0.0
    %3712 = vmatprep.subr.mxu0 0.0
    %3713 = vmatpush2.msra.mxu0 0.0
    %3714 = vmatprep.mubr.f32.mxu0 0.0
    %3715 = vmatmul.mubr.f32.gmra.mxu0 %v3648
    %v3716 = vpop.f32.mrf.mxu0
    %v3717 = vadd.f32 0.0, %v3716
    %v3718 = vpop.f32.mrf.mxu0
    %v3719 = vadd.f32 0.0, %v3718
    %3720 = vdwg.mxu0
    %3721 = vmatprep.subr.mxu0 %v344
    %3722 = vmatpush1.msra.mxu0 %v343
    %3723 = vmatprep.subr.mxu0 %v340
    %3724 = vmatpush1.msra.mxu0 %v339
    %3725 = vmatprep.subr.mxu0 %v336
    %3726 = vmatpush1.msra.mxu0 %v335
    %3727 = vmatprep.subr.mxu0 %v332
    %3728 = vmatpush1.msra.mxu0 %v331
    %3729 = vmatprep.subr.mxu0 %v328
    %3730 = vmatpush1.msra.mxu0 %v327
    %3731 = vmatprep.subr.mxu0 %v324
    %3732 = vmatpush1.msra.mxu0 %v323
    %3733 = vmatprep.subr.mxu0 %v320
    %3734 = vmatpush1.msra.mxu0 %v319
    %3735 = vmatprep.subr.mxu0 %v316
    %3736 = vmatpush1.msra.mxu0 %v315
    %3737 = vmatprep.subr.mxu0 %v312
    %3738 = vmatpush1.msra.mxu0 %v311
    %3739 = vmatprep.subr.mxu0 %v308
    %3740 = vmatpush1.msra.mxu0 %v307
    %3741 = vmatprep.subr.mxu0 %v304
    %3742 = vmatpush1.msra.mxu0 %v303
    %3743 = vmatprep.subr.mxu0 %v300
    %3744 = vmatpush1.msra.mxu0 %v299
    %3745 = vmatprep.subr.mxu0 %v296
    %3746 = vmatpush1.msra.mxu0 %v295
    %3747 = vmatprep.subr.mxu0 %v292
    %3748 = vmatpush1.msra.mxu0 %v291
    %3749 = vmatprep.subr.mxu0 %v288
    %3750 = vmatpush1.msra.mxu0 %v287
    %3751 = vmatprep.subr.mxu0 %v284
    %3752 = vmatpush1.msra.mxu0 %v283
    %3753 = vmatprep.subr.mxu0 0.0
    %3754 = vmatpush2.msra.mxu0 0.0
    %3755 = vmatprep.subr.mxu0 0.0
    %3756 = vmatpush2.msra.mxu0 0.0
    %3757 = vmatprep.subr.mxu0 0.0
    %3758 = vmatpush2.msra.mxu0 0.0
    %3759 = vmatprep.subr.mxu0 0.0
    %3760 = vmatpush2.msra.mxu0 0.0
    %3761 = vmatprep.subr.mxu0 0.0
    %3762 = vmatpush2.msra.mxu0 0.0
    %3763 = vmatprep.subr.mxu0 0.0
    %3764 = vmatpush2.msra.mxu0 0.0
    %3765 = vmatprep.subr.mxu0 0.0
    %3766 = vmatpush2.msra.mxu0 0.0
    %3767 = vmatprep.subr.mxu0 0.0
    %3768 = vmatpush2.msra.mxu0 0.0
    %3769 = vmatprep.subr.mxu0 0.0
    %3770 = vmatpush2.msra.mxu0 0.0
    %3771 = vmatprep.subr.mxu0 0.0
    %3772 = vmatpush2.msra.mxu0 0.0
    %3773 = vmatprep.subr.mxu0 0.0
    %3774 = vmatpush2.msra.mxu0 0.0
    %3775 = vmatprep.subr.mxu0 0.0
    %3776 = vmatpush2.msra.mxu0 0.0
    %3777 = vmatprep.subr.mxu0 0.0
    %3778 = vmatpush2.msra.mxu0 0.0
    %3779 = vmatprep.subr.mxu0 0.0
    %3780 = vmatpush2.msra.mxu0 0.0
    %3781 = vmatprep.subr.mxu0 0.0
    %3782 = vmatpush2.msra.mxu0 0.0
    %3783 = vmatprep.subr.mxu0 0.0
    %3784 = vmatpush2.msra.mxu0 0.0
    %3785 = vmatprep.mubr.f32.mxu0 0.0
    %3786 = vmatmul.mubr.f32.gmra.mxu0 %v3648
    %v3787 = vpop.f32.mrf.mxu0
    %v3788 = vadd.f32 0.0, %v3787
    %v3789 = vpop.f32.mrf.mxu0
    %v3790 = vadd.f32 0.0, %v3789
    %3791 = vdwg.mxu0
    %v3796 = vrot.slane %v3717, 2
    %v3797 = vrot.slane %v3719, 2
    %v3798 = vrot.slane %v3788, 2
    %v3799 = vrot.slane %v3790, 2
    %v3804 = vadd.f32 %v200, %v3796
    %v3805 = vadd.f32 %v202, %v3797
    %v3806 = vadd.f32 %v277, %v3798
    %v3807 = vadd.f32 %v279, %v3799
    %v3808 = vxor.u32 %v3804, 2147483648
    %v3809 = vxor.u32 %v3805, 2147483648
    %v3810 = vxor.u32 %v3806, 2147483648
    %v3811 = vmul.f32 %v3808, 1.442695
    %v3812 = vpow.pop %v3811
    %v3813 = vmul.f32 %v3809, 1.442695
    %v3814 = vpow.pop %v3813
    %v3815 = vmul.f32 %v3810, 1.442695
    %v3816 = vpow.pop %v3815
    %v3817 = vadd.f32 %v3812, 1.0
    %v3818 = vadd.f32 %v3814, 1.0
    %v3819 = vadd.f32 %v3816, 1.0
    %v3820 = vrcp.pop %v3817
    %v3821 = vmul.f32 1.0, %v3820
    %v3822 = vrcp.pop %v3818
    %v3823 = vmul.f32 1.0, %v3822
    %v3824 = vrcp.pop %v3819
    %v3825 = vmul.f32 1.0, %v3824
    %v3826 = vtanh.pop %v3807
    %v3828 = vrot.slane %v3332, 6
    %v3830 = vmul.f32 %v3823, %v3828
    %v3831 = vmul.f32 %v3821, %v3826
    %v3832 = vadd.f32 %v3830, %v3831
    %v3833 = vtanh.pop %v3832
    %v3834 = vmul.f32 %v3825, %v3833
    %3835 = vmatprep.subr.mxu0 %v470
    %3836 = vmatpush1.msra.mxu0 %v469
    %3837 = vmatprep.subr.mxu0 %v466
    %3838 = vmatpush1.msra.mxu0 %v465
    %3839 = vmatprep.subr.mxu0 %v462
    %3840 = vmatpush1.msra.mxu0 %v461
    %3841 = vmatprep.subr.mxu0 %v458
    %3842 = vmatpush1.msra.mxu0 %v457
    %3843 = vmatprep.subr.mxu0 %v454
    %3844 = vmatpush1.msra.mxu0 %v453
    %3845 = vmatprep.subr.mxu0 %v450
    %3846 = vmatpush1.msra.mxu0 %v449
    %3847 = vmatprep.subr.mxu0 %v446
    %3848 = vmatpush1.msra.mxu0 %v445
    %3849 = vmatprep.subr.mxu0 %v442
    %3850 = vmatpush1.msra.mxu0 %v441
    %3851 = vmatprep.subr.mxu0 %v438
    %3852 = vmatpush1.msra.mxu0 %v437
    %3853 = vmatprep.subr.mxu0 %v434
    %3854 = vmatpush1.msra.mxu0 %v433
    %3855 = vmatprep.subr.mxu0 %v430
    %3856 = vmatpush1.msra.mxu0 %v429
    %3857 = vmatprep.subr.mxu0 %v426
    %3858 = vmatpush1.msra.mxu0 %v425
    %3859 = vmatprep.subr.mxu0 %v422
    %3860 = vmatpush1.msra.mxu0 %v421
    %3861 = vmatprep.subr.mxu0 %v418
    %3862 = vmatpush1.msra.mxu0 %v417
    %3863 = vmatprep.subr.mxu0 %v414
    %3864 = vmatpush1.msra.mxu0 %v413
    %3865 = vmatprep.subr.mxu0 %v410
    %3866 = vmatpush1.msra.mxu0 %v409
    %3867 = vmatprep.subr.mxu0 0.0
    %3868 = vmatpush2.msra.mxu0 0.0
    %3869 = vmatprep.subr.mxu0 0.0
    %3870 = vmatpush2.msra.mxu0 0.0
    %3871 = vmatprep.subr.mxu0 0.0
    %3872 = vmatpush2.msra.mxu0 0.0
    %3873 = vmatprep.subr.mxu0 0.0
    %3874 = vmatpush2.msra.mxu0 0.0
    %3875 = vmatprep.subr.mxu0 0.0
    %3876 = vmatpush2.msra.mxu0 0.0
    %3877 = vmatprep.subr.mxu0 0.0
    %3878 = vmatpush2.msra.mxu0 0.0
    %3879 = vmatprep.subr.mxu0 0.0
    %3880 = vmatpush2.msra.mxu0 0.0
    %3881 = vmatprep.subr.mxu0 0.0
    %3882 = vmatpush2.msra.mxu0 0.0
    %3883 = vmatprep.subr.mxu0 0.0
    %3884 = vmatpush2.msra.mxu0 0.0
    %3885 = vmatprep.subr.mxu0 0.0
    %3886 = vmatpush2.msra.mxu0 0.0
    %3887 = vmatprep.subr.mxu0 0.0
    %3888 = vmatpush2.msra.mxu0 0.0
    %3889 = vmatprep.subr.mxu0 0.0
    %3890 = vmatpush2.msra.mxu0 0.0
    %3891 = vmatprep.subr.mxu0 0.0
    %3892 = vmatpush2.msra.mxu0 0.0
    %3893 = vmatprep.subr.mxu0 0.0
    %3894 = vmatpush2.msra.mxu0 0.0
    %3895 = vmatprep.subr.mxu0 0.0
    %3896 = vmatpush2.msra.mxu0 0.0
    %3897 = vmatprep.subr.mxu0 0.0
    %3898 = vmatpush2.msra.mxu0 0.0
    %3899 = vmatprep.mubr.f32.mxu0 0.0
    %3900 = vmatmul.mubr.f32.gmra.mxu0 %v3648
    %v3901 = vpop.f32.mrf.mxu0
    %v3902 = vadd.f32 %v833, %v3901
    %v3903 = vpop.f32.mrf.mxu0
    %v3904 = vadd.f32 %v837, %v3903
    %3905 = vdwg.mxu0
    %3906 = vmatprep.subr.mxu0 %v472
    %3907 = vmatpush1.msra.mxu0 %v471
    %3908 = vmatprep.subr.mxu0 %v468
    %3909 = vmatpush1.msra.mxu0 %v467
    %3910 = vmatprep.subr.mxu0 %v464
    %3911 = vmatpush1.msra.mxu0 %v463
    %3912 = vmatprep.subr.mxu0 %v460
    %3913 = vmatpush1.msra.mxu0 %v459
    %3914 = vmatprep.subr.mxu0 %v456
    %3915 = vmatpush1.msra.mxu0 %v455
    %3916 = vmatprep.subr.mxu0 %v452
    %3917 = vmatpush1.msra.mxu0 %v451
    %3918 = vmatprep.subr.mxu0 %v448
    %3919 = vmatpush1.msra.mxu0 %v447
    %3920 = vmatprep.subr.mxu0 %v444
    %3921 = vmatpush1.msra.mxu0 %v443
    %3922 = vmatprep.subr.mxu0 %v440
    %3923 = vmatpush1.msra.mxu0 %v439
    %3924 = vmatprep.subr.mxu0 %v436
    %3925 = vmatpush1.msra.mxu0 %v435
    %3926 = vmatprep.subr.mxu0 %v432
    %3927 = vmatpush1.msra.mxu0 %v431
    %3928 = vmatprep.subr.mxu0 %v428
    %3929 = vmatpush1.msra.mxu0 %v427
    %3930 = vmatprep.subr.mxu0 %v424
    %3931 = vmatpush1.msra.mxu0 %v423
    %3932 = vmatprep.subr.mxu0 %v420
    %3933 = vmatpush1.msra.mxu0 %v419
    %3934 = vmatprep.subr.mxu0 %v416
    %3935 = vmatpush1.msra.mxu0 %v415
    %3936 = vmatprep.subr.mxu0 %v412
    %3937 = vmatpush1.msra.mxu0 %v411
    %3938 = vmatprep.subr.mxu0 0.0
    %3939 = vmatpush2.msra.mxu0 0.0
    %3940 = vmatprep.subr.mxu0 0.0
    %3941 = vmatpush2.msra.mxu0 0.0
    %3942 = vmatprep.subr.mxu0 0.0
    %3943 = vmatpush2.msra.mxu0 0.0
    %3944 = vmatprep.subr.mxu0 0.0
    %3945 = vmatpush2.msra.mxu0 0.0
    %3946 = vmatprep.subr.mxu0 0.0
    %3947 = vmatpush2.msra.mxu0 0.0
    %3948 = vmatprep.subr.mxu0 0.0
    %3949 = vmatpush2.msra.mxu0 0.0
    %3950 = vmatprep.subr.mxu0 0.0
    %3951 = vmatpush2.msra.mxu0 0.0
    %3952 = vmatprep.subr.mxu0 0.0
    %3953 = vmatpush2.msra.mxu0 0.0
    %3954 = vmatprep.subr.mxu0 0.0
    %3955 = vmatpush2.msra.mxu0 0.0
    %3956 = vmatprep.subr.mxu0 0.0
    %3957 = vmatpush2.msra.mxu0 0.0
    %3958 = vmatprep.subr.mxu0 0.0
    %3959 = vmatpush2.msra.mxu0 0.0
    %3960 = vmatprep.subr.mxu0 0.0
    %3961 = vmatpush2.msra.mxu0 0.0
    %3962 = vmatprep.subr.mxu0 0.0
    %3963 = vmatpush2.msra.mxu0 0.0
    %3964 = vmatprep.subr.mxu0 0.0
    %3965 = vmatpush2.msra.mxu0 0.0
    %3966 = vmatprep.subr.mxu0 0.0
    %3967 = vmatpush2.msra.mxu0 0.0
    %3968 = vmatprep.subr.mxu0 0.0
    %3969 = vmatpush2.msra.mxu0 0.0
    %3970 = vmatprep.mubr.f32.mxu0 0.0
    %3971 = vmatmul.mubr.f32.gmra.mxu0 %v3648
    %v3972 = vpop.f32.mrf.mxu0
    %v3973 = vadd.f32 %v841, %v3972
    %v3974 = vpop.f32.mrf.mxu0
    %v3975 = vadd.f32 %v845, %v3974
    %3976 = vdwg.mxu0
    %3977 = vmatprep.subr.mxu0 %v406
    %3978 = vmatpush1.msra.mxu0 %v405
    %3979 = vmatprep.subr.mxu0 %v402
    %3980 = vmatpush1.msra.mxu0 %v401
    %3981 = vmatprep.subr.mxu0 %v398
    %3982 = vmatpush1.msra.mxu0 %v397
    %3983 = vmatprep.subr.mxu0 %v394
    %3984 = vmatpush1.msra.mxu0 %v393
    %3985 = vmatprep.subr.mxu0 %v390
    %3986 = vmatpush1.msra.mxu0 %v389
    %3987 = vmatprep.subr.mxu0 %v386
    %3988 = vmatpush1.msra.mxu0 %v385
    %3989 = vmatprep.subr.mxu0 %v382
    %3990 = vmatpush1.msra.mxu0 %v381
    %3991 = vmatprep.subr.mxu0 %v378
    %3992 = vmatpush1.msra.mxu0 %v377
    %3993 = vmatprep.subr.mxu0 %v374
    %3994 = vmatpush1.msra.mxu0 %v373
    %3995 = vmatprep.subr.mxu0 %v370
    %3996 = vmatpush1.msra.mxu0 %v369
    %3997 = vmatprep.subr.mxu0 %v366
    %3998 = vmatpush1.msra.mxu0 %v365
    %3999 = vmatprep.subr.mxu0 %v362
    %4000 = vmatpush1.msra.mxu0 %v361
    %4001 = vmatprep.subr.mxu0 %v358
    %4002 = vmatpush1.msra.mxu0 %v357
    %4003 = vmatprep.subr.mxu0 %v354
    %4004 = vmatpush1.msra.mxu0 %v353
    %4005 = vmatprep.subr.mxu0 %v350
    %4006 = vmatpush1.msra.mxu0 %v349
    %4007 = vmatprep.subr.mxu0 %v346
    %4008 = vmatpush1.msra.mxu0 %v345
    %4009 = vmatprep.subr.mxu0 0.0
    %4010 = vmatpush2.msra.mxu0 0.0
    %4011 = vmatprep.subr.mxu0 0.0
    %4012 = vmatpush2.msra.mxu0 0.0
    %4013 = vmatprep.subr.mxu0 0.0
    %4014 = vmatpush2.msra.mxu0 0.0
    %4015 = vmatprep.subr.mxu0 0.0
    %4016 = vmatpush2.msra.mxu0 0.0
    %4017 = vmatprep.subr.mxu0 0.0
    %4018 = vmatpush2.msra.mxu0 0.0
    %4019 = vmatprep.subr.mxu0 0.0
    %4020 = vmatpush2.msra.mxu0 0.0
    %4021 = vmatprep.subr.mxu0 0.0
    %4022 = vmatpush2.msra.mxu0 0.0
    %4023 = vmatprep.subr.mxu0 0.0
    %4024 = vmatpush2.msra.mxu0 0.0
    %4025 = vmatprep.subr.mxu0 0.0
    %4026 = vmatpush2.msra.mxu0 0.0
    %4027 = vmatprep.subr.mxu0 0.0
    %4028 = vmatpush2.msra.mxu0 0.0
    %4029 = vmatprep.subr.mxu0 0.0
    %4030 = vmatpush2.msra.mxu0 0.0
    %4031 = vmatprep.subr.mxu0 0.0
    %4032 = vmatpush2.msra.mxu0 0.0
    %4033 = vmatprep.subr.mxu0 0.0
    %4034 = vmatpush2.msra.mxu0 0.0
    %4035 = vmatprep.subr.mxu0 0.0
    %4036 = vmatpush2.msra.mxu0 0.0
    %4037 = vmatprep.subr.mxu0 0.0
    %4038 = vmatpush2.msra.mxu0 0.0
    %4039 = vmatprep.subr.mxu0 0.0
    %4040 = vmatpush2.msra.mxu0 0.0
    %4041 = vmatprep.mubr.f32.mxu0 0.0
    %4042 = vmatmul.mubr.f32.gmra.mxu0 %v3646
    %v4043 = vpop.f32.mrf.mxu0
    %v4044 = vadd.f32 0.0, %v4043
    %v4045 = vpop.f32.mrf.mxu0
    %v4046 = vadd.f32 0.0, %v4045
    %4047 = vdwg.mxu0
    %4048 = vmatprep.subr.mxu0 %v408
    %4049 = vmatpush1.msra.mxu0 %v407
    %4050 = vmatprep.subr.mxu0 %v404
    %4051 = vmatpush1.msra.mxu0 %v403
    %4052 = vmatprep.subr.mxu0 %v400
    %4053 = vmatpush1.msra.mxu0 %v399
    %4054 = vmatprep.subr.mxu0 %v396
    %4055 = vmatpush1.msra.mxu0 %v395
    %4056 = vmatprep.subr.mxu0 %v392
    %4057 = vmatpush1.msra.mxu0 %v391
    %4058 = vmatprep.subr.mxu0 %v388
    %4059 = vmatpush1.msra.mxu0 %v387
    %4060 = vmatprep.subr.mxu0 %v384
    %4061 = vmatpush1.msra.mxu0 %v383
    %4062 = vmatprep.subr.mxu0 %v380
    %4063 = vmatpush1.msra.mxu0 %v379
    %4064 = vmatprep.subr.mxu0 %v376
    %4065 = vmatpush1.msra.mxu0 %v375
    %4066 = vmatprep.subr.mxu0 %v372
    %4067 = vmatpush1.msra.mxu0 %v371
    %4068 = vmatprep.subr.mxu0 %v368
    %4069 = vmatpush1.msra.mxu0 %v367
    %4070 = vmatprep.subr.mxu0 %v364
    %4071 = vmatpush1.msra.mxu0 %v363
    %4072 = vmatprep.subr.mxu0 %v360
    %4073 = vmatpush1.msra.mxu0 %v359
    %4074 = vmatprep.subr.mxu0 %v356
    %4075 = vmatpush1.msra.mxu0 %v355
    %4076 = vmatprep.subr.mxu0 %v352
    %4077 = vmatpush1.msra.mxu0 %v351
    %4078 = vmatprep.subr.mxu0 %v348
    %4079 = vmatpush1.msra.mxu0 %v347
    %4080 = vmatprep.subr.mxu0 0.0
    %4081 = vmatpush2.msra.mxu0 0.0
    %4082 = vmatprep.subr.mxu0 0.0
    %4083 = vmatpush2.msra.mxu0 0.0
    %4084 = vmatprep.subr.mxu0 0.0
    %4085 = vmatpush2.msra.mxu0 0.0
    %4086 = vmatprep.subr.mxu0 0.0
    %4087 = vmatpush2.msra.mxu0 0.0
    %4088 = vmatprep.subr.mxu0 0.0
    %4089 = vmatpush2.msra.mxu0 0.0
    %4090 = vmatprep.subr.mxu0 0.0
    %4091 = vmatpush2.msra.mxu0 0.0
    %4092 = vmatprep.subr.mxu0 0.0
    %4093 = vmatpush2.msra.mxu0 0.0
    %4094 = vmatprep.subr.mxu0 0.0
    %4095 = vmatpush2.msra.mxu0 0.0
    %4096 = vmatprep.subr.mxu0 0.0
    %4097 = vmatpush2.msra.mxu0 0.0
    %4098 = vmatprep.subr.mxu0 0.0
    %4099 = vmatpush2.msra.mxu0 0.0
    %4100 = vmatprep.subr.mxu0 0.0
    %4101 = vmatpush2.msra.mxu0 0.0
    %4102 = vmatprep.subr.mxu0 0.0
    %4103 = vmatpush2.msra.mxu0 0.0
    %4104 = vmatprep.subr.mxu0 0.0
    %4105 = vmatpush2.msra.mxu0 0.0
    %4106 = vmatprep.subr.mxu0 0.0
    %4107 = vmatpush2.msra.mxu0 0.0
    %4108 = vmatprep.subr.mxu0 0.0
    %4109 = vmatpush2.msra.mxu0 0.0
    %4110 = vmatprep.subr.mxu0 0.0
    %4111 = vmatpush2.msra.mxu0 0.0
    %4112 = vmatprep.mubr.f32.mxu0 0.0
    %4113 = vmatmul.mubr.f32.gmra.mxu0 %v3646
    %v4114 = vpop.f32.mrf.mxu0
    %v4115 = vadd.f32 0.0, %v4114
    %v4116 = vpop.f32.mrf.mxu0
    %v4117 = vadd.f32 0.0, %v4116
    %4118 = vdwg.mxu0
    %v4119 = vadd.f32 %v3902, %v4044
    %v4120 = vadd.f32 %v3904, %v4046
    %v4121 = vadd.f32 %v3973, %v4115
    %v4122 = vadd.f32 %v3975, %v4117
    %v4123 = vxor.u32 %v4119, 2147483648
    %v4124 = vxor.u32 %v4120, 2147483648
    %v4125 = vxor.u32 %v4121, 2147483648
    %v4126 = vmul.f32 %v4123, 1.442695
    %v4127 = vpow.pop %v4126
    %v4128 = vmul.f32 %v4124, 1.442695
    %v4129 = vpow.pop %v4128
    %v4130 = vmul.f32 %v4125, 1.442695
    %v4131 = vpow.pop %v4130
    %v4132 = vadd.f32 %v4127, 1.0
    %v4133 = vadd.f32 %v4129, 1.0
    %v4134 = vadd.f32 %v4131, 1.0
    %v4135 = vrcp.pop %v4132
    %v4136 = vmul.f32 1.0, %v4135
    %v4137 = vrcp.pop %v4133
    %v4138 = vmul.f32 1.0, %v4137
    %v4139 = vrcp.pop %v4134
    %v4140 = vmul.f32 1.0, %v4139
    %v4141 = vtanh.pop %v4122
    %v4142 = vmul.f32 %v4138, %v3644
    %v4143 = vmul.f32 %v4136, %v4141
    %v4144 = vadd.f32 %v4142, %v4143
    %v4145 = vtanh.pop %v4144
    %v4146 = vmul.f32 %v4140, %v4145
    %v4148 = vrot.slane %v3834, 6
    %4150 = vmatprep.subr.mxu0 %v470
    %4151 = vmatpush1.msra.mxu0 %v469
    %4152 = vmatprep.subr.mxu0 %v466
    %4153 = vmatpush1.msra.mxu0 %v465
    %4154 = vmatprep.subr.mxu0 %v462
    %4155 = vmatpush1.msra.mxu0 %v461
    %4156 = vmatprep.subr.mxu0 %v458
    %4157 = vmatpush1.msra.mxu0 %v457
    %4158 = vmatprep.subr.mxu0 %v454
    %4159 = vmatpush1.msra.mxu0 %v453
    %4160 = vmatprep.subr.mxu0 %v450
    %4161 = vmatpush1.msra.mxu0 %v449
    %4162 = vmatprep.subr.mxu0 %v446
    %4163 = vmatpush1.msra.mxu0 %v445
    %4164 = vmatprep.subr.mxu0 %v442
    %4165 = vmatpush1.msra.mxu0 %v441
    %4166 = vmatprep.subr.mxu0 %v438
    %4167 = vmatpush1.msra.mxu0 %v437
    %4168 = vmatprep.subr.mxu0 %v434
    %4169 = vmatpush1.msra.mxu0 %v433
    %4170 = vmatprep.subr.mxu0 %v430
    %4171 = vmatpush1.msra.mxu0 %v429
    %4172 = vmatprep.subr.mxu0 %v426
    %4173 = vmatpush1.msra.mxu0 %v425
    %4174 = vmatprep.subr.mxu0 %v422
    %4175 = vmatpush1.msra.mxu0 %v421
    %4176 = vmatprep.subr.mxu0 %v418
    %4177 = vmatpush1.msra.mxu0 %v417
    %4178 = vmatprep.subr.mxu0 %v414
    %4179 = vmatpush1.msra.mxu0 %v413
    %4180 = vmatprep.subr.mxu0 %v410
    %4181 = vmatpush1.msra.mxu0 %v409
    %4182 = vmatprep.subr.mxu0 0.0
    %4183 = vmatpush2.msra.mxu0 0.0
    %4184 = vmatprep.subr.mxu0 0.0
    %4185 = vmatpush2.msra.mxu0 0.0
    %4186 = vmatprep.subr.mxu0 0.0
    %4187 = vmatpush2.msra.mxu0 0.0
    %4188 = vmatprep.subr.mxu0 0.0
    %4189 = vmatpush2.msra.mxu0 0.0
    %4190 = vmatprep.subr.mxu0 0.0
    %4191 = vmatpush2.msra.mxu0 0.0
    %4192 = vmatprep.subr.mxu0 0.0
    %4193 = vmatpush2.msra.mxu0 0.0
    %4194 = vmatprep.subr.mxu0 0.0
    %4195 = vmatpush2.msra.mxu0 0.0
    %4196 = vmatprep.subr.mxu0 0.0
    %4197 = vmatpush2.msra.mxu0 0.0
    %4198 = vmatprep.subr.mxu0 0.0
    %4199 = vmatpush2.msra.mxu0 0.0
    %4200 = vmatprep.subr.mxu0 0.0
    %4201 = vmatpush2.msra.mxu0 0.0
    %4202 = vmatprep.subr.mxu0 0.0
    %4203 = vmatpush2.msra.mxu0 0.0
    %4204 = vmatprep.subr.mxu0 0.0
    %4205 = vmatpush2.msra.mxu0 0.0
    %4206 = vmatprep.subr.mxu0 0.0
    %4207 = vmatpush2.msra.mxu0 0.0
    %4208 = vmatprep.subr.mxu0 0.0
    %4209 = vmatpush2.msra.mxu0 0.0
    %4210 = vmatprep.subr.mxu0 0.0
    %4211 = vmatpush2.msra.mxu0 0.0
    %4212 = vmatprep.subr.mxu0 0.0
    %4213 = vmatpush2.msra.mxu0 0.0
    %4214 = vmatprep.mubr.f32.mxu0 0.0
    %4215 = vmatmul.mubr.f32.gmra.mxu0 %v4148
    %v4216 = vpop.f32.mrf.mxu0
    %v4217 = vadd.f32 %v833, %v4216
    %v4218 = vpop.f32.mrf.mxu0
    %v4219 = vadd.f32 %v837, %v4218
    %4220 = vdwg.mxu0
    %4221 = vmatprep.subr.mxu0 %v472
    %4222 = vmatpush1.msra.mxu0 %v471
    %4223 = vmatprep.subr.mxu0 %v468
    %4224 = vmatpush1.msra.mxu0 %v467
    %4225 = vmatprep.subr.mxu0 %v464
    %4226 = vmatpush1.msra.mxu0 %v463
    %4227 = vmatprep.subr.mxu0 %v460
    %4228 = vmatpush1.msra.mxu0 %v459
    %4229 = vmatprep.subr.mxu0 %v456
    %4230 = vmatpush1.msra.mxu0 %v455
    %4231 = vmatprep.subr.mxu0 %v452
    %4232 = vmatpush1.msra.mxu0 %v451
    %4233 = vmatprep.subr.mxu0 %v448
    %4234 = vmatpush1.msra.mxu0 %v447
    %4235 = vmatprep.subr.mxu0 %v444
    %4236 = vmatpush1.msra.mxu0 %v443
    %4237 = vmatprep.subr.mxu0 %v440
    %4238 = vmatpush1.msra.mxu0 %v439
    %4239 = vmatprep.subr.mxu0 %v436
    %4240 = vmatpush1.msra.mxu0 %v435
    %4241 = vmatprep.subr.mxu0 %v432
    %4242 = vmatpush1.msra.mxu0 %v431
    %4243 = vmatprep.subr.mxu0 %v428
    %4244 = vmatpush1.msra.mxu0 %v427
    %4245 = vmatprep.subr.mxu0 %v424
    %4246 = vmatpush1.msra.mxu0 %v423
    %4247 = vmatprep.subr.mxu0 %v420
    %4248 = vmatpush1.msra.mxu0 %v419
    %4249 = vmatprep.subr.mxu0 %v416
    %4250 = vmatpush1.msra.mxu0 %v415
    %4251 = vmatprep.subr.mxu0 %v412
    %4252 = vmatpush1.msra.mxu0 %v411
    %4253 = vmatprep.subr.mxu0 0.0
    %4254 = vmatpush2.msra.mxu0 0.0
    %4255 = vmatprep.subr.mxu0 0.0
    %4256 = vmatpush2.msra.mxu0 0.0
    %4257 = vmatprep.subr.mxu0 0.0
    %4258 = vmatpush2.msra.mxu0 0.0
    %4259 = vmatprep.subr.mxu0 0.0
    %4260 = vmatpush2.msra.mxu0 0.0
    %4261 = vmatprep.subr.mxu0 0.0
    %4262 = vmatpush2.msra.mxu0 0.0
    %4263 = vmatprep.subr.mxu0 0.0
    %4264 = vmatpush2.msra.mxu0 0.0
    %4265 = vmatprep.subr.mxu0 0.0
    %4266 = vmatpush2.msra.mxu0 0.0
    %4267 = vmatprep.subr.mxu0 0.0
    %4268 = vmatpush2.msra.mxu0 0.0
    %4269 = vmatprep.subr.mxu0 0.0
    %4270 = vmatpush2.msra.mxu0 0.0
    %4271 = vmatprep.subr.mxu0 0.0
    %4272 = vmatpush2.msra.mxu0 0.0
    %4273 = vmatprep.subr.mxu0 0.0
    %4274 = vmatpush2.msra.mxu0 0.0
    %4275 = vmatprep.subr.mxu0 0.0
    %4276 = vmatpush2.msra.mxu0 0.0
    %4277 = vmatprep.subr.mxu0 0.0
    %4278 = vmatpush2.msra.mxu0 0.0
    %4279 = vmatprep.subr.mxu0 0.0
    %4280 = vmatpush2.msra.mxu0 0.0
    %4281 = vmatprep.subr.mxu0 0.0
    %4282 = vmatpush2.msra.mxu0 0.0
    %4283 = vmatprep.subr.mxu0 0.0
    %4284 = vmatpush2.msra.mxu0 0.0
    %4285 = vmatprep.mubr.f32.mxu0 0.0
    %4286 = vmatmul.mubr.f32.gmra.mxu0 %v4148
    %v4287 = vpop.f32.mrf.mxu0
    %v4288 = vadd.f32 %v841, %v4287
    %v4289 = vpop.f32.mrf.mxu0
    %v4290 = vadd.f32 %v845, %v4289
    %4291 = vdwg.mxu0
    %4292 = vmatprep.subr.mxu0 %v406
    %4293 = vmatpush1.msra.mxu0 %v405
    %4294 = vmatprep.subr.mxu0 %v402
    %4295 = vmatpush1.msra.mxu0 %v401
    %4296 = vmatprep.subr.mxu0 %v398
    %4297 = vmatpush1.msra.mxu0 %v397
    %4298 = vmatprep.subr.mxu0 %v394
    %4299 = vmatpush1.msra.mxu0 %v393
    %4300 = vmatprep.subr.mxu0 %v390
    %4301 = vmatpush1.msra.mxu0 %v389
    %4302 = vmatprep.subr.mxu0 %v386
    %4303 = vmatpush1.msra.mxu0 %v385
    %4304 = vmatprep.subr.mxu0 %v382
    %4305 = vmatpush1.msra.mxu0 %v381
    %4306 = vmatprep.subr.mxu0 %v378
    %4307 = vmatpush1.msra.mxu0 %v377
    %4308 = vmatprep.subr.mxu0 %v374
    %4309 = vmatpush1.msra.mxu0 %v373
    %4310 = vmatprep.subr.mxu0 %v370
    %4311 = vmatpush1.msra.mxu0 %v369
    %4312 = vmatprep.subr.mxu0 %v366
    %4313 = vmatpush1.msra.mxu0 %v365
    %4314 = vmatprep.subr.mxu0 %v362
    %4315 = vmatpush1.msra.mxu0 %v361
    %4316 = vmatprep.subr.mxu0 %v358
    %4317 = vmatpush1.msra.mxu0 %v357
    %4318 = vmatprep.subr.mxu0 %v354
    %4319 = vmatpush1.msra.mxu0 %v353
    %4320 = vmatprep.subr.mxu0 %v350
    %4321 = vmatpush1.msra.mxu0 %v349
    %4322 = vmatprep.subr.mxu0 %v346
    %4323 = vmatpush1.msra.mxu0 %v345
    %4324 = vmatprep.subr.mxu0 0.0
    %4325 = vmatpush2.msra.mxu0 0.0
    %4326 = vmatprep.subr.mxu0 0.0
    %4327 = vmatpush2.msra.mxu0 0.0
    %4328 = vmatprep.subr.mxu0 0.0
    %4329 = vmatpush2.msra.mxu0 0.0
    %4330 = vmatprep.subr.mxu0 0.0
    %4331 = vmatpush2.msra.mxu0 0.0
    %4332 = vmatprep.subr.mxu0 0.0
    %4333 = vmatpush2.msra.mxu0 0.0
    %4334 = vmatprep.subr.mxu0 0.0
    %4335 = vmatpush2.msra.mxu0 0.0
    %4336 = vmatprep.subr.mxu0 0.0
    %4337 = vmatpush2.msra.mxu0 0.0
    %4338 = vmatprep.subr.mxu0 0.0
    %4339 = vmatpush2.msra.mxu0 0.0
    %4340 = vmatprep.subr.mxu0 0.0
    %4341 = vmatpush2.msra.mxu0 0.0
    %4342 = vmatprep.subr.mxu0 0.0
    %4343 = vmatpush2.msra.mxu0 0.0
    %4344 = vmatprep.subr.mxu0 0.0
    %4345 = vmatpush2.msra.mxu0 0.0
    %4346 = vmatprep.subr.mxu0 0.0
    %4347 = vmatpush2.msra.mxu0 0.0
    %4348 = vmatprep.subr.mxu0 0.0
    %4349 = vmatpush2.msra.mxu0 0.0
    %4350 = vmatprep.subr.mxu0 0.0
    %4351 = vmatpush2.msra.mxu0 0.0
    %4352 = vmatprep.subr.mxu0 0.0
    %4353 = vmatpush2.msra.mxu0 0.0
    %4354 = vmatprep.subr.mxu0 0.0
    %4355 = vmatpush2.msra.mxu0 0.0
    %4356 = vmatprep.mubr.f32.mxu0 0.0
    %4357 = vmatmul.mubr.f32.gmra.mxu0 %v4146
    %v4358 = vpop.f32.mrf.mxu0
    %v4359 = vadd.f32 0.0, %v4358
    %v4360 = vpop.f32.mrf.mxu0
    %v4361 = vadd.f32 0.0, %v4360
    %4362 = vdwg.mxu0
    %4363 = vmatprep.subr.mxu0 %v408
    %4364 = vmatpush1.msra.mxu0 %v407
    %4365 = vmatprep.subr.mxu0 %v404
    %4366 = vmatpush1.msra.mxu0 %v403
    %4367 = vmatprep.subr.mxu0 %v400
    %4368 = vmatpush1.msra.mxu0 %v399
    %4369 = vmatprep.subr.mxu0 %v396
    %4370 = vmatpush1.msra.mxu0 %v395
    %4371 = vmatprep.subr.mxu0 %v392
    %4372 = vmatpush1.msra.mxu0 %v391
    %4373 = vmatprep.subr.mxu0 %v388
    %4374 = vmatpush1.msra.mxu0 %v387
    %4375 = vmatprep.subr.mxu0 %v384
    %4376 = vmatpush1.msra.mxu0 %v383
    %4377 = vmatprep.subr.mxu0 %v380
    %4378 = vmatpush1.msra.mxu0 %v379
    %4379 = vmatprep.subr.mxu0 %v376
    %4380 = vmatpush1.msra.mxu0 %v375
    %4381 = vmatprep.subr.mxu0 %v372
    %4382 = vmatpush1.msra.mxu0 %v371
    %4383 = vmatprep.subr.mxu0 %v368
    %4384 = vmatpush1.msra.mxu0 %v367
    %4385 = vmatprep.subr.mxu0 %v364
    %4386 = vmatpush1.msra.mxu0 %v363
    %4387 = vmatprep.subr.mxu0 %v360
    %4388 = vmatpush1.msra.mxu0 %v359
    %4389 = vmatprep.subr.mxu0 %v356
    %4390 = vmatpush1.msra.mxu0 %v355
    %4391 = vmatprep.subr.mxu0 %v352
    %4392 = vmatpush1.msra.mxu0 %v351
    %4393 = vmatprep.subr.mxu0 %v348
    %4394 = vmatpush1.msra.mxu0 %v347
    %4395 = vmatprep.subr.mxu0 0.0
    %4396 = vmatpush2.msra.mxu0 0.0
    %4397 = vmatprep.subr.mxu0 0.0
    %4398 = vmatpush2.msra.mxu0 0.0
    %4399 = vmatprep.subr.mxu0 0.0
    %4400 = vmatpush2.msra.mxu0 0.0
    %4401 = vmatprep.subr.mxu0 0.0
    %4402 = vmatpush2.msra.mxu0 0.0
    %4403 = vmatprep.subr.mxu0 0.0
    %4404 = vmatpush2.msra.mxu0 0.0
    %4405 = vmatprep.subr.mxu0 0.0
    %4406 = vmatpush2.msra.mxu0 0.0
    %4407 = vmatprep.subr.mxu0 0.0
    %4408 = vmatpush2.msra.mxu0 0.0
    %4409 = vmatprep.subr.mxu0 0.0
    %4410 = vmatpush2.msra.mxu0 0.0
    %4411 = vmatprep.subr.mxu0 0.0
    %4412 = vmatpush2.msra.mxu0 0.0
    %4413 = vmatprep.subr.mxu0 0.0
    %4414 = vmatpush2.msra.mxu0 0.0
    %4415 = vmatprep.subr.mxu0 0.0
    %4416 = vmatpush2.msra.mxu0 0.0
    %4417 = vmatprep.subr.mxu0 0.0
    %4418 = vmatpush2.msra.mxu0 0.0
    %4419 = vmatprep.subr.mxu0 0.0
    %4420 = vmatpush2.msra.mxu0 0.0
    %4421 = vmatprep.subr.mxu0 0.0
    %4422 = vmatpush2.msra.mxu0 0.0
    %4423 = vmatprep.subr.mxu0 0.0
    %4424 = vmatpush2.msra.mxu0 0.0
    %4425 = vmatprep.subr.mxu0 0.0
    %4426 = vmatpush2.msra.mxu0 0.0
    %4427 = vmatprep.mubr.f32.mxu0 0.0
    %4428 = vmatmul.mubr.f32.gmra.mxu0 %v4146
    %v4429 = vpop.f32.mrf.mxu0
    %v4430 = vadd.f32 0.0, %v4429
    %v4431 = vpop.f32.mrf.mxu0
    %v4432 = vadd.f32 0.0, %v4431
    %4433 = vdwg.mxu0
    %v4434 = vadd.f32 %v4217, %v4359
    %v4435 = vadd.f32 %v4219, %v4361
    %v4436 = vadd.f32 %v4288, %v4430
    %v4437 = vadd.f32 %v4290, %v4432
    %v4438 = vxor.u32 %v4434, 2147483648
    %v4439 = vxor.u32 %v4435, 2147483648
    %v4440 = vxor.u32 %v4436, 2147483648
    %v4441 = vmul.f32 %v4438, 1.442695
    %v4442 = vpow.pop %v4441
    %v4443 = vmul.f32 %v4439, 1.442695
    %v4444 = vpow.pop %v4443
    %v4445 = vmul.f32 %v4440, 1.442695
    %v4446 = vpow.pop %v4445
    %v4447 = vadd.f32 %v4442, 1.0
    %v4448 = vadd.f32 %v4444, 1.0
    %v4449 = vadd.f32 %v4446, 1.0
    %v4450 = vrcp.pop %v4447
    %v4451 = vmul.f32 1.0, %v4450
    %v4452 = vrcp.pop %v4448
    %v4453 = vmul.f32 1.0, %v4452
    %v4454 = vrcp.pop %v4449
    %v4455 = vmul.f32 1.0, %v4454
    %v4456 = vtanh.pop %v4437
    %v4457 = vmul.f32 %v4453, %v4144
    %v4458 = vmul.f32 %v4451, %v4456
    %v4459 = vadd.f32 %v4457, %v4458
    %v4460 = vtanh.pop %v4459
    %v4461 = vmul.f32 %v4455, %v4460
    %v4462 = vld [vmem:[%s7] sm:$0xff]
    %v4463 = vld [vmem:[%s7 + $0x8] sm:$0xff]
    %v4464 = vld [vmem:[%s7 + $0x10] sm:$0xff]
    %v4465 = vld [vmem:[%s7 + $0x18] sm:$0xff]
    %v4466 = vld [vmem:[%s7 + $0x20] sm:$0xff]
    %v4467 = vld [vmem:[%s7 + $0x28] sm:$0xff]
    %v4468 = vld [vmem:[%s7 + $0x30] sm:$0xff]
    %v4469 = vld [vmem:[%s7 + $0x38] sm:$0xff]
    %v4470 = vld [vmem:[%s7 + $0x40] sm:$0xff]
    %v4471 = vld [vmem:[%s7 + $0x48] sm:$0xff]
    %v4472 = vld [vmem:[%s7 + $0x50] sm:$0xff]
    %v4473 = vld [vmem:[%s7 + $0x58] sm:$0xff]
    %v4474 = vld [vmem:[%s7 + $0x60] sm:$0xff]
    %v4475 = vld [vmem:[%s7 + $0x68] sm:$0xff]
    %v4476 = vld [vmem:[%s7 + $0x70] sm:$0xff]
    %v4477 = vld [vmem:[%s7 + $0x78] sm:$0xff]
    %v4478 = vld [vmem:[%s8] sm:$0x1]
    %v4480 = vlaneseq
    %v4481 = vshrl.u32 %v4480, 7
    %v4482 = vsub.s32 0, %v4481
    %v4483 = vrot.slane %v4478, %v4482
    %4485 = vmatprep.subr.mxu0 0.0
    %4486 = vmatpush1.msra.mxu0 %v4477
    %4487 = vmatprep.subr.mxu0 0.0
    %4488 = vmatpush1.msra.mxu0 %v4476
    %4489 = vmatprep.subr.mxu0 0.0
    %4490 = vmatpush1.msra.mxu0 %v4475
    %4491 = vmatprep.subr.mxu0 0.0
    %4492 = vmatpush1.msra.mxu0 %v4474
    %4493 = vmatprep.subr.mxu0 0.0
    %4494 = vmatpush1.msra.mxu0 %v4473
    %4495 = vmatprep.subr.mxu0 0.0
    %4496 = vmatpush1.msra.mxu0 %v4472
    %4497 = vmatprep.subr.mxu0 0.0
    %4498 = vmatpush1.msra.mxu0 %v4471
    %4499 = vmatprep.subr.mxu0 0.0
    %4500 = vmatpush1.msra.mxu0 %v4470
    %4501 = vmatprep.subr.mxu0 0.0
    %4502 = vmatpush1.msra.mxu0 %v4469
    %4503 = vmatprep.subr.mxu0 0.0
    %4504 = vmatpush1.msra.mxu0 %v4468
    %4505 = vmatprep.subr.mxu0 0.0
    %4506 = vmatpush1.msra.mxu0 %v4467
    %4507 = vmatprep.subr.mxu0 0.0
    %4508 = vmatpush1.msra.mxu0 %v4466
    %4509 = vmatprep.subr.mxu0 0.0
    %4510 = vmatpush1.msra.mxu0 %v4465
    %4511 = vmatprep.subr.mxu0 0.0
    %4512 = vmatpush1.msra.mxu0 %v4464
    %4513 = vmatprep.subr.mxu0 0.0
    %4514 = vmatpush1.msra.mxu0 %v4463
    %4515 = vmatprep.subr.mxu0 0.0
    %4516 = vmatpush1.msra.mxu0 %v4462
    %4517 = vmatprep.subr.mxu0 0.0
    %4518 = vmatpush2.msra.mxu0 0.0
    %4519 = vmatprep.subr.mxu0 0.0
    %4520 = vmatpush2.msra.mxu0 0.0
    %4521 = vmatprep.subr.mxu0 0.0
    %4522 = vmatpush2.msra.mxu0 0.0
    %4523 = vmatprep.subr.mxu0 0.0
    %4524 = vmatpush2.msra.mxu0 0.0
    %4525 = vmatprep.subr.mxu0 0.0
    %4526 = vmatpush2.msra.mxu0 0.0
    %4527 = vmatprep.subr.mxu0 0.0
    %4528 = vmatpush2.msra.mxu0 0.0
    %4529 = vmatprep.subr.mxu0 0.0
    %4530 = vmatpush2.msra.mxu0 0.0
    %4531 = vmatprep.subr.mxu0 0.0
    %4532 = vmatpush2.msra.mxu0 0.0
    %4533 = vmatprep.subr.mxu0 0.0
    %4534 = vmatpush2.msra.mxu0 0.0
    %4535 = vmatprep.subr.mxu0 0.0
    %4536 = vmatpush2.msra.mxu0 0.0
    %4537 = vmatprep.subr.mxu0 0.0
    %4538 = vmatpush2.msra.mxu0 0.0
    %4539 = vmatprep.subr.mxu0 0.0
    %4540 = vmatpush2.msra.mxu0 0.0
    %4541 = vmatprep.subr.mxu0 0.0
    %4542 = vmatpush2.msra.mxu0 0.0
    %4543 = vmatprep.subr.mxu0 0.0
    %4544 = vmatpush2.msra.mxu0 0.0
    %4545 = vmatprep.subr.mxu0 0.0
    %4546 = vmatpush2.msra.mxu0 0.0
    %4547 = vmatprep.subr.mxu0 0.0
    %4548 = vmatpush2.msra.mxu0 0.0
    %4549 = vmatprep.mubr.f32.mxu0 0.0
    %4550 = vmatmul.mubr.f32.gmra.mxu0 %v4461
    %v4551 = vpop.f32.mrf.mxu0
    %v4552 = vadd.f32 %v4483, %v4551
    %v4553 = vpop.f32.mrf.mxu0
    %4554 = vdwg.mxu0
    %v4555 = vmax.f32 %v4552, 0.0
    %v4556 = vld [vmem:[%s9] sm:$0xff]
    %v4557 = vld [vmem:[%s9 + $0x8] sm:$0xff]
    %v4558 = vld [vmem:[%s9 + $0x10] sm:$0xff]
    %v4559 = vld [vmem:[%s9 + $0x18] sm:$0xff]
    %v4560 = vld [vmem:[%s9 + $0x20] sm:$0xff]
    %v4561 = vld [vmem:[%s9 + $0x28] sm:$0xff]
    %v4562 = vld [vmem:[%s9 + $0x30] sm:$0xff]
    %v4563 = vld [vmem:[%s9 + $0x38] sm:$0xff]
    %v4564 = vld [vmem:[%s9 + $0x40] sm:$0xff]
    %v4565 = vld [vmem:[%s9 + $0x48] sm:$0xff]
    %v4566 = vld [vmem:[%s9 + $0x50] sm:$0xff]
    %v4567 = vld [vmem:[%s9 + $0x58] sm:$0xff]
    %v4568 = vld [vmem:[%s9 + $0x60] sm:$0xff]
    %v4569 = vld [vmem:[%s9 + $0x68] sm:$0xff]
    %v4570 = vld [vmem:[%s9 + $0x70] sm:$0xff]
    %v4571 = vld [vmem:[%s9 + $0x78] sm:$0xff]
    %v4572 = vld [vmem:[#allocation2] sm:$0x1]
    %v4574 = vlaneseq
    %v4575 = vshrl.u32 %v4574, 7
    %v4576 = vsub.s32 0, %v4575
    %v4577 = vrot.slane %v4572, %v4576
    %4579 = vmatprep.subr.mxu0 0.0
    %4580 = vmatpush1.msra.mxu0 %v4571
    %4581 = vmatprep.subr.mxu0 0.0
    %4582 = vmatpush1.msra.mxu0 %v4570
    %4583 = vmatprep.subr.mxu0 0.0
    %4584 = vmatpush1.msra.mxu0 %v4569
    %4585 = vmatprep.subr.mxu0 0.0
    %4586 = vmatpush1.msra.mxu0 %v4568
    %4587 = vmatprep.subr.mxu0 0.0
    %4588 = vmatpush1.msra.mxu0 %v4567
    %4589 = vmatprep.subr.mxu0 0.0
    %4590 = vmatpush1.msra.mxu0 %v4566
    %4591 = vmatprep.subr.mxu0 0.0
    %4592 = vmatpush1.msra.mxu0 %v4565
    %4593 = vmatprep.subr.mxu0 0.0
    %4594 = vmatpush1.msra.mxu0 %v4564
    %4595 = vmatprep.subr.mxu0 0.0
    %4596 = vmatpush1.msra.mxu0 %v4563
    %4597 = vmatprep.subr.mxu0 0.0
    %4598 = vmatpush1.msra.mxu0 %v4562
    %4599 = vmatprep.subr.mxu0 0.0
    %4600 = vmatpush1.msra.mxu0 %v4561
    %4601 = vmatprep.subr.mxu0 0.0
    %4602 = vmatpush1.msra.mxu0 %v4560
    %4603 = vmatprep.subr.mxu0 0.0
    %4604 = vmatpush1.msra.mxu0 %v4559
    %4605 = vmatprep.subr.mxu0 0.0
    %4606 = vmatpush1.msra.mxu0 %v4558
    %4607 = vmatprep.subr.mxu0 0.0
    %4608 = vmatpush1.msra.mxu0 %v4557
    %4609 = vmatprep.subr.mxu0 0.0
    %4610 = vmatpush1.msra.mxu0 %v4556
    %4611 = vmatprep.subr.mxu0 0.0
    %4612 = vmatpush2.msra.mxu0 0.0
    %4613 = vmatprep.subr.mxu0 0.0
    %4614 = vmatpush2.msra.mxu0 0.0
    %4615 = vmatprep.subr.mxu0 0.0
    %4616 = vmatpush2.msra.mxu0 0.0
    %4617 = vmatprep.subr.mxu0 0.0
    %4618 = vmatpush2.msra.mxu0 0.0
    %4619 = vmatprep.subr.mxu0 0.0
    %4620 = vmatpush2.msra.mxu0 0.0
    %4621 = vmatprep.subr.mxu0 0.0
    %4622 = vmatpush2.msra.mxu0 0.0
    %4623 = vmatprep.subr.mxu0 0.0
    %4624 = vmatpush2.msra.mxu0 0.0
    %4625 = vmatprep.subr.mxu0 0.0
    %4626 = vmatpush2.msra.mxu0 0.0
    %4627 = vmatprep.subr.mxu0 0.0
    %4628 = vmatpush2.msra.mxu0 0.0
    %4629 = vmatprep.subr.mxu0 0.0
    %4630 = vmatpush2.msra.mxu0 0.0
    %4631 = vmatprep.subr.mxu0 0.0
    %4632 = vmatpush2.msra.mxu0 0.0
    %4633 = vmatprep.subr.mxu0 0.0
    %4634 = vmatpush2.msra.mxu0 0.0
    %4635 = vmatprep.subr.mxu0 0.0
    %4636 = vmatpush2.msra.mxu0 0.0
    %4637 = vmatprep.subr.mxu0 0.0
    %4638 = vmatpush2.msra.mxu0 0.0
    %4639 = vmatprep.subr.mxu0 0.0
    %4640 = vmatpush2.msra.mxu0 0.0
    %4641 = vmatprep.subr.mxu0 0.0
    %4642 = vmatpush2.msra.mxu0 0.0
    %4643 = vmatprep.mubr.f32.mxu0 0.0
    %4644 = vmatmul.mubr.f32.gmra.mxu0 %v4555
    %v4645 = vpop.f32.mrf.mxu0
    %v4646 = vadd.f32 %v4577, %v4645
    %v4647 = vpop.f32.mrf.mxu0
    %4648 = vdwg.mxu0
    %vm4649 = vcmask 1024
    %4650 = vst.msk [vmem:[%s11] sm:$0x3] %vm4649, %v4646
    // Predicated region
    $region58: #{lstm_forward.1} parent=1 // pred_check
      _
    $region59: #{lstm_forward.1} parent=1 // pred_check_branch
      %4652 = sbr.rel (0) target = $region61
    $region60: #{lstm_forward.1} parent=1 // pred_region
      _
    $region61: #{lstm_forward.1} parent=1 // pred_fallthru
      _
    // Predicated region
    $region62: #{lstm_forward.1} parent=1 // pred_check
      _
    $region63: #{lstm_forward.1} parent=1 // pred_check_branch
      %4654 = sbr.rel (0) target = $region65
    $region64: #{lstm_forward.1} parent=1 // pred_region
      _
    $region65: #{lstm_forward.1} parent=1 // pred_fallthru
      _
    %4655 = vsyncpa [#allocation4], 1
    %4656 = vsyncpa [#allocation6], 1

</llo_original>
